<compile_context>
chip_gen: v7x
topology: tpu7x:2x2x1
jax: 0.10.0
libtpu: 0.0.40
codegen_flags: <defaults>
</compile_context>

<pallas_src>
import numpy as np

import jax
import jax.numpy as jnp
from jax import lax
from jax.experimental import pallas as pl
from jax.experimental.pallas import tpu as pltpu


def _round_up(x: int, m: int) -> int:
    return ((x + m - 1) // m) * m


def _conv_out(n: int, k: int = 3, s: int = 2, p: int = 1) -> int:
    return (n + 2 * p - k) // s + 1


def _build_tap_gather(hin, win, hout, wout, k=3, s=2, p=1):
    """Constant one-hot gather matrix for a k x k / stride-s / pad-p conv.

    Rows are grouped tap-major: row (t * hout*wout + oh*wout + ow) selects input pixel
    (s*oh + kh - p, s*ow + kw - p) for tap t = kh*k + kw, or is all-zero if that pixel
    falls into the padding halo.
    """
    n_in, n_out = hin * win, hout * wout
    S = np.zeros((k * k * n_out, n_in), np.float32)
    for kh in range(k):
        for kw in range(k):
            t = kh * k + kw
            for oh in range(hout):
                for ow in range(wout):
                    r = s * oh + kh - p
                    c = s * ow + kw - p
                    if 0 <= r < hin and 0 <= c < win:
                        S[t * n_out + oh * wout + ow, r * win + c] = 1.0
    return S


def _make_cnn_actor_kernel(n1_out, n2_out, n_mid, cp1, cp2, hp, max_action):
    """Kernel factory. One grid step == one sample; all ops are 2D MXU matmuls + VPU."""

    def kernel(x_ref, s1_ref, w1_ref, b1_ref, s2_ref, w2_ref, b2_ref,
               wfc1_ref, bfc1_ref, wmid_ref, bmid_ref, wout_ref, bout_ref,
               out_ref):
        xs = x_ref[0]                                                   # [N1_in, C_in]

        # ---- conv1: gather all 9 taps with one matmul, then per-tap channel mix ----
        g1 = jnp.dot(s1_ref[...], xs, preferred_element_type=jnp.float32)  # [9*N1out, C_in]
        h1 = jnp.zeros((n1_out, cp1), jnp.float32)
        for t in range(9):
            h1 = h1 + jnp.dot(g1[t * n1_out:(t + 1) * n1_out, :], w1_ref[t],
                              preferred_element_type=jnp.float32)
        h1 = jnp.maximum(h1 + b1_ref[...], 0.0)                         # [N1out, CP1]

        # ---- conv2: same structure on the conv1 feature map ----
        g2 = jnp.dot(s2_ref[...], h1, preferred_element_type=jnp.float32)  # [9*N2out, CP1]
        h2 = jnp.zeros((n2_out, cp2), jnp.float32)
        for t in range(9):
            h2 = h2 + jnp.dot(g2[t * n2_out:(t + 1) * n2_out, :], w2_ref[t],
                              preferred_element_type=jnp.float32)
        h2 = jnp.maximum(h2 + b2_ref[...], 0.0)                         # [N2out, CP2]

        # ---- fc1: flatten folded into a sum over spatial rows (no in-kernel reshape) ----
        f = jnp.zeros((1, hp), jnp.float32)
        for o in range(n2_out):
            f = f + jnp.dot(h2[o:o + 1, :], wfc1_ref[o],
                            preferred_element_type=jnp.float32)
        f = jnp.maximum(f + bfc1_ref[...], 0.0)                         # [1, HP]

        # ---- hidden fc layers ----
        for l in range(n_mid):
            f = jnp.maximum(
                jnp.dot(f, wmid_ref[l], preferred_element_type=jnp.float32) + bmid_ref[l],
                0.0)

        # ---- output head: tanh * max_action, lane-dense padded row ----
        a = jnp.tanh(jnp.dot(f, wout_ref[...], preferred_element_type=jnp.float32)
                     + bout_ref[...]) * max_action                      # [1, AP]
        out_ref[0] = a

    return kernel


def _uniform(key, shape, bound):
    return jax.random.uniform(key, shape, jnp.float32, -bound, bound)


class PallasCnnActor:
    """JAX/Pallas implementation of the TD3-BC CnnActor (CnnEncoder + tanh MLP head)."""

    def __init__(self, obs_shape, action_dim, hidden_dim, n_layers, max_action, key):
        assert len(obs_shape) == 3, "obs_shape must be (H, W, C)"
        H, W, C = obs_shape
        self.obs_shape = (H, W, C)
        self.action_dim = action_dim
        self.hidden_dim = hidden_dim
        self.n_layers = n_layers
        self.max_action = float(max_action)

        # Spatial sizes of the two stride-2 convs.
        H1, W1 = _conv_out(H), _conv_out(W)
        H2, W2 = _conv_out(H1), _conv_out(W1)
        self.n1_in, self.c_in = H * W, C
        self.n1_out = H1 * W1
        self.n2_out = H2 * W2
        c2_real = 2 * hidden_dim
        enc_out = self.n2_out * c2_real          # NHWC flatten: (h, w, c) ordering
        n_mid = n_layers - 1
        self.n_mid = n_mid

        # Lane-dense padded widths.
        self.CP1 = _round_up(hidden_dim, 128)
        self.CP2 = _round_up(c2_real, 128)
        self.HP = _round_up(hidden_dim, 128)
        self.AP = _round_up(action_dim, 128)

        # ---- real (unpadded) parameters, PyTorch-default-like uniform init ----
        keys = iter(jax.random.split(key, 2 * (n_mid + 4)))
        b1 = 1.0 / float(np.sqrt(C * 9))
        self.conv1_w = _uniform(next(keys), (3, 3, C, hidden_dim), b1)      # HWIO
        self.conv1_b = _uniform(next(keys), (hidden_dim,), b1)
        b2 = 1.0 / float(np.sqrt(hidden_dim * 9))
        self.conv2_w = _uniform(next(keys), (3, 3, hidden_dim, c2_real), b2)
        self.conv2_b = _uniform(next(keys), (c2_real,), b2)
        bf = 1.0 / float(np.sqrt(enc_out))
        self.fc1_w = _uniform(next(keys), (enc_out, hidden_dim), bf)
        self.fc1_b = _uniform(next(keys), (hidden_dim,), bf)
        bh = 1.0 / float(np.sqrt(hidden_dim))
        self.mid_ws, self.mid_bs = [], []
        for _ in range(n_mid):
            self.mid_ws.append(_uniform(next(keys), (hidden_dim, hidden_dim), bh))
            self.mid_bs.append(_uniform(next(keys), (hidden_dim,), bh))
        self.out_w = _uniform(next(keys), (hidden_dim, action_dim), bh)
        self.out_b = _uniform(next(keys), (action_dim,), bh)

        # ---- constant tap-gather matrices (one-hot, built once on host) ----
        self.S1 = jnp.asarray(_build_tap_gather(H, W, H1, W1))          # [9*N1out, N1in]
        self.S2 = jnp.asarray(_build_tap_gather(H1, W1, H2, W2))        # [9*N2out, N1out]

        # ---- zero-padded, kernel-layout parameters ----
        hd, CP1, CP2, HP, AP = hidden_dim, self.CP1, self.CP2, self.HP, self.AP
        self.W1k = jnp.pad(self.conv1_w, ((0, 0), (0, 0), (0, 0), (0, CP1 - hd))
                           ).reshape(9, C, CP1)
        self.b1k = jnp.pad(self.conv1_b, (0, CP1 - hd)).reshape(1, CP1)
        self.W2k = jnp.pad(self.conv2_w, ((0, 0), (0, 0), (0, CP1 - hd), (0, CP2 - c2_real))
                           ).reshape(9, CP1, CP2)
        self.b2k = jnp.pad(self.conv2_b, (0, CP2 - c2_real)).reshape(1, CP2)
        self.Wfc1k = jnp.pad(self.fc1_w.reshape(self.n2_out, c2_real, hd),
                             ((0, 0), (0, CP2 - c2_real), (0, HP - hd)))
        self.bfc1k = jnp.pad(self.fc1_b, (0, HP - hd)).reshape(1, HP)
        if n_mid > 0:
            self.Wmidk = jnp.stack([jnp.pad(w, ((0, HP - hd), (0, HP - hd)))
                                    for w in self.mid_ws])
            self.bmidk = jnp.stack([jnp.pad(b, (0, HP - hd)).reshape(1, HP)
                                    for b in self.mid_bs])
        else:  # dummy (unused) refs so the kernel signature is static
            self.Wmidk = jnp.zeros((1, HP, HP), jnp.float32)
            self.bmidk = jnp.zeros((1, 1, HP), jnp.float32)
        self.Woutk = jnp.pad(self.out_w, ((0, HP - hd), (0, AP - action_dim)))
        self.boutk = jnp.pad(self.out_b, (0, AP - action_dim)).reshape(1, AP)

        self._kernel = _make_cnn_actor_kernel(
            self.n1_out, self.n2_out, n_mid, CP1, CP2, HP, self.max_action)

    # ------------------------------------------------------------------ pallas call
    def _call_kernel(self, x):
        B = x.shape[0]
        weights = [self.S1, self.W1k, self.b1k,
                   self.S2, self.W2k, self.b2k,
                   self.Wfc1k, self.bfc1k,
                   self.Wmidk, self.bmidk,
                   self.Woutk, self.boutk]

        in_specs = [pl.BlockSpec((1, self.n1_in, self.c_in), lambda b: (b, 0, 0))]
        for w in weights:
            # Full-array VMEM-resident block, same block for every grid step.
            in_specs.append(pl.BlockSpec(w.shape, lambda b, nd=w.ndim: (0,) * nd))

        out_spec = pl.BlockSpec((1, 1, self.AP), lambda b: (b, 0, 0))
        out_shape = jax.ShapeDtypeStruct((B, 1, self.AP), jnp.float32)

        fn = pl.pallas_call(
            self._kernel,
            grid=(B,),
            in_specs=in_specs,
            out_specs=out_spec,
            out_shape=out_shape,
            compiler_params=pltpu.CompilerParams(
                dimension_semantics=("parallel",)),
        )
        return fn(x, *weights)

    # ------------------------------------------------------------------ public API
    def forward(self, obs):
        obs = obs.astype(jnp.float32)
        B = obs.shape[0]
        x = obs.reshape(B, self.n1_in, self.c_in)            # NHWC flatten (free reshape)
        out = self._call_kernel(x)                           # [B, 1, AP]
        return out.reshape(B, self.AP)[:, :self.action_dim]  # slice lane-padding away

    __call__ = forward

    # ------------------------------------------------------------------ pure-JAX reference
    def reference_forward(self, obs):
        hi = lax.Precision.HIGHEST
        x = obs.astype(jnp.float32)
        h = lax.conv_general_dilated(x, self.conv1_w, (2, 2), ((1, 1), (1, 1)),
                                     dimension_numbers=('NHWC', 'HWIO', 'NHWC'),
                                     precision=hi) + self.conv1_b
        h = jnp.maximum(h, 0.0)
        h = lax.conv_general_dilated(h, self.conv2_w, (2, 2), ((1, 1), (1, 1)),
                                     dimension_numbers=('NHWC', 'HWIO', 'NHWC'),
                                     precision=hi) + self.conv2_b
        h = jnp.maximum(h, 0.0)
        f = h.reshape(h.shape[0], -1)
        f = jnp.maximum(jnp.dot(f, self.fc1_w, precision=hi) + self.fc1_b, 0.0)
        for w, b in zip(self.mid_ws, self.mid_bs):
            f = jnp.maximum(jnp.dot(f, w, precision=hi) + b, 0.0)
        return jnp.tanh(jnp.dot(f, self.out_w, precision=hi) + self.out_b) * self.max_action


if __name__ == "__main__":
    key = jax.random.PRNGKey(0)
    k_param, k_obs = jax.random.split(key)

    batch = 2
    obs_shape = (16, 16, 4)      # (H, W, C): CnnEncoder reads channels from obs_shape[2]
    action_dim = 8
    hidden_dim = 32
    n_layers = 2
    max_action = 1.0

    actor = PallasCnnActor(obs_shape, action_dim, hidden_dim, n_layers, max_action, k_param)

    obs = jax.random.normal(k_obs, (batch,) + obs_shape, dtype=jnp.float32)

    action = actor.forward(obs)
    jax.block_until_ready(action)

    ref = actor.reference_forward(obs)
    assert action.shape == (batch, action_dim), action.shape
    max_err = float(jnp.max(jnp.abs(action - ref)))
    assert jnp.allclose(action, ref, atol=1e-3, rtol=1e-3), f"max_err={max_err}"
    assert bool(jnp.all(jnp.abs(action) <= max_action + 1e-5))

    print("KERNEL_OK")
</pallas_src>

<mosaic_0001>
module attributes {stable_mosaic.version = 11 : i64} {
  func.func @kernel(%arg0: i32, %arg1: memref<1x256x4xf32, #tpu.memory_space<vmem>>, %arg2: memref<576x256xf32, #tpu.memory_space<vmem>>, %arg3: memref<9x4x128xf32, #tpu.memory_space<vmem>>, %arg4: memref<1x128xf32, #tpu.memory_space<vmem>>, %arg5: memref<144x64xf32, #tpu.memory_space<vmem>>, %arg6: memref<9x128x128xf32, #tpu.memory_space<vmem>>, %arg7: memref<1x128xf32, #tpu.memory_space<vmem>>, %arg8: memref<16x128x128xf32, #tpu.memory_space<vmem>>, %arg9: memref<1x128xf32, #tpu.memory_space<vmem>>, %arg10: memref<1x128x128xf32, #tpu.memory_space<vmem>>, %arg11: memref<1x1x128xf32, #tpu.memory_space<vmem>>, %arg12: memref<128x128xf32, #tpu.memory_space<vmem>>, %arg13: memref<1x128xf32, #tpu.memory_space<vmem>>, %arg14: memref<1x1x128xf32, #tpu.memory_space<vmem>>) attributes {dimension_semantics = [#tpu.dimension_semantics<parallel>], iteration_bounds = array<i64: 2>, scalar_prefetch = 0 : i64, scratch_operands = 0 : i64, tpu.core_type = #tpu.core_type<tc>, window_params = [{transform_indices = @transform_0, window_bounds = array<i64: 1, 256, 4>}, {pipeline_mode = #tpu.pipeline_mode<synchronous>, transform_indices = @transform_1, window_bounds = array<i64: 576, 256>}, {pipeline_mode = #tpu.pipeline_mode<synchronous>, transform_indices = @transform_2, window_bounds = array<i64: 9, 4, 128>}, {pipeline_mode = #tpu.pipeline_mode<synchronous>, transform_indices = @transform_3, window_bounds = array<i64: 1, 128>}, {pipeline_mode = #tpu.pipeline_mode<synchronous>, transform_indices = @transform_4, window_bounds = array<i64: 144, 64>}, {pipeline_mode = #tpu.pipeline_mode<synchronous>, transform_indices = @transform_5, window_bounds = array<i64: 9, 128, 128>}, {pipeline_mode = #tpu.pipeline_mode<synchronous>, transform_indices = @transform_6, window_bounds = array<i64: 1, 128>}, {pipeline_mode = #tpu.pipeline_mode<synchronous>, transform_indices = @transform_7, window_bounds = array<i64: 16, 128, 128>}, {pipeline_mode = #tpu.pipeline_mode<synchronous>, transform_indices = @transform_8, window_bounds = array<i64: 1, 128>}, {pipeline_mode = #tpu.pipeline_mode<synchronous>, transform_indices = @transform_9, window_bounds = array<i64: 1, 128, 128>}, {pipeline_mode = #tpu.pipeline_mode<synchronous>, transform_indices = @transform_10, window_bounds = array<i64: 1, 1, 128>}, {pipeline_mode = #tpu.pipeline_mode<synchronous>, transform_indices = @transform_11, window_bounds = array<i64: 128, 128>}, {pipeline_mode = #tpu.pipeline_mode<synchronous>, transform_indices = @transform_12, window_bounds = array<i64: 1, 128>}, {transform_indices = @transform_13, window_bounds = array<i64: 1, 1, 128>}]} {
    %c0 = arith.constant 0 : index
    %c0_0 = arith.constant 0 : index
    %c0_1 = arith.constant 0 : index
    %0 = vector.load %arg1[%c0, %c0_0, %c0_1] : memref<1x256x4xf32, #tpu.memory_space<vmem>>, vector<1x256x4xf32>
    %1 = vector.shape_cast %0 : vector<1x256x4xf32> to vector<256x4xf32>
    %c0_2 = arith.constant 0 : index
    %c0_3 = arith.constant 0 : index
    %2 = vector.load %arg2[%c0_2, %c0_3] : memref<576x256xf32, #tpu.memory_space<vmem>>, vector<576x256xf32>
    %cst = arith.constant dense<0.000000e+00> : vector<576x4xf32>
    %3 = tpu.matmul %2, %1, %cst {dimension_numbers = #tpu.dot_dimension_numbers<[1], [0], [0], [1], [0, 0, 1, 1], [], []>} : vector<576x256xf32>, vector<256x4xf32>, vector<576x4xf32> -> vector<576x4xf32>
    %cst_4 = arith.constant 0.000000e+00 : f32
    %4 = vector.broadcast %cst_4 : f32 to vector<64x128xf32>
    %5 = vector.extract_strided_slice %3 {offsets = [0, 0], sizes = [64, 4], strides = [1, 1]} : vector<576x4xf32> to vector<64x4xf32>
    %c0_5 = arith.constant 0 : index
    %c0_6 = arith.constant 0 : index
    %c0_7 = arith.constant 0 : index
    %6 = vector.load %arg3[%c0_5, %c0_6, %c0_7] : memref<9x4x128xf32, #tpu.memory_space<vmem>>, vector<1x4x128xf32>
    %7 = vector.shape_cast %6 : vector<1x4x128xf32> to vector<4x128xf32>
    %cst_8 = arith.constant dense<0.000000e+00> : vector<64x128xf32>
    %8 = tpu.matmul %5, %7, %cst_8 {dimension_numbers = #tpu.dot_dimension_numbers<[1], [0], [0], [1], [0, 0, 1, 1], [], []>} : vector<64x4xf32>, vector<4x128xf32>, vector<64x128xf32> -> vector<64x128xf32>
    %9 = arith.addf %4, %8 : vector<64x128xf32>
    %10 = vector.extract_strided_slice %3 {offsets = [64, 0], sizes = [64, 4], strides = [1, 1]} : vector<576x4xf32> to vector<64x4xf32>
    %c1 = arith.constant 1 : index
    %c0_9 = arith.constant 0 : index
    %c0_10 = arith.constant 0 : index
    %11 = vector.load %arg3[%c1, %c0_9, %c0_10] : memref<9x4x128xf32, #tpu.memory_space<vmem>>, vector<1x4x128xf32>
    %12 = vector.shape_cast %11 : vector<1x4x128xf32> to vector<4x128xf32>
    %cst_11 = arith.constant dense<0.000000e+00> : vector<64x128xf32>
    %13 = tpu.matmul %10, %12, %cst_11 {dimension_numbers = #tpu.dot_dimension_numbers<[1], [0], [0], [1], [0, 0, 1, 1], [], []>} : vector<64x4xf32>, vector<4x128xf32>, vector<64x128xf32> -> vector<64x128xf32>
    %14 = arith.addf %9, %13 : vector<64x128xf32>
    %15 = vector.extract_strided_slice %3 {offsets = [128, 0], sizes = [64, 4], strides = [1, 1]} : vector<576x4xf32> to vector<64x4xf32>
    %c2 = arith.constant 2 : index
    %c0_12 = arith.constant 0 : index
    %c0_13 = arith.constant 0 : index
    %16 = vector.load %arg3[%c2, %c0_12, %c0_13] : memref<9x4x128xf32, #tpu.memory_space<vmem>>, vector<1x4x128xf32>
    %17 = vector.shape_cast %16 : vector<1x4x128xf32> to vector<4x128xf32>
    %cst_14 = arith.constant dense<0.000000e+00> : vector<64x128xf32>
    %18 = tpu.matmul %15, %17, %cst_14 {dimension_numbers = #tpu.dot_dimension_numbers<[1], [0], [0], [1], [0, 0, 1, 1], [], []>} : vector<64x4xf32>, vector<4x128xf32>, vector<64x128xf32> -> vector<64x128xf32>
    %19 = arith.addf %14, %18 : vector<64x128xf32>
    %20 = vector.extract_strided_slice %3 {offsets = [192, 0], sizes = [64, 4], strides = [1, 1]} : vector<576x4xf32> to vector<64x4xf32>
    %c3 = arith.constant 3 : index
    %c0_15 = arith.constant 0 : index
    %c0_16 = arith.constant 0 : index
    %21 = vector.load %arg3[%c3, %c0_15, %c0_16] : memref<9x4x128xf32, #tpu.memory_space<vmem>>, vector<1x4x128xf32>
    %22 = vector.shape_cast %21 : vector<1x4x128xf32> to vector<4x128xf32>
    %cst_17 = arith.constant dense<0.000000e+00> : vector<64x128xf32>
    %23 = tpu.matmul %20, %22, %cst_17 {dimension_numbers = #tpu.dot_dimension_numbers<[1], [0], [0], [1], [0, 0, 1, 1], [], []>} : vector<64x4xf32>, vector<4x128xf32>, vector<64x128xf32> -> vector<64x128xf32>
    %24 = arith.addf %19, %23 : vector<64x128xf32>
    %25 = vector.extract_strided_slice %3 {offsets = [256, 0], sizes = [64, 4], strides = [1, 1]} : vector<576x4xf32> to vector<64x4xf32>
    %c4 = arith.constant 4 : index
    %c0_18 = arith.constant 0 : index
    %c0_19 = arith.constant 0 : index
    %26 = vector.load %arg3[%c4, %c0_18, %c0_19] : memref<9x4x128xf32, #tpu.memory_space<vmem>>, vector<1x4x128xf32>
    %27 = vector.shape_cast %26 : vector<1x4x128xf32> to vector<4x128xf32>
    %cst_20 = arith.constant dense<0.000000e+00> : vector<64x128xf32>
    %28 = tpu.matmul %25, %27, %cst_20 {dimension_numbers = #tpu.dot_dimension_numbers<[1], [0], [0], [1], [0, 0, 1, 1], [], []>} : vector<64x4xf32>, vector<4x128xf32>, vector<64x128xf32> -> vector<64x128xf32>
    %29 = arith.addf %24, %28 : vector<64x128xf32>
    %30 = vector.extract_strided_slice %3 {offsets = [320, 0], sizes = [64, 4], strides = [1, 1]} : vector<576x4xf32> to vector<64x4xf32>
    %c5 = arith.constant 5 : index
    %c0_21 = arith.constant 0 : index
    %c0_22 = arith.constant 0 : index
    %31 = vector.load %arg3[%c5, %c0_21, %c0_22] : memref<9x4x128xf32, #tpu.memory_space<vmem>>, vector<1x4x128xf32>
    %32 = vector.shape_cast %31 : vector<1x4x128xf32> to vector<4x128xf32>
    %cst_23 = arith.constant dense<0.000000e+00> : vector<64x128xf32>
    %33 = tpu.matmul %30, %32, %cst_23 {dimension_numbers = #tpu.dot_dimension_numbers<[1], [0], [0], [1], [0, 0, 1, 1], [], []>} : vector<64x4xf32>, vector<4x128xf32>, vector<64x128xf32> -> vector<64x128xf32>
    %34 = arith.addf %29, %33 : vector<64x128xf32>
    %35 = vector.extract_strided_slice %3 {offsets = [384, 0], sizes = [64, 4], strides = [1, 1]} : vector<576x4xf32> to vector<64x4xf32>
    %c6 = arith.constant 6 : index
    %c0_24 = arith.constant 0 : index
    %c0_25 = arith.constant 0 : index
    %36 = vector.load %arg3[%c6, %c0_24, %c0_25] : memref<9x4x128xf32, #tpu.memory_space<vmem>>, vector<1x4x128xf32>
    %37 = vector.shape_cast %36 : vector<1x4x128xf32> to vector<4x128xf32>
    %cst_26 = arith.constant dense<0.000000e+00> : vector<64x128xf32>
    %38 = tpu.matmul %35, %37, %cst_26 {dimension_numbers = #tpu.dot_dimension_numbers<[1], [0], [0], [1], [0, 0, 1, 1], [], []>} : vector<64x4xf32>, vector<4x128xf32>, vector<64x128xf32> -> vector<64x128xf32>
    %39 = arith.addf %34, %38 : vector<64x128xf32>
    %40 = vector.extract_strided_slice %3 {offsets = [448, 0], sizes = [64, 4], strides = [1, 1]} : vector<576x4xf32> to vector<64x4xf32>
    %c7 = arith.constant 7 : index
    %c0_27 = arith.constant 0 : index
    %c0_28 = arith.constant 0 : index
    %41 = vector.load %arg3[%c7, %c0_27, %c0_28] : memref<9x4x128xf32, #tpu.memory_space<vmem>>, vector<1x4x128xf32>
    %42 = vector.shape_cast %41 : vector<1x4x128xf32> to vector<4x128xf32>
    %cst_29 = arith.constant dense<0.000000e+00> : vector<64x128xf32>
    %43 = tpu.matmul %40, %42, %cst_29 {dimension_numbers = #tpu.dot_dimension_numbers<[1], [0], [0], [1], [0, 0, 1, 1], [], []>} : vector<64x4xf32>, vector<4x128xf32>, vector<64x128xf32> -> vector<64x128xf32>
    %44 = arith.addf %39, %43 : vector<64x128xf32>
    %45 = vector.extract_strided_slice %3 {offsets = [512, 0], sizes = [64, 4], strides = [1, 1]} : vector<576x4xf32> to vector<64x4xf32>
    %c8 = arith.constant 8 : index
    %c0_30 = arith.constant 0 : index
    %c0_31 = arith.constant 0 : index
    %46 = vector.load %arg3[%c8, %c0_30, %c0_31] : memref<9x4x128xf32, #tpu.memory_space<vmem>>, vector<1x4x128xf32>
    %47 = vector.shape_cast %46 : vector<1x4x128xf32> to vector<4x128xf32>
    %cst_32 = arith.constant dense<0.000000e+00> : vector<64x128xf32>
    %48 = tpu.matmul %45, %47, %cst_32 {dimension_numbers = #tpu.dot_dimension_numbers<[1], [0], [0], [1], [0, 0, 1, 1], [], []>} : vector<64x4xf32>, vector<4x128xf32>, vector<64x128xf32> -> vector<64x128xf32>
    %49 = arith.addf %44, %48 : vector<64x128xf32>
    %c0_33 = arith.constant 0 : index
    %c0_34 = arith.constant 0 : index
    %50 = vector.load %arg4[%c0_33, %c0_34] : memref<1x128xf32, #tpu.memory_space<vmem>>, vector<1x128xf32>
    %51 = vector.broadcast %50 : vector<1x128xf32> to vector<64x128xf32>
    %52 = arith.addf %49, %51 : vector<64x128xf32>
    %cst_35 = arith.constant 0.000000e+00 : f32
    %53 = vector.broadcast %cst_35 : f32 to vector<64x128xf32>
    %54 = arith.maximumf %52, %53 : vector<64x128xf32>
    %c0_36 = arith.constant 0 : index
    %c0_37 = arith.constant 0 : index
    %55 = vector.load %arg5[%c0_36, %c0_37] : memref<144x64xf32, #tpu.memory_space<vmem>>, vector<144x64xf32>
    %cst_38 = arith.constant dense<0.000000e+00> : vector<144x128xf32>
    %56 = tpu.matmul %55, %54, %cst_38 {dimension_numbers = #tpu.dot_dimension_numbers<[1], [0], [0], [1], [0, 0, 1, 1], [], []>} : vector<144x64xf32>, vector<64x128xf32>, vector<144x128xf32> -> vector<144x128xf32>
    %cst_39 = arith.constant 0.000000e+00 : f32
    %57 = vector.broadcast %cst_39 : f32 to vector<16x128xf32>
    %58 = vector.extract_strided_slice %56 {offsets = [0, 0], sizes = [16, 128], strides = [1, 1]} : vector<144x128xf32> to vector<16x128xf32>
    %c0_40 = arith.constant 0 : index
    %c0_41 = arith.constant 0 : index
    %c0_42 = arith.constant 0 : index
    %59 = vector.load %arg6[%c0_40, %c0_41, %c0_42] : memref<9x128x128xf32, #tpu.memory_space<vmem>>, vector<1x128x128xf32>
    %60 = vector.shape_cast %59 : vector<1x128x128xf32> to vector<128x128xf32>
    %cst_43 = arith.constant dense<0.000000e+00> : vector<16x128xf32>
    %61 = tpu.matmul %58, %60, %cst_43 {dimension_numbers = #tpu.dot_dimension_numbers<[1], [0], [0], [1], [0, 0, 1, 1], [], []>} : vector<16x128xf32>, vector<128x128xf32>, vector<16x128xf32> -> vector<16x128xf32>
    %62 = arith.addf %57, %61 : vector<16x128xf32>
    %63 = vector.extract_strided_slice %56 {offsets = [16, 0], sizes = [16, 128], strides = [1, 1]} : vector<144x128xf32> to vector<16x128xf32>
    %c1_44 = arith.constant 1 : index
    %c0_45 = arith.constant 0 : index
    %c0_46 = arith.constant 0 : index
    %64 = vector.load %arg6[%c1_44, %c0_45, %c0_46] : memref<9x128x128xf32, #tpu.memory_space<vmem>>, vector<1x128x128xf32>
    %65 = vector.shape_cast %64 : vector<1x128x128xf32> to vector<128x128xf32>
    %cst_47 = arith.constant dense<0.000000e+00> : vector<16x128xf32>
    %66 = tpu.matmul %63, %65, %cst_47 {dimension_numbers = #tpu.dot_dimension_numbers<[1], [0], [0], [1], [0, 0, 1, 1], [], []>} : vector<16x128xf32>, vector<128x128xf32>, vector<16x128xf32> -> vector<16x128xf32>
    %67 = arith.addf %62, %66 : vector<16x128xf32>
    %68 = vector.extract_strided_slice %56 {offsets = [32, 0], sizes = [16, 128], strides = [1, 1]} : vector<144x128xf32> to vector<16x128xf32>
    %c2_48 = arith.constant 2 : index
    %c0_49 = arith.constant 0 : index
    %c0_50 = arith.constant 0 : index
    %69 = vector.load %arg6[%c2_48, %c0_49, %c0_50] : memref<9x128x128xf32, #tpu.memory_space<vmem>>, vector<1x128x128xf32>
    %70 = vector.shape_cast %69 : vector<1x128x128xf32> to vector<128x128xf32>
    %cst_51 = arith.constant dense<0.000000e+00> : vector<16x128xf32>
    %71 = tpu.matmul %68, %70, %cst_51 {dimension_numbers = #tpu.dot_dimension_numbers<[1], [0], [0], [1], [0, 0, 1, 1], [], []>} : vector<16x128xf32>, vector<128x128xf32>, vector<16x128xf32> -> vector<16x128xf32>
    %72 = arith.addf %67, %71 : vector<16x128xf32>
    %73 = vector.extract_strided_slice %56 {offsets = [48, 0], sizes = [16, 128], strides = [1, 1]} : vector<144x128xf32> to vector<16x128xf32>
    %c3_52 = arith.constant 3 : index
    %c0_53 = arith.constant 0 : index
    %c0_54 = arith.constant 0 : index
    %74 = vector.load %arg6[%c3_52, %c0_53, %c0_54] : memref<9x128x128xf32, #tpu.memory_space<vmem>>, vector<1x128x128xf32>
    %75 = vector.shape_cast %74 : vector<1x128x128xf32> to vector<128x128xf32>
    %cst_55 = arith.constant dense<0.000000e+00> : vector<16x128xf32>
    %76 = tpu.matmul %73, %75, %cst_55 {dimension_numbers = #tpu.dot_dimension_numbers<[1], [0], [0], [1], [0, 0, 1, 1], [], []>} : vector<16x128xf32>, vector<128x128xf32>, vector<16x128xf32> -> vector<16x128xf32>
    %77 = arith.addf %72, %76 : vector<16x128xf32>
    %78 = vector.extract_strided_slice %56 {offsets = [64, 0], sizes = [16, 128], strides = [1, 1]} : vector<144x128xf32> to vector<16x128xf32>
    %c4_56 = arith.constant 4 : index
    %c0_57 = arith.constant 0 : index
    %c0_58 = arith.constant 0 : index
    %79 = vector.load %arg6[%c4_56, %c0_57, %c0_58] : memref<9x128x128xf32, #tpu.memory_space<vmem>>, vector<1x128x128xf32>
    %80 = vector.shape_cast %79 : vector<1x128x128xf32> to vector<128x128xf32>
    %cst_59 = arith.constant dense<0.000000e+00> : vector<16x128xf32>
    %81 = tpu.matmul %78, %80, %cst_59 {dimension_numbers = #tpu.dot_dimension_numbers<[1], [0], [0], [1], [0, 0, 1, 1], [], []>} : vector<16x128xf32>, vector<128x128xf32>, vector<16x128xf32> -> vector<16x128xf32>
    %82 = arith.addf %77, %81 : vector<16x128xf32>
    %83 = vector.extract_strided_slice %56 {offsets = [80, 0], sizes = [16, 128], strides = [1, 1]} : vector<144x128xf32> to vector<16x128xf32>
    %c5_60 = arith.constant 5 : index
    %c0_61 = arith.constant 0 : index
    %c0_62 = arith.constant 0 : index
    %84 = vector.load %arg6[%c5_60, %c0_61, %c0_62] : memref<9x128x128xf32, #tpu.memory_space<vmem>>, vector<1x128x128xf32>
    %85 = vector.shape_cast %84 : vector<1x128x128xf32> to vector<128x128xf32>
    %cst_63 = arith.constant dense<0.000000e+00> : vector<16x128xf32>
    %86 = tpu.matmul %83, %85, %cst_63 {dimension_numbers = #tpu.dot_dimension_numbers<[1], [0], [0], [1], [0, 0, 1, 1], [], []>} : vector<16x128xf32>, vector<128x128xf32>, vector<16x128xf32> -> vector<16x128xf32>
    %87 = arith.addf %82, %86 : vector<16x128xf32>
    %88 = vector.extract_strided_slice %56 {offsets = [96, 0], sizes = [16, 128], strides = [1, 1]} : vector<144x128xf32> to vector<16x128xf32>
    %c6_64 = arith.constant 6 : index
    %c0_65 = arith.constant 0 : index
    %c0_66 = arith.constant 0 : index
    %89 = vector.load %arg6[%c6_64, %c0_65, %c0_66] : memref<9x128x128xf32, #tpu.memory_space<vmem>>, vector<1x128x128xf32>
    %90 = vector.shape_cast %89 : vector<1x128x128xf32> to vector<128x128xf32>
    %cst_67 = arith.constant dense<0.000000e+00> : vector<16x128xf32>
    %91 = tpu.matmul %88, %90, %cst_67 {dimension_numbers = #tpu.dot_dimension_numbers<[1], [0], [0], [1], [0, 0, 1, 1], [], []>} : vector<16x128xf32>, vector<128x128xf32>, vector<16x128xf32> -> vector<16x128xf32>
    %92 = arith.addf %87, %91 : vector<16x128xf32>
    %93 = vector.extract_strided_slice %56 {offsets = [112, 0], sizes = [16, 128], strides = [1, 1]} : vector<144x128xf32> to vector<16x128xf32>
    %c7_68 = arith.constant 7 : index
    %c0_69 = arith.constant 0 : index
    %c0_70 = arith.constant 0 : index
    %94 = vector.load %arg6[%c7_68, %c0_69, %c0_70] : memref<9x128x128xf32, #tpu.memory_space<vmem>>, vector<1x128x128xf32>
    %95 = vector.shape_cast %94 : vector<1x128x128xf32> to vector<128x128xf32>
    %cst_71 = arith.constant dense<0.000000e+00> : vector<16x128xf32>
    %96 = tpu.matmul %93, %95, %cst_71 {dimension_numbers = #tpu.dot_dimension_numbers<[1], [0], [0], [1], [0, 0, 1, 1], [], []>} : vector<16x128xf32>, vector<128x128xf32>, vector<16x128xf32> -> vector<16x128xf32>
    %97 = arith.addf %92, %96 : vector<16x128xf32>
    %98 = vector.extract_strided_slice %56 {offsets = [128, 0], sizes = [16, 128], strides = [1, 1]} : vector<144x128xf32> to vector<16x128xf32>
    %c8_72 = arith.constant 8 : index
    %c0_73 = arith.constant 0 : index
    %c0_74 = arith.constant 0 : index
    %99 = vector.load %arg6[%c8_72, %c0_73, %c0_74] : memref<9x128x128xf32, #tpu.memory_space<vmem>>, vector<1x128x128xf32>
    %100 = vector.shape_cast %99 : vector<1x128x128xf32> to vector<128x128xf32>
    %cst_75 = arith.constant dense<0.000000e+00> : vector<16x128xf32>
    %101 = tpu.matmul %98, %100, %cst_75 {dimension_numbers = #tpu.dot_dimension_numbers<[1], [0], [0], [1], [0, 0, 1, 1], [], []>} : vector<16x128xf32>, vector<128x128xf32>, vector<16x128xf32> -> vector<16x128xf32>
    %102 = arith.addf %97, %101 : vector<16x128xf32>
    %c0_76 = arith.constant 0 : index
    %c0_77 = arith.constant 0 : index
    %103 = vector.load %arg7[%c0_76, %c0_77] : memref<1x128xf32, #tpu.memory_space<vmem>>, vector<1x128xf32>
    %104 = vector.broadcast %103 : vector<1x128xf32> to vector<16x128xf32>
    %105 = arith.addf %102, %104 : vector<16x128xf32>
    %cst_78 = arith.constant 0.000000e+00 : f32
    %106 = vector.broadcast %cst_78 : f32 to vector<16x128xf32>
    %107 = arith.maximumf %105, %106 : vector<16x128xf32>
    %cst_79 = arith.constant 0.000000e+00 : f32
    %108 = vector.broadcast %cst_79 : f32 to vector<1x128xf32>
    %109 = vector.extract_strided_slice %107 {offsets = [0, 0], sizes = [1, 128], strides = [1, 1]} : vector<16x128xf32> to vector<1x128xf32>
    %c0_80 = arith.constant 0 : index
    %c0_81 = arith.constant 0 : index
    %c0_82 = arith.constant 0 : index
    %110 = vector.load %arg8[%c0_80, %c0_81, %c0_82] : memref<16x128x128xf32, #tpu.memory_space<vmem>>, vector<1x128x128xf32>
    %111 = vector.shape_cast %110 : vector<1x128x128xf32> to vector<128x128xf32>
    %cst_83 = arith.constant dense<0.000000e+00> : vector<1x128xf32>
    %112 = tpu.matmul %109, %111, %cst_83 {dimension_numbers = #tpu.dot_dimension_numbers<[1], [0], [0], [1], [0, 0, 1, 1], [], []>} : vector<1x128xf32>, vector<128x128xf32>, vector<1x128xf32> -> vector<1x128xf32>
    %113 = arith.addf %108, %112 : vector<1x128xf32>
    %114 = vector.extract_strided_slice %107 {offsets = [1, 0], sizes = [1, 128], strides = [1, 1]} : vector<16x128xf32> to vector<1x128xf32>
    %c1_84 = arith.constant 1 : index
    %c0_85 = arith.constant 0 : index
    %c0_86 = arith.constant 0 : index
    %115 = vector.load %arg8[%c1_84, %c0_85, %c0_86] : memref<16x128x128xf32, #tpu.memory_space<vmem>>, vector<1x128x128xf32>
    %116 = vector.shape_cast %115 : vector<1x128x128xf32> to vector<128x128xf32>
    %cst_87 = arith.constant dense<0.000000e+00> : vector<1x128xf32>
    %117 = tpu.matmul %114, %116, %cst_87 {dimension_numbers = #tpu.dot_dimension_numbers<[1], [0], [0], [1], [0, 0, 1, 1], [], []>} : vector<1x128xf32>, vector<128x128xf32>, vector<1x128xf32> -> vector<1x128xf32>
    %118 = arith.addf %113, %117 : vector<1x128xf32>
    %119 = vector.extract_strided_slice %107 {offsets = [2, 0], sizes = [1, 128], strides = [1, 1]} : vector<16x128xf32> to vector<1x128xf32>
    %c2_88 = arith.constant 2 : index
    %c0_89 = arith.constant 0 : index
    %c0_90 = arith.constant 0 : index
    %120 = vector.load %arg8[%c2_88, %c0_89, %c0_90] : memref<16x128x128xf32, #tpu.memory_space<vmem>>, vector<1x128x128xf32>
    %121 = vector.shape_cast %120 : vector<1x128x128xf32> to vector<128x128xf32>
    %cst_91 = arith.constant dense<0.000000e+00> : vector<1x128xf32>
    %122 = tpu.matmul %119, %121, %cst_91 {dimension_numbers = #tpu.dot_dimension_numbers<[1], [0], [0], [1], [0, 0, 1, 1], [], []>} : vector<1x128xf32>, vector<128x128xf32>, vector<1x128xf32> -> vector<1x128xf32>
    %123 = arith.addf %118, %122 : vector<1x128xf32>
    %124 = vector.extract_strided_slice %107 {offsets = [3, 0], sizes = [1, 128], strides = [1, 1]} : vector<16x128xf32> to vector<1x128xf32>
    %c3_92 = arith.constant 3 : index
    %c0_93 = arith.constant 0 : index
    %c0_94 = arith.constant 0 : index
    %125 = vector.load %arg8[%c3_92, %c0_93, %c0_94] : memref<16x128x128xf32, #tpu.memory_space<vmem>>, vector<1x128x128xf32>
    %126 = vector.shape_cast %125 : vector<1x128x128xf32> to vector<128x128xf32>
    %cst_95 = arith.constant dense<0.000000e+00> : vector<1x128xf32>
    %127 = tpu.matmul %124, %126, %cst_95 {dimension_numbers = #tpu.dot_dimension_numbers<[1], [0], [0], [1], [0, 0, 1, 1], [], []>} : vector<1x128xf32>, vector<128x128xf32>, vector<1x128xf32> -> vector<1x128xf32>
    %128 = arith.addf %123, %127 : vector<1x128xf32>
    %129 = vector.extract_strided_slice %107 {offsets = [4, 0], sizes = [1, 128], strides = [1, 1]} : vector<16x128xf32> to vector<1x128xf32>
    %c4_96 = arith.constant 4 : index
    %c0_97 = arith.constant 0 : index
    %c0_98 = arith.constant 0 : index
    %130 = vector.load %arg8[%c4_96, %c0_97, %c0_98] : memref<16x128x128xf32, #tpu.memory_space<vmem>>, vector<1x128x128xf32>
    %131 = vector.shape_cast %130 : vector<1x128x128xf32> to vector<128x128xf32>
    %cst_99 = arith.constant dense<0.000000e+00> : vector<1x128xf32>
    %132 = tpu.matmul %129, %131, %cst_99 {dimension_numbers = #tpu.dot_dimension_numbers<[1], [0], [0], [1], [0, 0, 1, 1], [], []>} : vector<1x128xf32>, vector<128x128xf32>, vector<1x128xf32> -> vector<1x128xf32>
    %133 = arith.addf %128, %132 : vector<1x128xf32>
    %134 = vector.extract_strided_slice %107 {offsets = [5, 0], sizes = [1, 128], strides = [1, 1]} : vector<16x128xf32> to vector<1x128xf32>
    %c5_100 = arith.constant 5 : index
    %c0_101 = arith.constant 0 : index
    %c0_102 = arith.constant 0 : index
    %135 = vector.load %arg8[%c5_100, %c0_101, %c0_102] : memref<16x128x128xf32, #tpu.memory_space<vmem>>, vector<1x128x128xf32>
    %136 = vector.shape_cast %135 : vector<1x128x128xf32> to vector<128x128xf32>
    %cst_103 = arith.constant dense<0.000000e+00> : vector<1x128xf32>
    %137 = tpu.matmul %134, %136, %cst_103 {dimension_numbers = #tpu.dot_dimension_numbers<[1], [0], [0], [1], [0, 0, 1, 1], [], []>} : vector<1x128xf32>, vector<128x128xf32>, vector<1x128xf32> -> vector<1x128xf32>
    %138 = arith.addf %133, %137 : vector<1x128xf32>
    %139 = vector.extract_strided_slice %107 {offsets = [6, 0], sizes = [1, 128], strides = [1, 1]} : vector<16x128xf32> to vector<1x128xf32>
    %c6_104 = arith.constant 6 : index
    %c0_105 = arith.constant 0 : index
    %c0_106 = arith.constant 0 : index
    %140 = vector.load %arg8[%c6_104, %c0_105, %c0_106] : memref<16x128x128xf32, #tpu.memory_space<vmem>>, vector<1x128x128xf32>
    %141 = vector.shape_cast %140 : vector<1x128x128xf32> to vector<128x128xf32>
    %cst_107 = arith.constant dense<0.000000e+00> : vector<1x128xf32>
    %142 = tpu.matmul %139, %141, %cst_107 {dimension_numbers = #tpu.dot_dimension_numbers<[1], [0], [0], [1], [0, 0, 1, 1], [], []>} : vector<1x128xf32>, vector<128x128xf32>, vector<1x128xf32> -> vector<1x128xf32>
    %143 = arith.addf %138, %142 : vector<1x128xf32>
    %144 = vector.extract_strided_slice %107 {offsets = [7, 0], sizes = [1, 128], strides = [1, 1]} : vector<16x128xf32> to vector<1x128xf32>
    %c7_108 = arith.constant 7 : index
    %c0_109 = arith.constant 0 : index
    %c0_110 = arith.constant 0 : index
    %145 = vector.load %arg8[%c7_108, %c0_109, %c0_110] : memref<16x128x128xf32, #tpu.memory_space<vmem>>, vector<1x128x128xf32>
    %146 = vector.shape_cast %145 : vector<1x128x128xf32> to vector<128x128xf32>
    %cst_111 = arith.constant dense<0.000000e+00> : vector<1x128xf32>
    %147 = tpu.matmul %144, %146, %cst_111 {dimension_numbers = #tpu.dot_dimension_numbers<[1], [0], [0], [1], [0, 0, 1, 1], [], []>} : vector<1x128xf32>, vector<128x128xf32>, vector<1x128xf32> -> vector<1x128xf32>
    %148 = arith.addf %143, %147 : vector<1x128xf32>
    %149 = vector.extract_strided_slice %107 {offsets = [8, 0], sizes = [1, 128], strides = [1, 1]} : vector<16x128xf32> to vector<1x128xf32>
    %c8_112 = arith.constant 8 : index
    %c0_113 = arith.constant 0 : index
    %c0_114 = arith.constant 0 : index
    %150 = vector.load %arg8[%c8_112, %c0_113, %c0_114] : memref<16x128x128xf32, #tpu.memory_space<vmem>>, vector<1x128x128xf32>
    %151 = vector.shape_cast %150 : vector<1x128x128xf32> to vector<128x128xf32>
    %cst_115 = arith.constant dense<0.000000e+00> : vector<1x128xf32>
    %152 = tpu.matmul %149, %151, %cst_115 {dimension_numbers = #tpu.dot_dimension_numbers<[1], [0], [0], [1], [0, 0, 1, 1], [], []>} : vector<1x128xf32>, vector<128x128xf32>, vector<1x128xf32> -> vector<1x128xf32>
    %153 = arith.addf %148, %152 : vector<1x128xf32>
    %154 = vector.extract_strided_slice %107 {offsets = [9, 0], sizes = [1, 128], strides = [1, 1]} : vector<16x128xf32> to vector<1x128xf32>
    %c9 = arith.constant 9 : index
    %c0_116 = arith.constant 0 : index
    %c0_117 = arith.constant 0 : index
    %155 = vector.load %arg8[%c9, %c0_116, %c0_117] : memref<16x128x128xf32, #tpu.memory_space<vmem>>, vector<1x128x128xf32>
    %156 = vector.shape_cast %155 : vector<1x128x128xf32> to vector<128x128xf32>
    %cst_118 = arith.constant dense<0.000000e+00> : vector<1x128xf32>
    %157 = tpu.matmul %154, %156, %cst_118 {dimension_numbers = #tpu.dot_dimension_numbers<[1], [0], [0], [1], [0, 0, 1, 1], [], []>} : vector<1x128xf32>, vector<128x128xf32>, vector<1x128xf32> -> vector<1x128xf32>
    %158 = arith.addf %153, %157 : vector<1x128xf32>
    %159 = vector.extract_strided_slice %107 {offsets = [10, 0], sizes = [1, 128], strides = [1, 1]} : vector<16x128xf32> to vector<1x128xf32>
    %c10 = arith.constant 10 : index
    %c0_119 = arith.constant 0 : index
    %c0_120 = arith.constant 0 : index
    %160 = vector.load %arg8[%c10, %c0_119, %c0_120] : memref<16x128x128xf32, #tpu.memory_space<vmem>>, vector<1x128x128xf32>
    %161 = vector.shape_cast %160 : vector<1x128x128xf32> to vector<128x128xf32>
    %cst_121 = arith.constant dense<0.000000e+00> : vector<1x128xf32>
    %162 = tpu.matmul %159, %161, %cst_121 {dimension_numbers = #tpu.dot_dimension_numbers<[1], [0], [0], [1], [0, 0, 1, 1], [], []>} : vector<1x128xf32>, vector<128x128xf32>, vector<1x128xf32> -> vector<1x128xf32>
    %163 = arith.addf %158, %162 : vector<1x128xf32>
    %164 = vector.extract_strided_slice %107 {offsets = [11, 0], sizes = [1, 128], strides = [1, 1]} : vector<16x128xf32> to vector<1x128xf32>
    %c11 = arith.constant 11 : index
    %c0_122 = arith.constant 0 : index
    %c0_123 = arith.constant 0 : index
    %165 = vector.load %arg8[%c11, %c0_122, %c0_123] : memref<16x128x128xf32, #tpu.memory_space<vmem>>, vector<1x128x128xf32>
    %166 = vector.shape_cast %165 : vector<1x128x128xf32> to vector<128x128xf32>
    %cst_124 = arith.constant dense<0.000000e+00> : vector<1x128xf32>
    %167 = tpu.matmul %164, %166, %cst_124 {dimension_numbers = #tpu.dot_dimension_numbers<[1], [0], [0], [1], [0, 0, 1, 1], [], []>} : vector<1x128xf32>, vector<128x128xf32>, vector<1x128xf32> -> vector<1x128xf32>
    %168 = arith.addf %163, %167 : vector<1x128xf32>
    %169 = vector.extract_strided_slice %107 {offsets = [12, 0], sizes = [1, 128], strides = [1, 1]} : vector<16x128xf32> to vector<1x128xf32>
    %c12 = arith.constant 12 : index
    %c0_125 = arith.constant 0 : index
    %c0_126 = arith.constant 0 : index
    %170 = vector.load %arg8[%c12, %c0_125, %c0_126] : memref<16x128x128xf32, #tpu.memory_space<vmem>>, vector<1x128x128xf32>
    %171 = vector.shape_cast %170 : vector<1x128x128xf32> to vector<128x128xf32>
    %cst_127 = arith.constant dense<0.000000e+00> : vector<1x128xf32>
    %172 = tpu.matmul %169, %171, %cst_127 {dimension_numbers = #tpu.dot_dimension_numbers<[1], [0], [0], [1], [0, 0, 1, 1], [], []>} : vector<1x128xf32>, vector<128x128xf32>, vector<1x128xf32> -> vector<1x128xf32>
    %173 = arith.addf %168, %172 : vector<1x128xf32>
    %174 = vector.extract_strided_slice %107 {offsets = [13, 0], sizes = [1, 128], strides = [1, 1]} : vector<16x128xf32> to vector<1x128xf32>
    %c13 = arith.constant 13 : index
    %c0_128 = arith.constant 0 : index
    %c0_129 = arith.constant 0 : index
    %175 = vector.load %arg8[%c13, %c0_128, %c0_129] : memref<16x128x128xf32, #tpu.memory_space<vmem>>, vector<1x128x128xf32>
    %176 = vector.shape_cast %175 : vector<1x128x128xf32> to vector<128x128xf32>
    %cst_130 = arith.constant dense<0.000000e+00> : vector<1x128xf32>
    %177 = tpu.matmul %174, %176, %cst_130 {dimension_numbers = #tpu.dot_dimension_numbers<[1], [0], [0], [1], [0, 0, 1, 1], [], []>} : vector<1x128xf32>, vector<128x128xf32>, vector<1x128xf32> -> vector<1x128xf32>
    %178 = arith.addf %173, %177 : vector<1x128xf32>
    %179 = vector.extract_strided_slice %107 {offsets = [14, 0], sizes = [1, 128], strides = [1, 1]} : vector<16x128xf32> to vector<1x128xf32>
    %c14 = arith.constant 14 : index
    %c0_131 = arith.constant 0 : index
    %c0_132 = arith.constant 0 : index
    %180 = vector.load %arg8[%c14, %c0_131, %c0_132] : memref<16x128x128xf32, #tpu.memory_space<vmem>>, vector<1x128x128xf32>
    %181 = vector.shape_cast %180 : vector<1x128x128xf32> to vector<128x128xf32>
    %cst_133 = arith.constant dense<0.000000e+00> : vector<1x128xf32>
    %182 = tpu.matmul %179, %181, %cst_133 {dimension_numbers = #tpu.dot_dimension_numbers<[1], [0], [0], [1], [0, 0, 1, 1], [], []>} : vector<1x128xf32>, vector<128x128xf32>, vector<1x128xf32> -> vector<1x128xf32>
    %183 = arith.addf %178, %182 : vector<1x128xf32>
    %184 = vector.extract_strided_slice %107 {offsets = [15, 0], sizes = [1, 128], strides = [1, 1]} : vector<16x128xf32> to vector<1x128xf32>
    %c15 = arith.constant 15 : index
    %c0_134 = arith.constant 0 : index
    %c0_135 = arith.constant 0 : index
    %185 = vector.load %arg8[%c15, %c0_134, %c0_135] : memref<16x128x128xf32, #tpu.memory_space<vmem>>, vector<1x128x128xf32>
    %186 = vector.shape_cast %185 : vector<1x128x128xf32> to vector<128x128xf32>
    %cst_136 = arith.constant dense<0.000000e+00> : vector<1x128xf32>
    %187 = tpu.matmul %184, %186, %cst_136 {dimension_numbers = #tpu.dot_dimension_numbers<[1], [0], [0], [1], [0, 0, 1, 1], [], []>} : vector<1x128xf32>, vector<128x128xf32>, vector<1x128xf32> -> vector<1x128xf32>
    %188 = arith.addf %183, %187 : vector<1x128xf32>
    %c0_137 = arith.constant 0 : index
    %c0_138 = arith.constant 0 : index
    %189 = vector.load %arg9[%c0_137, %c0_138] : memref<1x128xf32, #tpu.memory_space<vmem>>, vector<1x128xf32>
    %190 = arith.addf %188, %189 : vector<1x128xf32>
    %cst_139 = arith.constant 0.000000e+00 : f32
    %191 = vector.broadcast %cst_139 : f32 to vector<1x128xf32>
    %192 = arith.maximumf %190, %191 : vector<1x128xf32>
    %c0_140 = arith.constant 0 : index
    %c0_141 = arith.constant 0 : index
    %c0_142 = arith.constant 0 : index
    %193 = vector.load %arg10[%c0_140, %c0_141, %c0_142] : memref<1x128x128xf32, #tpu.memory_space<vmem>>, vector<1x128x128xf32>
    %194 = vector.shape_cast %193 : vector<1x128x128xf32> to vector<128x128xf32>
    %cst_143 = arith.constant dense<0.000000e+00> : vector<1x128xf32>
    %195 = tpu.matmul %192, %194, %cst_143 {dimension_numbers = #tpu.dot_dimension_numbers<[1], [0], [0], [1], [0, 0, 1, 1], [], []>} : vector<1x128xf32>, vector<128x128xf32>, vector<1x128xf32> -> vector<1x128xf32>
    %c0_144 = arith.constant 0 : index
    %c0_145 = arith.constant 0 : index
    %c0_146 = arith.constant 0 : index
    %196 = vector.load %arg11[%c0_144, %c0_145, %c0_146] : memref<1x1x128xf32, #tpu.memory_space<vmem>>, vector<1x1x128xf32>
    %197 = vector.shape_cast %196 : vector<1x1x128xf32> to vector<1x128xf32>
    %198 = arith.addf %195, %197 : vector<1x128xf32>
    %cst_147 = arith.constant 0.000000e+00 : f32
    %199 = vector.broadcast %cst_147 : f32 to vector<1x128xf32>
    %200 = arith.maximumf %198, %199 : vector<1x128xf32>
    %c0_148 = arith.constant 0 : index
    %c0_149 = arith.constant 0 : index
    %201 = vector.load %arg12[%c0_148, %c0_149] : memref<128x128xf32, #tpu.memory_space<vmem>>, vector<128x128xf32>
    %cst_150 = arith.constant dense<0.000000e+00> : vector<1x128xf32>
    %202 = tpu.matmul %200, %201, %cst_150 {dimension_numbers = #tpu.dot_dimension_numbers<[1], [0], [0], [1], [0, 0, 1, 1], [], []>} : vector<1x128xf32>, vector<128x128xf32>, vector<1x128xf32> -> vector<1x128xf32>
    %c0_151 = arith.constant 0 : index
    %c0_152 = arith.constant 0 : index
    %203 = vector.load %arg13[%c0_151, %c0_152] : memref<1x128xf32, #tpu.memory_space<vmem>>, vector<1x128xf32>
    %204 = arith.addf %202, %203 : vector<1x128xf32>
    %205 = math.tanh %204 : vector<1x128xf32>
    %cst_153 = arith.constant 1.000000e+00 : f32
    %206 = vector.broadcast %cst_153 : f32 to vector<1x128xf32>
    %207 = arith.mulf %205, %206 : vector<1x128xf32>
    %c0_154 = arith.constant 0 : index
    %c0_155 = arith.constant 0 : index
    %c0_156 = arith.constant 0 : index
    %208 = vector.load %arg14[%c0_154, %c0_155, %c0_156] : memref<1x1x128xf32, #tpu.memory_space<vmem>>, vector<1x1x128xf32>
    %209 = vector.shape_cast %208 : vector<1x1x128xf32> to vector<1x128xf32>
    %210 = vector.shape_cast %207 : vector<1x128xf32> to vector<1x1x128xf32>
    tpu.vector_store %arg14[%c0_154, %c0_155, %c0_156], %210 {strides = array<i32>} : memref<1x1x128xf32, #tpu.memory_space<vmem>>, vector<1x1x128xf32>,
    return
  }
  func.func @transform_0(%arg0: i32) -> (i32, i32, i32) {
    %c0_i32 = arith.constant 0 : i32
    %c0_i32_0 = arith.constant 0 : i32
    %c0_i32_1 = arith.constant 0 : i32
    return %arg0, %c0_i32, %c0_i32_0 : i32, i32, i32
  }
  func.func @transform_1(%arg0: i32) -> (i32, i32) {
    %c0_i32 = arith.constant 0 : i32
    %c0_i32_0 = arith.constant 0 : i32
    %c0_i32_1 = arith.constant 0 : i32
    return %c0_i32, %c0_i32_0 : i32, i32
  }
  func.func @transform_2(%arg0: i32) -> (i32, i32, i32) {
    %c0_i32 = arith.constant 0 : i32
    %c0_i32_0 = arith.constant 0 : i32
    %c0_i32_1 = arith.constant 0 : i32
    %c0_i32_2 = arith.constant 0 : i32
    return %c0_i32, %c0_i32_0, %c0_i32_1 : i32, i32, i32
  }
  func.func @transform_3(%arg0: i32) -> (i32, i32) {
    %c0_i32 = arith.constant 0 : i32
    %c0_i32_0 = arith.constant 0 : i32
    %c0_i32_1 = arith.constant 0 : i32
    return %c0_i32, %c0_i32_0 : i32, i32
  }
  func.func @transform_4(%arg0: i32) -> (i32, i32) {
    %c0_i32 = arith.constant 0 : i32
    %c0_i32_0 = arith.constant 0 : i32
    %c0_i32_1 = arith.constant 0 : i32
    return %c0_i32, %c0_i32_0 : i32, i32
  }
  func.func @transform_5(%arg0: i32) -> (i32, i32, i32) {
    %c0_i32 = arith.constant 0 : i32
    %c0_i32_0 = arith.constant 0 : i32
    %c0_i32_1 = arith.constant 0 : i32
    %c0_i32_2 = arith.constant 0 : i32
    return %c0_i32, %c0_i32_0, %c0_i32_1 : i32, i32, i32
  }
  func.func @transform_6(%arg0: i32) -> (i32, i32) {
    %c0_i32 = arith.constant 0 : i32
    %c0_i32_0 = arith.constant 0 : i32
    %c0_i32_1 = arith.constant 0 : i32
    return %c0_i32, %c0_i32_0 : i32, i32
  }
  func.func @transform_7(%arg0: i32) -> (i32, i32, i32) {
    %c0_i32 = arith.constant 0 : i32
    %c0_i32_0 = arith.constant 0 : i32
    %c0_i32_1 = arith.constant 0 : i32
    %c0_i32_2 = arith.constant 0 : i32
    return %c0_i32, %c0_i32_0, %c0_i32_1 : i32, i32, i32
  }
  func.func @transform_8(%arg0: i32) -> (i32, i32) {
    %c0_i32 = arith.constant 0 : i32
    %c0_i32_0 = arith.constant 0 : i32
    %c0_i32_1 = arith.constant 0 : i32
    return %c0_i32, %c0_i32_0 : i32, i32
  }
  func.func @transform_9(%arg0: i32) -> (i32, i32, i32) {
    %c0_i32 = arith.constant 0 : i32
    %c0_i32_0 = arith.constant 0 : i32
    %c0_i32_1 = arith.constant 0 : i32
    %c0_i32_2 = arith.constant 0 : i32
    return %c0_i32, %c0_i32_0, %c0_i32_1 : i32, i32, i32
  }
  func.func @transform_10(%arg0: i32) -> (i32, i32, i32) {
    %c0_i32 = arith.constant 0 : i32
    %c0_i32_0 = arith.constant 0 : i32
    %c0_i32_1 = arith.constant 0 : i32
    %c0_i32_2 = arith.constant 0 : i32
    return %c0_i32, %c0_i32_0, %c0_i32_1 : i32, i32, i32
  }
  func.func @transform_11(%arg0: i32) -> (i32, i32) {
    %c0_i32 = arith.constant 0 : i32
    %c0_i32_0 = arith.constant 0 : i32
    %c0_i32_1 = arith.constant 0 : i32
    return %c0_i32, %c0_i32_0 : i32, i32
  }
  func.func @transform_12(%arg0: i32) -> (i32, i32) {
    %c0_i32 = arith.constant 0 : i32
    %c0_i32_0 = arith.constant 0 : i32
    %c0_i32_1 = arith.constant 0 : i32
    return %c0_i32, %c0_i32_0 : i32, i32
  }
  func.func @transform_13(%arg0: i32) -> (i32, i32, i32) {
    %c0_i32 = arith.constant 0 : i32
    %c0_i32_0 = arith.constant 0 : i32
    %c0_i32_1 = arith.constant 0 : i32
    return %arg0, %c0_i32, %c0_i32_0 : i32, i32, i32
  }
}

</mosaic_0001>

<llo_original>
// kernel: tpu_custom_call.1
$region0: #{tpu_custom_call.1}
  #allocation0 [shape = 'u32[]', space=smem, size = 0x4, offset = 0x4, fixed_abs, tag = 'smem constant byte address 0x4 - core index']
  #allocation1 [shape = 'u32[144,128]{1,0:T(1,128)}', space=vmem, size = 0x12000, scoped, tag = 'internal scratch']
  %s0 = inlined_call_operand.vmem [shape: f32[2,256,4], index: 0, kind: input, shape index: {}]
  %s1 = inlined_call_operand.hbm [shape: f32[576,256], index: 1, kind: input, shape index: {}]
  %s2 = inlined_call_operand.vmem [shape: f32[9,4,128], index: 2, kind: input, shape index: {}]
  %s3 = inlined_call_operand.vmem [shape: f32[1,128], index: 3, kind: input, shape index: {}]
  %s4 = inlined_call_operand.vmem [shape: f32[144,64], index: 4, kind: input, shape index: {}]
  %s5 = inlined_call_operand.hbm [shape: f32[9,128,128], index: 5, kind: input, shape index: {}]
  %s6 = inlined_call_operand.vmem [shape: f32[1,128], index: 6, kind: input, shape index: {}]
  %s7 = inlined_call_operand.hbm [shape: f32[16,128,128], index: 7, kind: input, shape index: {}]
  %s8 = inlined_call_operand.vmem [shape: f32[1,128], index: 8, kind: input, shape index: {}]
  %s9 = inlined_call_operand.vmem [shape: f32[1,128,128], index: 9, kind: input, shape index: {}]
  %s10 = inlined_call_operand.vmem [shape: f32[1,1,128], index: 10, kind: input, shape index: {}]
  %s11 = inlined_call_operand.vmem [shape: f32[128,128], index: 11, kind: input, shape index: {}]
  %s12 = inlined_call_operand.vmem [shape: f32[1,128], index: 12, kind: input, shape index: {}]
  %s13 = inlined_call_operand.hbm [shape: f32[2,1,128], index: 13, kind: output, shape index: {}]
  %s14 = sld [smem:[#allocation0]]
  $region97: #{tpu_custom_call.1} parent=0
    _
  %s16 = ssub.s32 1, %s14
  %s17 = scalar_select 0, %s16, %s14
  $region1: #{tpu_custom_call.1} parent=0
    #allocation2 [shape = 'u8[589824]{0}', space=vmem, size = 0x90000, scoped, tag = 'input window, operand 1, single buffered']
    #allocation3 [shape = 's32[2]{0}', space=sflag, size = 0x8, scoped, tag = 'scoped memory for tpu_custom_call.1']
    #allocation4 [shape = 's32[2]{0}', space=sflag, size = 0x8, scoped, tag = 'scoped memory for tpu_custom_call.1']
    #allocation5 [shape = 'u8[589824]{0}', space=vmem, size = 0x90000, scoped, tag = 'input window, operand 5, single buffered']
    #allocation6 [shape = 's32[1]{0}', space=sflag, size = 0x4, scoped, tag = 'scoped memory for tpu_custom_call.1']
    #allocation7 [shape = 'u8[1048576]{0}', space=vmem, size = 0x100000, scoped, tag = 'input window, operand 7, single buffered']
    #allocation8 [shape = 'u8[1024]{0}', space=vmem, size = 0x400, scoped, tag = 'output window, operand 0']
    %18 = vsyncpa [#allocation3], 0
    %19 = vsyncpa [#allocation6], 0
    %20 = vsyncpa [#allocation4], 0
    %s21 = scalar_lea.sflag [#allocation4], 1
    %22 = vsyncpa %s21, 0
    loop: start=0, step=1, limit=4
    $region2: #{tpu_custom_call.1} parent=1 // loop_pre_header
      _
    $region3: #{tpu_custom_call.1} parent=1 // loop_header
      %s24 = sphi 0, %s28
      %p25 = scmp.ge.s32.totalorder %s24, 4
      %s34 = sphi 0, %s36
      %s37 = sphi 0, %s34
      %s38 = sphi 0, %s37
      %s54 = sphi 0, %s38
      %s58 = sphi 0, %s58
      %s60 = sphi 0, %s58
      %s61 = sphi 0, %s60
      %s75 = sphi 0, %s61
      %s79 = sphi 0, %s79
      %s81 = sphi 0, %s79
      %s82 = sphi 0, %s81
      %s96 = sphi 0, %s82
      %s100 = sphi 0, %s100
      %s102 = sphi 0, %s100
      %s103 = sphi 0, %s102
      %s117 = sphi 0, %s103
      %s121 = sphi 0, %s121
      %s123 = sphi 0, %s121
      %s124 = sphi 0, %s123
      %s138 = sphi 0, %s124
      %s142 = sphi 0, %s142
      %s144 = sphi 0, %s142
      %s145 = sphi 0, %s144
      %s159 = sphi 0, %s145
      %s163 = sphi 0, %s163
      %s165 = sphi 0, %s163
      %s166 = sphi 0, %s165
      %s180 = sphi 0, %s166
      %s184 = sphi 0, %s184
      %s186 = sphi 0, %s184
      %s187 = sphi 0, %s186
      %s201 = sphi 0, %s187
      %s205 = sphi 0, %s205
      %s207 = sphi 0, %s205
      %s208 = sphi 0, %s207
      %s222 = sphi 0, %s208
      %s226 = sphi 0, %s226
      %s228 = sphi 0, %s226
      %s229 = sphi 0, %s228
      %s243 = sphi 0, %s229
      %s247 = sphi 0, %s247
      %s249 = sphi 0, %s247
      %s250 = sphi 0, %s249
      %s264 = sphi 0, %s250
      %s268 = sphi 0, %s268
      %s270 = sphi 0, %s268
      %s271 = sphi 0, %s270
      %s285 = sphi 0, %s271
      %s289 = sphi 0, %s289
      %s291 = sphi 0, %s289
      %s292 = sphi 0, %s291
      %s306 = sphi 0, %s292
      %s312 = sphi 0, %s314
      %s315 = sphi 0, %s312
      %s316 = sphi 0, %s315
      %s332 = sphi 0, %s316
    $region4: #{tpu_custom_call.1} parent=1 // loop_header_branch
      %27 = sbr.rel (%p25) target = $region8
    $region5: #{tpu_custom_call.1} parent=1 // loop_body
      %s29 = ssub.s32 %s24, 1
      %s30 = ssub.s32 %s24, 2
      %s31 = sadd.s32 %s24, 1
      %s32 = ssub.s32 %s24, %s31
      %p33 = scmp.eq.s32.totalorder %s32, 0
      %s35 = sadd.s32 %s34, 1
      %s36 = scalar_select %p33, %s34, %s35
      %p39 = pneg %p33
      %p40 = scmp.eq.s32.totalorder %s24, 1
      %p41 = por %p39, %p40
      %p42 = scmp.ne.s32.totalorder %s34, %s37
      %p43 = scmp.eq.s32.totalorder %s24, 0
      %p44 = por %p42, %p43
      %p45 = scmp.ne.s32.totalorder %s34, %s37
      %p46 = scmp.eq.s32.totalorder %s29, 1
      %p47 = por %p45, %p46
      %p48 = scmp.ne.s32.totalorder %s37, %s38
      %p49 = scmp.eq.s32.totalorder %s29, 0
      %p50 = por %p48, %p49
      %p51 = scmp.ne.s32.totalorder %s37, %s38
      %p52 = scmp.eq.s32.totalorder %s30, 1
      %p53 = por %p51, %p52
      %p55 = scmp.ne.s32.totalorder %s38, %s54
      %p56 = scmp.eq.s32.totalorder %s30, 0
      %p57 = por %p55, %p56
      %s59 = sadd.s32 %s58, 1
      %p62 = scmp.eq.s32.totalorder %s24, 1
      %p63 = scmp.ne.s32.totalorder %s58, %s60
      %p64 = scmp.eq.s32.totalorder %s24, 0
      %p65 = por %p63, %p64
      %p66 = scmp.ne.s32.totalorder %s58, %s60
      %p67 = scmp.eq.s32.totalorder %s29, 1
      %p68 = por %p66, %p67
      %p69 = scmp.ne.s32.totalorder %s60, %s61
      %p70 = scmp.eq.s32.totalorder %s29, 0
      %p71 = por %p69, %p70
      %p72 = scmp.ne.s32.totalorder %s60, %s61
      %p73 = scmp.eq.s32.totalorder %s30, 1
      %p74 = por %p72, %p73
      %p76 = scmp.ne.s32.totalorder %s61, %s75
      %p77 = scmp.eq.s32.totalorder %s30, 0
      %p78 = por %p76, %p77
      %s80 = sadd.s32 %s79, 1
      %p83 = scmp.eq.s32.totalorder %s24, 1
      %p84 = scmp.ne.s32.totalorder %s79, %s81
      %p85 = scmp.eq.s32.totalorder %s24, 0
      %p86 = por %p84, %p85
      %p87 = scmp.ne.s32.totalorder %s79, %s81
      %p88 = scmp.eq.s32.totalorder %s29, 1
      %p89 = por %p87, %p88
      %p90 = scmp.ne.s32.totalorder %s81, %s82
      %p91 = scmp.eq.s32.totalorder %s29, 0
      %p92 = por %p90, %p91
      %p93 = scmp.ne.s32.totalorder %s81, %s82
      %p94 = scmp.eq.s32.totalorder %s30, 1
      %p95 = por %p93, %p94
      %p97 = scmp.ne.s32.totalorder %s82, %s96
      %p98 = scmp.eq.s32.totalorder %s30, 0
      %p99 = por %p97, %p98
      %s101 = sadd.s32 %s100, 1
      %p104 = scmp.eq.s32.totalorder %s24, 1
      %p105 = scmp.ne.s32.totalorder %s100, %s102
      %p106 = scmp.eq.s32.totalorder %s24, 0
      %p107 = por %p105, %p106
      %p108 = scmp.ne.s32.totalorder %s100, %s102
      %p109 = scmp.eq.s32.totalorder %s29, 1
      %p110 = por %p108, %p109
      %p111 = scmp.ne.s32.totalorder %s102, %s103
      %p112 = scmp.eq.s32.totalorder %s29, 0
      %p113 = por %p111, %p112
      %p114 = scmp.ne.s32.totalorder %s102, %s103
      %p115 = scmp.eq.s32.totalorder %s30, 1
      %p116 = por %p114, %p115
      %p118 = scmp.ne.s32.totalorder %s103, %s117
      %p119 = scmp.eq.s32.totalorder %s30, 0
      %p120 = por %p118, %p119
      %s122 = sadd.s32 %s121, 1
      %p125 = scmp.eq.s32.totalorder %s24, 1
      %p126 = scmp.ne.s32.totalorder %s121, %s123
      %p127 = scmp.eq.s32.totalorder %s24, 0
      %p128 = por %p126, %p127
      %p129 = scmp.ne.s32.totalorder %s121, %s123
      %p130 = scmp.eq.s32.totalorder %s29, 1
      %p131 = por %p129, %p130
      %p132 = scmp.ne.s32.totalorder %s123, %s124
      %p133 = scmp.eq.s32.totalorder %s29, 0
      %p134 = por %p132, %p133
      %p135 = scmp.ne.s32.totalorder %s123, %s124
      %p136 = scmp.eq.s32.totalorder %s30, 1
      %p137 = por %p135, %p136
      %p139 = scmp.ne.s32.totalorder %s124, %s138
      %p140 = scmp.eq.s32.totalorder %s30, 0
      %p141 = por %p139, %p140
      %s143 = sadd.s32 %s142, 1
      %p146 = scmp.eq.s32.totalorder %s24, 1
      %p147 = scmp.ne.s32.totalorder %s142, %s144
      %p148 = scmp.eq.s32.totalorder %s24, 0
      %p149 = por %p147, %p148
      %p150 = scmp.ne.s32.totalorder %s142, %s144
      %p151 = scmp.eq.s32.totalorder %s29, 1
      %p152 = por %p150, %p151
      %p153 = scmp.ne.s32.totalorder %s144, %s145
      %p154 = scmp.eq.s32.totalorder %s29, 0
      %p155 = por %p153, %p154
      %p156 = scmp.ne.s32.totalorder %s144, %s145
      %p157 = scmp.eq.s32.totalorder %s30, 1
      %p158 = por %p156, %p157
      %p160 = scmp.ne.s32.totalorder %s145, %s159
      %p161 = scmp.eq.s32.totalorder %s30, 0
      %p162 = por %p160, %p161
      %s164 = sadd.s32 %s163, 1
      %p167 = scmp.eq.s32.totalorder %s24, 1
      %p168 = scmp.ne.s32.totalorder %s163, %s165
      %p169 = scmp.eq.s32.totalorder %s24, 0
      %p170 = por %p168, %p169
      %p171 = scmp.ne.s32.totalorder %s163, %s165
      %p172 = scmp.eq.s32.totalorder %s29, 1
      %p173 = por %p171, %p172
      %p174 = scmp.ne.s32.totalorder %s165, %s166
      %p175 = scmp.eq.s32.totalorder %s29, 0
      %p176 = por %p174, %p175
      %p177 = scmp.ne.s32.totalorder %s165, %s166
      %p178 = scmp.eq.s32.totalorder %s30, 1
      %p179 = por %p177, %p178
      %p181 = scmp.ne.s32.totalorder %s166, %s180
      %p182 = scmp.eq.s32.totalorder %s30, 0
      %p183 = por %p181, %p182
      %s185 = sadd.s32 %s184, 1
      %p188 = scmp.eq.s32.totalorder %s24, 1
      %p189 = scmp.ne.s32.totalorder %s184, %s186
      %p190 = scmp.eq.s32.totalorder %s24, 0
      %p191 = por %p189, %p190
      %p192 = scmp.ne.s32.totalorder %s184, %s186
      %p193 = scmp.eq.s32.totalorder %s29, 1
      %p194 = por %p192, %p193
      %p195 = scmp.ne.s32.totalorder %s186, %s187
      %p196 = scmp.eq.s32.totalorder %s29, 0
      %p197 = por %p195, %p196
      %p198 = scmp.ne.s32.totalorder %s186, %s187
      %p199 = scmp.eq.s32.totalorder %s30, 1
      %p200 = por %p198, %p199
      %p202 = scmp.ne.s32.totalorder %s187, %s201
      %p203 = scmp.eq.s32.totalorder %s30, 0
      %p204 = por %p202, %p203
      %s206 = sadd.s32 %s205, 1
      %p209 = scmp.eq.s32.totalorder %s24, 1
      %p210 = scmp.ne.s32.totalorder %s205, %s207
      %p211 = scmp.eq.s32.totalorder %s24, 0
      %p212 = por %p210, %p211
      %p213 = scmp.ne.s32.totalorder %s205, %s207
      %p214 = scmp.eq.s32.totalorder %s29, 1
      %p215 = por %p213, %p214
      %p216 = scmp.ne.s32.totalorder %s207, %s208
      %p217 = scmp.eq.s32.totalorder %s29, 0
      %p218 = por %p216, %p217
      %p219 = scmp.ne.s32.totalorder %s207, %s208
      %p220 = scmp.eq.s32.totalorder %s30, 1
      %p221 = por %p219, %p220
      %p223 = scmp.ne.s32.totalorder %s208, %s222
      %p224 = scmp.eq.s32.totalorder %s30, 0
      %p225 = por %p223, %p224
      %s227 = sadd.s32 %s226, 1
      %p230 = scmp.eq.s32.totalorder %s24, 1
      %p231 = scmp.ne.s32.totalorder %s226, %s228
      %p232 = scmp.eq.s32.totalorder %s24, 0
      %p233 = por %p231, %p232
      %p234 = scmp.ne.s32.totalorder %s226, %s228
      %p235 = scmp.eq.s32.totalorder %s29, 1
      %p236 = por %p234, %p235
      %p237 = scmp.ne.s32.totalorder %s228, %s229
      %p238 = scmp.eq.s32.totalorder %s29, 0
      %p239 = por %p237, %p238
      %p240 = scmp.ne.s32.totalorder %s228, %s229
      %p241 = scmp.eq.s32.totalorder %s30, 1
      %p242 = por %p240, %p241
      %p244 = scmp.ne.s32.totalorder %s229, %s243
      %p245 = scmp.eq.s32.totalorder %s30, 0
      %p246 = por %p244, %p245
      %s248 = sadd.s32 %s247, 1
      %p251 = scmp.eq.s32.totalorder %s24, 1
      %p252 = scmp.ne.s32.totalorder %s247, %s249
      %p253 = scmp.eq.s32.totalorder %s24, 0
      %p254 = por %p252, %p253
      %p255 = scmp.ne.s32.totalorder %s247, %s249
      %p256 = scmp.eq.s32.totalorder %s29, 1
      %p257 = por %p255, %p256
      %p258 = scmp.ne.s32.totalorder %s249, %s250
      %p259 = scmp.eq.s32.totalorder %s29, 0
      %p260 = por %p258, %p259
      %p261 = scmp.ne.s32.totalorder %s249, %s250
      %p262 = scmp.eq.s32.totalorder %s30, 1
      %p263 = por %p261, %p262
      %p265 = scmp.ne.s32.totalorder %s250, %s264
      %p266 = scmp.eq.s32.totalorder %s30, 0
      %p267 = por %p265, %p266
      %s269 = sadd.s32 %s268, 1
      %p272 = scmp.eq.s32.totalorder %s24, 1
      %p273 = scmp.ne.s32.totalorder %s268, %s270
      %p274 = scmp.eq.s32.totalorder %s24, 0
      %p275 = por %p273, %p274
      %p276 = scmp.ne.s32.totalorder %s268, %s270
      %p277 = scmp.eq.s32.totalorder %s29, 1
      %p278 = por %p276, %p277
      %p279 = scmp.ne.s32.totalorder %s270, %s271
      %p280 = scmp.eq.s32.totalorder %s29, 0
      %p281 = por %p279, %p280
      %p282 = scmp.ne.s32.totalorder %s270, %s271
      %p283 = scmp.eq.s32.totalorder %s30, 1
      %p284 = por %p282, %p283
      %p286 = scmp.ne.s32.totalorder %s271, %s285
      %p287 = scmp.eq.s32.totalorder %s30, 0
      %p288 = por %p286, %p287
      %s290 = sadd.s32 %s289, 1
      %p293 = scmp.eq.s32.totalorder %s24, 1
      %p294 = scmp.ne.s32.totalorder %s289, %s291
      %p295 = scmp.eq.s32.totalorder %s24, 0
      %p296 = por %p294, %p295
      %p297 = scmp.ne.s32.totalorder %s289, %s291
      %p298 = scmp.eq.s32.totalorder %s29, 1
      %p299 = por %p297, %p298
      %p300 = scmp.ne.s32.totalorder %s291, %s292
      %p301 = scmp.eq.s32.totalorder %s29, 0
      %p302 = por %p300, %p301
      %p303 = scmp.ne.s32.totalorder %s291, %s292
      %p304 = scmp.eq.s32.totalorder %s30, 1
      %p305 = por %p303, %p304
      %p307 = scmp.ne.s32.totalorder %s292, %s306
      %p308 = scmp.eq.s32.totalorder %s30, 0
      %p309 = por %p307, %p308
      %s310 = ssub.s32 %s24, %s31
      %p311 = scmp.eq.s32.totalorder %s310, 0
      %s313 = sadd.s32 %s312, 1
      %s314 = scalar_select %p311, %s312, %s313
      %p317 = pneg %p311
      %p318 = scmp.eq.s32.totalorder %s24, 1
      %p319 = por %p317, %p318
      %p320 = scmp.ne.s32.totalorder %s312, %s315
      %p321 = scmp.eq.s32.totalorder %s24, 0
      %p322 = por %p320, %p321
      %p323 = scmp.ne.s32.totalorder %s312, %s315
      %p324 = scmp.eq.s32.totalorder %s29, 1
      %p325 = por %p323, %p324
      %p326 = scmp.ne.s32.totalorder %s315, %s316
      %p327 = scmp.eq.s32.totalorder %s29, 0
      %p328 = por %p326, %p327
      %p329 = scmp.ne.s32.totalorder %s315, %s316
      %p330 = scmp.eq.s32.totalorder %s30, 1
      %p331 = por %p329, %p330
      %p333 = scmp.ne.s32.totalorder %s316, %s332
      %p334 = scmp.eq.s32.totalorder %s30, 0
      %p335 = por %p333, %p334
      %p336 = scmp.le.s32.totalorder 1, %s24
      %p337 = scmp.lt.s32.totalorder %s24, 3
      %p338 = pnand %p336, %p337
      %p339 = pneg %p338
      // Predicated region
      $region9: #{tpu_custom_call.1} parent=5 // pred_check
        _
      $region10: #{tpu_custom_call.1} parent=5 // pred_check_branch
        %341 = sbr.rel (%p338) target = $region12
      $region11: #{tpu_custom_call.1} parent=5 // pred_region
        %s342 = ssub.s32 %s24, 1
        // Predicated region
        $region13: #{tpu_custom_call.1} parent=11 // pred_check
          %p343 = pneg %p71
        $region14: #{tpu_custom_call.1} parent=11 // pred_check_branch
          %345 = sbr.rel (%p343) target = $region16
        $region15: #{tpu_custom_call.1} parent=11 // pred_region
          %s347 = ssub.s32 18432, 18432
          %348 = vsyncadd [#allocation3], %s347
          %s349 = sshll.u32 [#allocation2], 4
          %s350 = int_to_ptr.vmem [resolvable:$true] %s349
          %355 = dma.hbm_to_vmem [thread:$0]  %s1, 18432, %s350, [#allocation3], 256, 256, 16
        $region16: #{tpu_custom_call.1} parent=11 // pred_fallthru
          _
        // Predicated region
        $region17: #{tpu_custom_call.1} parent=11 // pred_check
          %p356 = pneg %p92
        $region18: #{tpu_custom_call.1} parent=11 // pred_check_branch
          %358 = sbr.rel (%p356) target = $region20
        $region19: #{tpu_custom_call.1} parent=11 // pred_region
          _
        $region20: #{tpu_custom_call.1} parent=11 // pred_fallthru
          _
        // Predicated region
        $region21: #{tpu_custom_call.1} parent=11 // pred_check
          %p359 = pneg %p113
        $region22: #{tpu_custom_call.1} parent=11 // pred_check_branch
          %361 = sbr.rel (%p359) target = $region24
        $region23: #{tpu_custom_call.1} parent=11 // pred_region
          _
        $region24: #{tpu_custom_call.1} parent=11 // pred_fallthru
          _
        // Predicated region
        $region25: #{tpu_custom_call.1} parent=11 // pred_check
          %p362 = pneg %p134
        $region26: #{tpu_custom_call.1} parent=11 // pred_check_branch
          %364 = sbr.rel (%p362) target = $region28
        $region27: #{tpu_custom_call.1} parent=11 // pred_region
          _
        $region28: #{tpu_custom_call.1} parent=11 // pred_fallthru
          _
        // Predicated region
        $region29: #{tpu_custom_call.1} parent=11 // pred_check
          %p365 = pneg %p155
        $region30: #{tpu_custom_call.1} parent=11 // pred_check_branch
          %367 = sbr.rel (%p365) target = $region32
        $region31: #{tpu_custom_call.1} parent=11 // pred_region
          %s369 = ssub.s32 18432, 18432
          %370 = vsyncadd [#allocation6], %s369
          %s371 = sshll.u32 [#allocation5], 4
          %s372 = int_to_ptr.vmem [resolvable:$true] %s371
          %377 = dma.hbm_to_vmem [thread:$0]  %s5, 18432, %s372, [#allocation6], 128, 128, 8
        $region32: #{tpu_custom_call.1} parent=11 // pred_fallthru
          _
        // Predicated region
        $region33: #{tpu_custom_call.1} parent=11 // pred_check
          %p378 = pneg %p176
        $region34: #{tpu_custom_call.1} parent=11 // pred_check_branch
          %380 = sbr.rel (%p378) target = $region36
        $region35: #{tpu_custom_call.1} parent=11 // pred_region
          _
        $region36: #{tpu_custom_call.1} parent=11 // pred_fallthru
          _
        // Predicated region
        $region37: #{tpu_custom_call.1} parent=11 // pred_check
          %p381 = pneg %p197
        $region38: #{tpu_custom_call.1} parent=11 // pred_check_branch
          %383 = sbr.rel (%p381) target = $region40
        $region39: #{tpu_custom_call.1} parent=11 // pred_region
          %s385 = ssub.s32 32768, 32768
          %386 = vsyncadd [#allocation6], %s385
          %s387 = sshll.u32 [#allocation7], 4
          %s388 = int_to_ptr.vmem [resolvable:$true] %s387
          %393 = dma.hbm_to_vmem [thread:$0]  %s7, 32768, %s388, [#allocation6], 128, 128, 8
        $region40: #{tpu_custom_call.1} parent=11 // pred_fallthru
          _
        // Predicated region
        $region41: #{tpu_custom_call.1} parent=11 // pred_check
          %p394 = pneg %p218
        $region42: #{tpu_custom_call.1} parent=11 // pred_check_branch
          %396 = sbr.rel (%p394) target = $region44
        $region43: #{tpu_custom_call.1} parent=11 // pred_region
          _
        $region44: #{tpu_custom_call.1} parent=11 // pred_fallthru
          _
        // Predicated region
        $region45: #{tpu_custom_call.1} parent=11 // pred_check
          %p397 = pneg %p239
        $region46: #{tpu_custom_call.1} parent=11 // pred_check_branch
          %399 = sbr.rel (%p397) target = $region48
        $region47: #{tpu_custom_call.1} parent=11 // pred_region
          _
        $region48: #{tpu_custom_call.1} parent=11 // pred_fallthru
          _
        // Predicated region
        $region49: #{tpu_custom_call.1} parent=11 // pred_check
          %p400 = pneg %p260
        $region50: #{tpu_custom_call.1} parent=11 // pred_check_branch
          %402 = sbr.rel (%p400) target = $region52
        $region51: #{tpu_custom_call.1} parent=11 // pred_region
          _
        $region52: #{tpu_custom_call.1} parent=11 // pred_fallthru
          _
        // Predicated region
        $region53: #{tpu_custom_call.1} parent=11 // pred_check
          %p403 = pneg %p281
        $region54: #{tpu_custom_call.1} parent=11 // pred_check_branch
          %405 = sbr.rel (%p403) target = $region56
        $region55: #{tpu_custom_call.1} parent=11 // pred_region
          _
        $region56: #{tpu_custom_call.1} parent=11 // pred_fallthru
          _
        // Predicated region
        $region57: #{tpu_custom_call.1} parent=11 // pred_check
          %p406 = pneg %p302
        $region58: #{tpu_custom_call.1} parent=11 // pred_check_branch
          %408 = sbr.rel (%p406) target = $region60
        $region59: #{tpu_custom_call.1} parent=11 // pred_region
          _
        $region60: #{tpu_custom_call.1} parent=11 // pred_fallthru
          _
      $region12: #{tpu_custom_call.1} parent=5 // pred_fallthru
        _
      %p409 = scmp.lt.s32.totalorder %s24, 2
      // Predicated region
      $region61: #{tpu_custom_call.1} parent=5 // pred_check
        %p410 = pneg %p409
      $region62: #{tpu_custom_call.1} parent=5 // pred_check_branch
        %412 = sbr.rel (%p410) target = $region64
      $region63: #{tpu_custom_call.1} parent=5 // pred_region
        // Predicated region
        $region65: #{tpu_custom_call.1} parent=63 // pred_check
          %p413 = pneg %p44
        $region66: #{tpu_custom_call.1} parent=63 // pred_check_branch
          %415 = sbr.rel (%p413) target = $region68
        $region67: #{tpu_custom_call.1} parent=63 // pred_region
          %p416 = scmp.lt.s32.totalorder %s24, 1
          %s417 = scalar_select %p416, %s24, 1
          %s418 = smul.addr %s417, 32
          %s419 = smul.addr %s418, 8
          %s420 = scalar_lea.vmem %s0, %s419
        $region68: #{tpu_custom_call.1} parent=63 // pred_fallthru
          _
      $region64: #{tpu_custom_call.1} parent=5 // pred_fallthru
        _
      %p421 = scmp.le.s32.totalorder 1, %s24
      %p422 = scmp.lt.s32.totalorder %s24, 3
      %p423 = pnand %p421, %p422
      %p424 = pneg %p423
      // Predicated region
      $region69: #{tpu_custom_call.1} parent=5 // pred_check
        _
      $region70: #{tpu_custom_call.1} parent=5 // pred_check_branch
        %426 = sbr.rel (%p423) target = $region72
      $region71: #{tpu_custom_call.1} parent=5 // pred_region
        %s427 = ssub.s32 %s24, 1
        // Predicated region
        $region73: #{tpu_custom_call.1} parent=71 // pred_check
          %p428 = pneg %p71
        $region74: #{tpu_custom_call.1} parent=71 // pred_check_branch
          %430 = sbr.rel (%p428) target = $region76
        $region75: #{tpu_custom_call.1} parent=71 // pred_region
          %431 = dma.done [#allocation3], 18432
        $region76: #{tpu_custom_call.1} parent=71 // pred_fallthru
          _
        // Predicated region
        $region77: #{tpu_custom_call.1} parent=71 // pred_check
          %p432 = pneg %p155
        $region78: #{tpu_custom_call.1} parent=71 // pred_check_branch
          %434 = sbr.rel (%p432) target = $region80
        $region79: #{tpu_custom_call.1} parent=71 // pred_region
          %435 = dma.done [#allocation6], 18432
        $region80: #{tpu_custom_call.1} parent=71 // pred_fallthru
          _
        // Predicated region
        $region81: #{tpu_custom_call.1} parent=71 // pred_check
          %p436 = pneg %p197
        $region82: #{tpu_custom_call.1} parent=71 // pred_check_branch
          %438 = sbr.rel (%p436) target = $region84
        $region83: #{tpu_custom_call.1} parent=71 // pred_region
          %439 = dma.done [#allocation6], 32768
        $region84: #{tpu_custom_call.1} parent=71 // pred_fallthru
          _
        %p440 = scmp.lt.s32.totalorder %s29, 1
        %s441 = scalar_select %p440, %s29, 1
        %s442 = smul.addr %s441, 32
        %s443 = smul.addr %s442, 8
        %s444 = scalar_lea.vmem %s0, %s443
        %p445 = pneg %p50
        %p446 = pneg %p47
        %p447 = pneg %p71
        %p448 = pneg %p68
        %p449 = pneg %p92
        %p450 = pneg %p89
        %p451 = pneg %p113
        %p452 = pneg %p110
        %p453 = pneg %p134
        %p454 = pneg %p131
        %p455 = pneg %p155
        %p456 = pneg %p152
        %p457 = pneg %p176
        %p458 = pneg %p173
        %p459 = pneg %p197
        %p460 = pneg %p194
        %p461 = pneg %p218
        %p462 = pneg %p215
        %p463 = pneg %p239
        %p464 = pneg %p236
        %p465 = pneg %p260
        %p466 = pneg %p257
        %p467 = pneg %p281
        %p468 = pneg %p278
        %p469 = pneg %p302
        %p470 = pneg %p299
        %p471 = pneg %p328
        %p472 = pneg %p325
        %s473 = sand.u32 %s315, 1
        %s474 = scalar_lea.sflag [#allocation4], %s473
        %s475 = sand.u32 %s315, 1
        %s476 = scalar_lea.vmem [#allocation8], %s475
        %p477 = scmp.lt.s32.totalorder %s29, 1
        %s478 = scalar_select %p477, %s29, 1
        %s479 = smul.addr %s478, 32
        %s480 = smul.addr %s479, 8
        %s481 = scalar_lea.vmem %s0, %s480
        %v482 = vld [vmem:[%s481] sm:$0xff]
        %v483 = vld [vmem:[%s481 + $0x8] sm:$0xff]
        %v484 = vld [vmem:[%s481 + $0x10] sm:$0xff]
        %v485 = vld [vmem:[%s481 + $0x18] sm:$0xff]
        %v486 = vld [vmem:[%s481 + $0x20] sm:$0xff]
        %v487 = vld [vmem:[%s481 + $0x28] sm:$0xff]
        %v488 = vld [vmem:[%s481 + $0x30] sm:$0xff]
        %v489 = vld [vmem:[%s481 + $0x38] sm:$0xff]
        %v490 = vld [vmem:[%s481 + $0x40] sm:$0xff]
        %v491 = vld [vmem:[%s481 + $0x48] sm:$0xff]
        %v492 = vld [vmem:[%s481 + $0x50] sm:$0xff]
        %v493 = vld [vmem:[%s481 + $0x58] sm:$0xff]
        %v494 = vld [vmem:[%s481 + $0x60] sm:$0xff]
        %v495 = vld [vmem:[%s481 + $0x68] sm:$0xff]
        %v496 = vld [vmem:[%s481 + $0x70] sm:$0xff]
        %v497 = vld [vmem:[%s481 + $0x78] sm:$0xff]
        %v498 = vld [vmem:[%s481 + $0x80] sm:$0xff]
        %v499 = vld [vmem:[%s481 + $0x88] sm:$0xff]
        %v500 = vld [vmem:[%s481 + $0x90] sm:$0xff]
        %v501 = vld [vmem:[%s481 + $0x98] sm:$0xff]
        %v502 = vld [vmem:[%s481 + $0xa0] sm:$0xff]
        %v503 = vld [vmem:[%s481 + $0xa8] sm:$0xff]
        %v504 = vld [vmem:[%s481 + $0xb0] sm:$0xff]
        %v505 = vld [vmem:[%s481 + $0xb8] sm:$0xff]
        %v506 = vld [vmem:[%s481 + $0xc0] sm:$0xff]
        %v507 = vld [vmem:[%s481 + $0xc8] sm:$0xff]
        %v508 = vld [vmem:[%s481 + $0xd0] sm:$0xff]
        %v509 = vld [vmem:[%s481 + $0xd8] sm:$0xff]
        %v510 = vld [vmem:[%s481 + $0xe0] sm:$0xff]
        %v511 = vld [vmem:[%s481 + $0xe8] sm:$0xff]
        %v512 = vld [vmem:[%s481 + $0xf0] sm:$0xff]
        %v513 = vld [vmem:[%s481 + $0xf8] sm:$0xff]
        %v514 = vld [vmem:[#allocation2] sm:$0xff]
        %v515 = vld [vmem:[#allocation2 + $0x8] sm:$0xff]
        %v516 = vld [vmem:[#allocation2 + $0x10] sm:$0xff]
        %v517 = vld [vmem:[#allocation2 + $0x18] sm:$0xff]
        %v518 = vld [vmem:[#allocation2 + $0x20] sm:$0xff]
        %v519 = vld [vmem:[#allocation2 + $0x28] sm:$0xff]
        %v520 = vld [vmem:[#allocation2 + $0x30] sm:$0xff]
        %v521 = vld [vmem:[#allocation2 + $0x38] sm:$0xff]
        %v522 = vld [vmem:[#allocation2 + $0x40] sm:$0xff]
        %v523 = vld [vmem:[#allocation2 + $0x48] sm:$0xff]
        %v524 = vld [vmem:[#allocation2 + $0x50] sm:$0xff]
        %v525 = vld [vmem:[#allocation2 + $0x58] sm:$0xff]
        %v526 = vld [vmem:[#allocation2 + $0x60] sm:$0xff]
        %v527 = vld [vmem:[#allocation2 + $0x68] sm:$0xff]
        %v528 = vld [vmem:[#allocation2 + $0x70] sm:$0xff]
        %v529 = vld [vmem:[#allocation2 + $0x78] sm:$0xff]
        %v530 = vld [vmem:[#allocation2 + $0x80] sm:$0xff]
        %v531 = vld [vmem:[#allocation2 + $0x88] sm:$0xff]
        %v532 = vld [vmem:[#allocation2 + $0x90] sm:$0xff]
        %v533 = vld [vmem:[#allocation2 + $0x98] sm:$0xff]
        %v534 = vld [vmem:[#allocation2 + $0xa0] sm:$0xff]
        %v535 = vld [vmem:[#allocation2 + $0xa8] sm:$0xff]
        %v536 = vld [vmem:[#allocation2 + $0xb0] sm:$0xff]
        %v537 = vld [vmem:[#allocation2 + $0xb8] sm:$0xff]
        %v538 = vld [vmem:[#allocation2 + $0xc0] sm:$0xff]
        %v539 = vld [vmem:[#allocation2 + $0xc8] sm:$0xff]
        %v540 = vld [vmem:[#allocation2 + $0xd0] sm:$0xff]
        %v541 = vld [vmem:[#allocation2 + $0xd8] sm:$0xff]
        %v542 = vld [vmem:[#allocation2 + $0xe0] sm:$0xff]
        %v543 = vld [vmem:[#allocation2 + $0xe8] sm:$0xff]
        %v544 = vld [vmem:[#allocation2 + $0xf0] sm:$0xff]
        %v545 = vld [vmem:[#allocation2 + $0xf8] sm:$0xff]
        %v546 = vld [vmem:[#allocation2 + $0x100] sm:$0xff]
        %v547 = vld [vmem:[#allocation2 + $0x108] sm:$0xff]
        %v548 = vld [vmem:[#allocation2 + $0x110] sm:$0xff]
        %v549 = vld [vmem:[#allocation2 + $0x118] sm:$0xff]
        %v550 = vld [vmem:[#allocation2 + $0x120] sm:$0xff]
        %v551 = vld [vmem:[#allocation2 + $0x128] sm:$0xff]
        %v552 = vld [vmem:[#allocation2 + $0x130] sm:$0xff]
        %v553 = vld [vmem:[#allocation2 + $0x138] sm:$0xff]
        %v554 = vld [vmem:[#allocation2 + $0x140] sm:$0xff]
        %v555 = vld [vmem:[#allocation2 + $0x148] sm:$0xff]
        %v556 = vld [vmem:[#allocation2 + $0x150] sm:$0xff]
        %v557 = vld [vmem:[#allocation2 + $0x158] sm:$0xff]
        %v558 = vld [vmem:[#allocation2 + $0x160] sm:$0xff]
        %v559 = vld [vmem:[#allocation2 + $0x168] sm:$0xff]
        %v560 = vld [vmem:[#allocation2 + $0x170] sm:$0xff]
        %v561 = vld [vmem:[#allocation2 + $0x178] sm:$0xff]
        %v562 = vld [vmem:[#allocation2 + $0x180] sm:$0xff]
        %v563 = vld [vmem:[#allocation2 + $0x188] sm:$0xff]
        %v564 = vld [vmem:[#allocation2 + $0x190] sm:$0xff]
        %v565 = vld [vmem:[#allocation2 + $0x198] sm:$0xff]
        %v566 = vld [vmem:[#allocation2 + $0x1a0] sm:$0xff]
        %v567 = vld [vmem:[#allocation2 + $0x1a8] sm:$0xff]
        %v568 = vld [vmem:[#allocation2 + $0x1b0] sm:$0xff]
        %v569 = vld [vmem:[#allocation2 + $0x1b8] sm:$0xff]
        %v570 = vld [vmem:[#allocation2 + $0x1c0] sm:$0xff]
        %v571 = vld [vmem:[#allocation2 + $0x1c8] sm:$0xff]
        %v572 = vld [vmem:[#allocation2 + $0x1d0] sm:$0xff]
        %v573 = vld [vmem:[#allocation2 + $0x1d8] sm:$0xff]
        %v574 = vld [vmem:[#allocation2 + $0x1e0] sm:$0xff]
        %v575 = vld [vmem:[#allocation2 + $0x1e8] sm:$0xff]
        %v576 = vld [vmem:[#allocation2 + $0x1f0] sm:$0xff]
        %v577 = vld [vmem:[#allocation2 + $0x1f8] sm:$0xff]
        %v578 = vld [vmem:[#allocation2 + $0x200] sm:$0xff]
        %v579 = vld [vmem:[#allocation2 + $0x208] sm:$0xff]
        %v580 = vld [vmem:[#allocation2 + $0x210] sm:$0xff]
        %v581 = vld [vmem:[#allocation2 + $0x218] sm:$0xff]
        %v582 = vld [vmem:[#allocation2 + $0x220] sm:$0xff]
        %v583 = vld [vmem:[#allocation2 + $0x228] sm:$0xff]
        %v584 = vld [vmem:[#allocation2 + $0x230] sm:$0xff]
        %v585 = vld [vmem:[#allocation2 + $0x238] sm:$0xff]
        %v586 = vld [vmem:[#allocation2 + $0x240] sm:$0xff]
        %v587 = vld [vmem:[#allocation2 + $0x248] sm:$0xff]
        %v588 = vld [vmem:[#allocation2 + $0x250] sm:$0xff]
        %v589 = vld [vmem:[#allocation2 + $0x258] sm:$0xff]
        %v590 = vld [vmem:[#allocation2 + $0x260] sm:$0xff]
        %v591 = vld [vmem:[#allocation2 + $0x268] sm:$0xff]
        %v592 = vld [vmem:[#allocation2 + $0x270] sm:$0xff]
        %v593 = vld [vmem:[#allocation2 + $0x278] sm:$0xff]
        %v594 = vld [vmem:[#allocation2 + $0x280] sm:$0xff]
        %v595 = vld [vmem:[#allocation2 + $0x288] sm:$0xff]
        %v596 = vld [vmem:[#allocation2 + $0x290] sm:$0xff]
        %v597 = vld [vmem:[#allocation2 + $0x298] sm:$0xff]
        %v598 = vld [vmem:[#allocation2 + $0x2a0] sm:$0xff]
        %v599 = vld [vmem:[#allocation2 + $0x2a8] sm:$0xff]
        %v600 = vld [vmem:[#allocation2 + $0x2b0] sm:$0xff]
        %v601 = vld [vmem:[#allocation2 + $0x2b8] sm:$0xff]
        %v602 = vld [vmem:[#allocation2 + $0x2c0] sm:$0xff]
        %v603 = vld [vmem:[#allocation2 + $0x2c8] sm:$0xff]
        %v604 = vld [vmem:[#allocation2 + $0x2d0] sm:$0xff]
        %v605 = vld [vmem:[#allocation2 + $0x2d8] sm:$0xff]
        %v606 = vld [vmem:[#allocation2 + $0x2e0] sm:$0xff]
        %v607 = vld [vmem:[#allocation2 + $0x2e8] sm:$0xff]
        %v608 = vld [vmem:[#allocation2 + $0x2f0] sm:$0xff]
        %v609 = vld [vmem:[#allocation2 + $0x2f8] sm:$0xff]
        %v610 = vld [vmem:[#allocation2 + $0x300] sm:$0xff]
        %v611 = vld [vmem:[#allocation2 + $0x308] sm:$0xff]
        %v612 = vld [vmem:[#allocation2 + $0x310] sm:$0xff]
        %v613 = vld [vmem:[#allocation2 + $0x318] sm:$0xff]
        %v614 = vld [vmem:[#allocation2 + $0x320] sm:$0xff]
        %v615 = vld [vmem:[#allocation2 + $0x328] sm:$0xff]
        %v616 = vld [vmem:[#allocation2 + $0x330] sm:$0xff]
        %v617 = vld [vmem:[#allocation2 + $0x338] sm:$0xff]
        %v618 = vld [vmem:[#allocation2 + $0x340] sm:$0xff]
        %v619 = vld [vmem:[#allocation2 + $0x348] sm:$0xff]
        %v620 = vld [vmem:[#allocation2 + $0x350] sm:$0xff]
        %v621 = vld [vmem:[#allocation2 + $0x358] sm:$0xff]
        %v622 = vld [vmem:[#allocation2 + $0x360] sm:$0xff]
        %v623 = vld [vmem:[#allocation2 + $0x368] sm:$0xff]
        %v624 = vld [vmem:[#allocation2 + $0x370] sm:$0xff]
        %v625 = vld [vmem:[#allocation2 + $0x378] sm:$0xff]
        %v626 = vld [vmem:[#allocation2 + $0x380] sm:$0xff]
        %v627 = vld [vmem:[#allocation2 + $0x388] sm:$0xff]
        %v628 = vld [vmem:[#allocation2 + $0x390] sm:$0xff]
        %v629 = vld [vmem:[#allocation2 + $0x398] sm:$0xff]
        %v630 = vld [vmem:[#allocation2 + $0x3a0] sm:$0xff]
        %v631 = vld [vmem:[#allocation2 + $0x3a8] sm:$0xff]
        %v632 = vld [vmem:[#allocation2 + $0x3b0] sm:$0xff]
        %v633 = vld [vmem:[#allocation2 + $0x3b8] sm:$0xff]
        %v634 = vld [vmem:[#allocation2 + $0x3c0] sm:$0xff]
        %v635 = vld [vmem:[#allocation2 + $0x3c8] sm:$0xff]
        %v636 = vld [vmem:[#allocation2 + $0x3d0] sm:$0xff]
        %v637 = vld [vmem:[#allocation2 + $0x3d8] sm:$0xff]
        %v638 = vld [vmem:[#allocation2 + $0x3e0] sm:$0xff]
        %v639 = vld [vmem:[#allocation2 + $0x3e8] sm:$0xff]
        %v640 = vld [vmem:[#allocation2 + $0x3f0] sm:$0xff]
        %v641 = vld [vmem:[#allocation2 + $0x3f8] sm:$0xff]
        %v642 = vld [vmem:[#allocation2 + $0x400] sm:$0xff]
        %v643 = vld [vmem:[#allocation2 + $0x408] sm:$0xff]
        %v644 = vld [vmem:[#allocation2 + $0x410] sm:$0xff]
        %v645 = vld [vmem:[#allocation2 + $0x418] sm:$0xff]
        %v646 = vld [vmem:[#allocation2 + $0x420] sm:$0xff]
        %v647 = vld [vmem:[#allocation2 + $0x428] sm:$0xff]
        %v648 = vld [vmem:[#allocation2 + $0x430] sm:$0xff]
        %v649 = vld [vmem:[#allocation2 + $0x438] sm:$0xff]
        %v650 = vld [vmem:[#allocation2 + $0x440] sm:$0xff]
        %v651 = vld [vmem:[#allocation2 + $0x448] sm:$0xff]
        %v652 = vld [vmem:[#allocation2 + $0x450] sm:$0xff]
        %v653 = vld [vmem:[#allocation2 + $0x458] sm:$0xff]
        %v654 = vld [vmem:[#allocation2 + $0x460] sm:$0xff]
        %v655 = vld [vmem:[#allocation2 + $0x468] sm:$0xff]
        %v656 = vld [vmem:[#allocation2 + $0x470] sm:$0xff]
        %v657 = vld [vmem:[#allocation2 + $0x478] sm:$0xff]
        %658 = vmatprep.subr.mxu0 0.0
        %659 = vmatpush1.msra.mxu0 %v482
        %660 = vmatprep.subr.mxu0 0.0
        %661 = vmatpush1.msra.mxu0 %v483
        %662 = vmatprep.subr.mxu0 0.0
        %663 = vmatpush1.msra.mxu0 %v484
        %664 = vmatprep.subr.mxu0 0.0
        %665 = vmatpush1.msra.mxu0 %v485
        %666 = vmatprep.subr.mxu0 0.0
        %667 = vmatpush1.msra.mxu0 %v486
        %668 = vmatprep.subr.mxu0 0.0
        %669 = vmatpush1.msra.mxu0 %v487
        %670 = vmatprep.subr.mxu0 0.0
        %671 = vmatpush1.msra.mxu0 %v488
        %672 = vmatprep.subr.mxu0 0.0
        %673 = vmatpush1.msra.mxu0 %v489
        %674 = vmatprep.subr.mxu0 0.0
        %675 = vmatpush1.msra.mxu0 %v490
        %676 = vmatprep.subr.mxu0 0.0
        %677 = vmatpush1.msra.mxu0 %v491
        %678 = vmatprep.subr.mxu0 0.0
        %679 = vmatpush1.msra.mxu0 %v492
        %680 = vmatprep.subr.mxu0 0.0
        %681 = vmatpush1.msra.mxu0 %v493
        %682 = vmatprep.subr.mxu0 0.0
        %683 = vmatpush1.msra.mxu0 %v494
        %684 = vmatprep.subr.mxu0 0.0
        %685 = vmatpush1.msra.mxu0 %v495
        %686 = vmatprep.subr.mxu0 0.0
        %687 = vmatpush1.msra.mxu0 %v496
        %688 = vmatprep.subr.mxu0 0.0
        %689 = vmatpush1.msra.mxu0 %v497
        %690 = vmatprep.subr.mxu0 0.0
        %691 = vmatpush1.msra.mxu0 %v498
        %692 = vmatprep.subr.mxu0 0.0
        %693 = vmatpush1.msra.mxu0 %v499
        %694 = vmatprep.subr.mxu0 0.0
        %695 = vmatpush1.msra.mxu0 %v500
        %696 = vmatprep.subr.mxu0 0.0
        %697 = vmatpush1.msra.mxu0 %v501
        %698 = vmatprep.subr.mxu0 0.0
        %699 = vmatpush1.msra.mxu0 %v502
        %700 = vmatprep.subr.mxu0 0.0
        %701 = vmatpush1.msra.mxu0 %v503
        %702 = vmatprep.subr.mxu0 0.0
        %703 = vmatpush1.msra.mxu0 %v504
        %704 = vmatprep.subr.mxu0 0.0
        %705 = vmatpush1.msra.mxu0 %v505
        %706 = vmatprep.subr.mxu0 0.0
        %707 = vmatpush1.msra.mxu0 %v506
        %708 = vmatprep.subr.mxu0 0.0
        %709 = vmatpush1.msra.mxu0 %v507
        %710 = vmatprep.subr.mxu0 0.0
        %711 = vmatpush1.msra.mxu0 %v508
        %712 = vmatprep.subr.mxu0 0.0
        %713 = vmatpush1.msra.mxu0 %v509
        %714 = vmatprep.subr.mxu0 0.0
        %715 = vmatpush1.msra.mxu0 %v510
        %716 = vmatprep.subr.mxu0 0.0
        %717 = vmatpush1.msra.mxu0 %v511
        %718 = vmatprep.subr.mxu0 0.0
        %719 = vmatpush1.msra.mxu0 %v512
        %720 = vmatprep.subr.mxu0 0.0
        %721 = vmatpush1.msra.mxu0 %v513
        %722 = vmatprep.mubr.f32.mxu0 %v515
        %723 = vmatmul.mubr.f32.gmra.mrb[0].mxu0 %v514
        %v724 = vpop.f32.mrb[0].mxu0
        %v725 = vadd.f32 0.0, %v724
        %v726 = vpop.f32.mrb[0].mxu0
        %727 = vmatprep.mubr.f32.mxu0 %v517
        %728 = vmatmul.mubr.f32.gmra.mrb[0].mxu0 %v516
        %v729 = vpop.f32.mrb[0].mxu0
        %v730 = vadd.f32 0.0, %v729
        %v731 = vpop.f32.mrb[0].mxu0
        %732 = vmatprep.mubr.f32.mxu0 %v519
        %733 = vmatmul.mubr.f32.gmra.mrb[0].mxu0 %v518
        %v734 = vpop.f32.mrb[0].mxu0
        %v735 = vadd.f32 0.0, %v734
        %v736 = vpop.f32.mrb[0].mxu0
        %737 = vmatprep.mubr.f32.mxu0 %v521
        %738 = vmatmul.mubr.f32.gmra.mrb[0].mxu0 %v520
        %v739 = vpop.f32.mrb[0].mxu0
        %v740 = vadd.f32 0.0, %v739
        %v741 = vpop.f32.mrb[0].mxu0
        %742 = vmatprep.mubr.f32.mxu0 %v523
        %743 = vmatmul.mubr.f32.gmra.mrb[0].mxu0 %v522
        %v744 = vpop.f32.mrb[0].mxu0
        %v745 = vadd.f32 0.0, %v744
        %v746 = vpop.f32.mrb[0].mxu0
        %747 = vmatprep.mubr.f32.mxu0 %v525
        %748 = vmatmul.mubr.f32.gmra.mrb[0].mxu0 %v524
        %v749 = vpop.f32.mrb[0].mxu0
        %v750 = vadd.f32 0.0, %v749
        %v751 = vpop.f32.mrb[0].mxu0
        %752 = vmatprep.mubr.f32.mxu0 %v527
        %753 = vmatmul.mubr.f32.gmra.mrb[0].mxu0 %v526
        %v754 = vpop.f32.mrb[0].mxu0
        %v755 = vadd.f32 0.0, %v754
        %v756 = vpop.f32.mrb[0].mxu0
        %757 = vmatprep.mubr.f32.mxu0 %v529
        %758 = vmatmul.mubr.f32.gmra.mrb[0].mxu0 %v528
        %v759 = vpop.f32.mrb[0].mxu0
        %v760 = vadd.f32 0.0, %v759
        %v761 = vpop.f32.mrb[0].mxu0
        %762 = vmatprep.mubr.f32.mxu0 %v531
        %763 = vmatmul.mubr.f32.gmra.mrb[0].mxu0 %v530
        %v764 = vpop.f32.mrb[0].mxu0
        %v765 = vadd.f32 0.0, %v764
        %v766 = vpop.f32.mrb[0].mxu0
        %767 = vmatprep.mubr.f32.mxu0 %v533
        %768 = vmatmul.mubr.f32.gmra.mrb[0].mxu0 %v532
        %v769 = vpop.f32.mrb[0].mxu0
        %v770 = vadd.f32 0.0, %v769
        %v771 = vpop.f32.mrb[0].mxu0
        %772 = vmatprep.mubr.f32.mxu0 %v535
        %773 = vmatmul.mubr.f32.gmra.mrb[0].mxu0 %v534
        %v774 = vpop.f32.mrb[0].mxu0
        %v775 = vadd.f32 0.0, %v774
        %v776 = vpop.f32.mrb[0].mxu0
        %777 = vmatprep.mubr.f32.mxu0 %v537
        %778 = vmatmul.mubr.f32.gmra.mrb[0].mxu0 %v536
        %v779 = vpop.f32.mrb[0].mxu0
        %v780 = vadd.f32 0.0, %v779
        %v781 = vpop.f32.mrb[0].mxu0
        %782 = vmatprep.mubr.f32.mxu0 %v539
        %783 = vmatmul.mubr.f32.gmra.mrb[0].mxu0 %v538
        %v784 = vpop.f32.mrb[0].mxu0
        %v785 = vadd.f32 0.0, %v784
        %v786 = vpop.f32.mrb[0].mxu0
        %787 = vmatprep.mubr.f32.mxu0 %v541
        %788 = vmatmul.mubr.f32.gmra.mrb[0].mxu0 %v540
        %v789 = vpop.f32.mrb[0].mxu0
        %v790 = vadd.f32 0.0, %v789
        %v791 = vpop.f32.mrb[0].mxu0
        %792 = vmatprep.mubr.f32.mxu0 %v543
        %793 = vmatmul.mubr.f32.gmra.mrb[0].mxu0 %v542
        %v794 = vpop.f32.mrb[0].mxu0
        %v795 = vadd.f32 0.0, %v794
        %v796 = vpop.f32.mrb[0].mxu0
        %797 = vmatprep.mubr.f32.mxu0 %v545
        %798 = vmatmul.mubr.f32.gmra.mrb[0].mxu0 %v544
        %v799 = vpop.f32.mrb[0].mxu0
        %v800 = vadd.f32 0.0, %v799
        %v801 = vpop.f32.mrb[0].mxu0
        %802 = vmatprep.mubr.f32.mxu0 %v547
        %803 = vmatmul.mubr.f32.gmra.mrb[0].mxu0 %v546
        %v804 = vpop.f32.mrb[0].mxu0
        %v805 = vadd.f32 0.0, %v804
        %v806 = vpop.f32.mrb[0].mxu0
        %807 = vmatprep.mubr.f32.mxu0 %v549
        %808 = vmatmul.mubr.f32.gmra.mrb[0].mxu0 %v548
        %v809 = vpop.f32.mrb[0].mxu0
        %v810 = vadd.f32 0.0, %v809
        %v811 = vpop.f32.mrb[0].mxu0
        %812 = vmatprep.mubr.f32.mxu0 %v551
        %813 = vmatmul.mubr.f32.gmra.mrb[0].mxu0 %v550
        %v814 = vpop.f32.mrb[0].mxu0
        %v815 = vadd.f32 0.0, %v814
        %v816 = vpop.f32.mrb[0].mxu0
        %817 = vmatprep.mubr.f32.mxu0 %v553
        %818 = vmatmul.mubr.f32.gmra.mrb[0].mxu0 %v552
        %v819 = vpop.f32.mrb[0].mxu0
        %v820 = vadd.f32 0.0, %v819
        %v821 = vpop.f32.mrb[0].mxu0
        %822 = vmatprep.mubr.f32.mxu0 %v555
        %823 = vmatmul.mubr.f32.gmra.mrb[0].mxu0 %v554
        %v824 = vpop.f32.mrb[0].mxu0
        %v825 = vadd.f32 0.0, %v824
        %v826 = vpop.f32.mrb[0].mxu0
        %827 = vmatprep.mubr.f32.mxu0 %v557
        %828 = vmatmul.mubr.f32.gmra.mrb[0].mxu0 %v556
        %v829 = vpop.f32.mrb[0].mxu0
        %v830 = vadd.f32 0.0, %v829
        %v831 = vpop.f32.mrb[0].mxu0
        %832 = vmatprep.mubr.f32.mxu0 %v559
        %833 = vmatmul.mubr.f32.gmra.mrb[0].mxu0 %v558
        %v834 = vpop.f32.mrb[0].mxu0
        %v835 = vadd.f32 0.0, %v834
        %v836 = vpop.f32.mrb[0].mxu0
        %837 = vmatprep.mubr.f32.mxu0 %v561
        %838 = vmatmul.mubr.f32.gmra.mrb[0].mxu0 %v560
        %v839 = vpop.f32.mrb[0].mxu0
        %v840 = vadd.f32 0.0, %v839
        %v841 = vpop.f32.mrb[0].mxu0
        %842 = vmatprep.mubr.f32.mxu0 %v563
        %843 = vmatmul.mubr.f32.gmra.mrb[0].mxu0 %v562
        %v844 = vpop.f32.mrb[0].mxu0
        %v845 = vadd.f32 0.0, %v844
        %v846 = vpop.f32.mrb[0].mxu0
        %847 = vmatprep.mubr.f32.mxu0 %v565
        %848 = vmatmul.mubr.f32.gmra.mrb[0].mxu0 %v564
        %v849 = vpop.f32.mrb[0].mxu0
        %v850 = vadd.f32 0.0, %v849
        %v851 = vpop.f32.mrb[0].mxu0
        %852 = vmatprep.mubr.f32.mxu0 %v567
        %853 = vmatmul.mubr.f32.gmra.mrb[0].mxu0 %v566
        %v854 = vpop.f32.mrb[0].mxu0
        %v855 = vadd.f32 0.0, %v854
        %v856 = vpop.f32.mrb[0].mxu0
        %857 = vmatprep.mubr.f32.mxu0 %v569
        %858 = vmatmul.mubr.f32.gmra.mrb[0].mxu0 %v568
        %v859 = vpop.f32.mrb[0].mxu0
        %v860 = vadd.f32 0.0, %v859
        %v861 = vpop.f32.mrb[0].mxu0
        %862 = vmatprep.mubr.f32.mxu0 %v571
        %863 = vmatmul.mubr.f32.gmra.mrb[0].mxu0 %v570
        %v864 = vpop.f32.mrb[0].mxu0
        %v865 = vadd.f32 0.0, %v864
        %v866 = vpop.f32.mrb[0].mxu0
        %867 = vmatprep.mubr.f32.mxu0 %v573
        %868 = vmatmul.mubr.f32.gmra.mrb[0].mxu0 %v572
        %v869 = vpop.f32.mrb[0].mxu0
        %v870 = vadd.f32 0.0, %v869
        %v871 = vpop.f32.mrb[0].mxu0
        %872 = vmatprep.mubr.f32.mxu0 %v575
        %873 = vmatmul.mubr.f32.gmra.mrb[0].mxu0 %v574
        %v874 = vpop.f32.mrb[0].mxu0
        %v875 = vadd.f32 0.0, %v874
        %v876 = vpop.f32.mrb[0].mxu0
        %877 = vmatprep.mubr.f32.mxu0 %v577
        %878 = vmatmul.mubr.f32.gmra.mrb[0].mxu0 %v576
        %v879 = vpop.f32.mrb[0].mxu0
        %v880 = vadd.f32 0.0, %v879
        %v881 = vpop.f32.mrb[0].mxu0
        %882 = vmatprep.mubr.f32.mxu0 %v579
        %883 = vmatmul.mubr.f32.gmra.mrb[0].mxu0 %v578
        %v884 = vpop.f32.mrb[0].mxu0
        %v885 = vadd.f32 0.0, %v884
        %v886 = vpop.f32.mrb[0].mxu0
        %887 = vmatprep.mubr.f32.mxu0 %v581
        %888 = vmatmul.mubr.f32.gmra.mrb[0].mxu0 %v580
        %v889 = vpop.f32.mrb[0].mxu0
        %v890 = vadd.f32 0.0, %v889
        %v891 = vpop.f32.mrb[0].mxu0
        %892 = vmatprep.mubr.f32.mxu0 %v583
        %893 = vmatmul.mubr.f32.gmra.mrb[0].mxu0 %v582
        %v894 = vpop.f32.mrb[0].mxu0
        %v895 = vadd.f32 0.0, %v894
        %v896 = vpop.f32.mrb[0].mxu0
        %897 = vmatprep.mubr.f32.mxu0 %v585
        %898 = vmatmul.mubr.f32.gmra.mrb[0].mxu0 %v584
        %v899 = vpop.f32.mrb[0].mxu0
        %v900 = vadd.f32 0.0, %v899
        %v901 = vpop.f32.mrb[0].mxu0
        %902 = vmatprep.mubr.f32.mxu0 %v587
        %903 = vmatmul.mubr.f32.gmra.mrb[0].mxu0 %v586
        %v904 = vpop.f32.mrb[0].mxu0
        %v905 = vadd.f32 0.0, %v904
        %v906 = vpop.f32.mrb[0].mxu0
        %907 = vmatprep.mubr.f32.mxu0 %v589
        %908 = vmatmul.mubr.f32.gmra.mrb[0].mxu0 %v588
        %v909 = vpop.f32.mrb[0].mxu0
        %v910 = vadd.f32 0.0, %v909
        %v911 = vpop.f32.mrb[0].mxu0
        %912 = vmatprep.mubr.f32.mxu0 %v591
        %913 = vmatmul.mubr.f32.gmra.mrb[0].mxu0 %v590
        %v914 = vpop.f32.mrb[0].mxu0
        %v915 = vadd.f32 0.0, %v914
        %v916 = vpop.f32.mrb[0].mxu0
        %917 = vmatprep.mubr.f32.mxu0 %v593
        %918 = vmatmul.mubr.f32.gmra.mrb[0].mxu0 %v592
        %v919 = vpop.f32.mrb[0].mxu0
        %v920 = vadd.f32 0.0, %v919
        %v921 = vpop.f32.mrb[0].mxu0
        %922 = vmatprep.mubr.f32.mxu0 %v595
        %923 = vmatmul.mubr.f32.gmra.mrb[0].mxu0 %v594
        %v924 = vpop.f32.mrb[0].mxu0
        %v925 = vadd.f32 0.0, %v924
        %v926 = vpop.f32.mrb[0].mxu0
        %927 = vmatprep.mubr.f32.mxu0 %v597
        %928 = vmatmul.mubr.f32.gmra.mrb[0].mxu0 %v596
        %v929 = vpop.f32.mrb[0].mxu0
        %v930 = vadd.f32 0.0, %v929
        %v931 = vpop.f32.mrb[0].mxu0
        %932 = vmatprep.mubr.f32.mxu0 %v599
        %933 = vmatmul.mubr.f32.gmra.mrb[0].mxu0 %v598
        %v934 = vpop.f32.mrb[0].mxu0
        %v935 = vadd.f32 0.0, %v934
        %v936 = vpop.f32.mrb[0].mxu0
        %937 = vmatprep.mubr.f32.mxu0 %v601
        %938 = vmatmul.mubr.f32.gmra.mrb[0].mxu0 %v600
        %v939 = vpop.f32.mrb[0].mxu0
        %v940 = vadd.f32 0.0, %v939
        %v941 = vpop.f32.mrb[0].mxu0
        %942 = vmatprep.mubr.f32.mxu0 %v603
        %943 = vmatmul.mubr.f32.gmra.mrb[0].mxu0 %v602
        %v944 = vpop.f32.mrb[0].mxu0
        %v945 = vadd.f32 0.0, %v944
        %v946 = vpop.f32.mrb[0].mxu0
        %947 = vmatprep.mubr.f32.mxu0 %v605
        %948 = vmatmul.mubr.f32.gmra.mrb[0].mxu0 %v604
        %v949 = vpop.f32.mrb[0].mxu0
        %v950 = vadd.f32 0.0, %v949
        %v951 = vpop.f32.mrb[0].mxu0
        %952 = vmatprep.mubr.f32.mxu0 %v607
        %953 = vmatmul.mubr.f32.gmra.mrb[0].mxu0 %v606
        %v954 = vpop.f32.mrb[0].mxu0
        %v955 = vadd.f32 0.0, %v954
        %v956 = vpop.f32.mrb[0].mxu0
        %957 = vmatprep.mubr.f32.mxu0 %v609
        %958 = vmatmul.mubr.f32.gmra.mrb[0].mxu0 %v608
        %v959 = vpop.f32.mrb[0].mxu0
        %v960 = vadd.f32 0.0, %v959
        %v961 = vpop.f32.mrb[0].mxu0
        %962 = vmatprep.mubr.f32.mxu0 %v611
        %963 = vmatmul.mubr.f32.gmra.mrb[0].mxu0 %v610
        %v964 = vpop.f32.mrb[0].mxu0
        %v965 = vadd.f32 0.0, %v964
        %v966 = vpop.f32.mrb[0].mxu0
        %967 = vmatprep.mubr.f32.mxu0 %v613
        %968 = vmatmul.mubr.f32.gmra.mrb[0].mxu0 %v612
        %v969 = vpop.f32.mrb[0].mxu0
        %v970 = vadd.f32 0.0, %v969
        %v971 = vpop.f32.mrb[0].mxu0
        %972 = vmatprep.mubr.f32.mxu0 %v615
        %973 = vmatmul.mubr.f32.gmra.mrb[0].mxu0 %v614
        %v974 = vpop.f32.mrb[0].mxu0
        %v975 = vadd.f32 0.0, %v974
        %v976 = vpop.f32.mrb[0].mxu0
        %977 = vmatprep.mubr.f32.mxu0 %v617
        %978 = vmatmul.mubr.f32.gmra.mrb[0].mxu0 %v616
        %v979 = vpop.f32.mrb[0].mxu0
        %v980 = vadd.f32 0.0, %v979
        %v981 = vpop.f32.mrb[0].mxu0
        %982 = vmatprep.mubr.f32.mxu0 %v619
        %983 = vmatmul.mubr.f32.gmra.mrb[0].mxu0 %v618
        %v984 = vpop.f32.mrb[0].mxu0
        %v985 = vadd.f32 0.0, %v984
        %v986 = vpop.f32.mrb[0].mxu0
        %987 = vmatprep.mubr.f32.mxu0 %v621
        %988 = vmatmul.mubr.f32.gmra.mrb[0].mxu0 %v620
        %v989 = vpop.f32.mrb[0].mxu0
        %v990 = vadd.f32 0.0, %v989
        %v991 = vpop.f32.mrb[0].mxu0
        %992 = vmatprep.mubr.f32.mxu0 %v623
        %993 = vmatmul.mubr.f32.gmra.mrb[0].mxu0 %v622
        %v994 = vpop.f32.mrb[0].mxu0
        %v995 = vadd.f32 0.0, %v994
        %v996 = vpop.f32.mrb[0].mxu0
        %997 = vmatprep.mubr.f32.mxu0 %v625
        %998 = vmatmul.mubr.f32.gmra.mrb[0].mxu0 %v624
        %v999 = vpop.f32.mrb[0].mxu0
        %v1000 = vadd.f32 0.0, %v999
        %v1001 = vpop.f32.mrb[0].mxu0
        %1002 = vmatprep.mubr.f32.mxu0 %v627
        %1003 = vmatmul.mubr.f32.gmra.mrb[0].mxu0 %v626
        %v1004 = vpop.f32.mrb[0].mxu0
        %v1005 = vadd.f32 0.0, %v1004
        %v1006 = vpop.f32.mrb[0].mxu0
        %1007 = vmatprep.mubr.f32.mxu0 %v629
        %1008 = vmatmul.mubr.f32.gmra.mrb[0].mxu0 %v628
        %v1009 = vpop.f32.mrb[0].mxu0
        %v1010 = vadd.f32 0.0, %v1009
        %v1011 = vpop.f32.mrb[0].mxu0
        %1012 = vmatprep.mubr.f32.mxu0 %v631
        %1013 = vmatmul.mubr.f32.gmra.mrb[0].mxu0 %v630
        %v1014 = vpop.f32.mrb[0].mxu0
        %v1015 = vadd.f32 0.0, %v1014
        %v1016 = vpop.f32.mrb[0].mxu0
        %1017 = vmatprep.mubr.f32.mxu0 %v633
        %1018 = vmatmul.mubr.f32.gmra.mrb[0].mxu0 %v632
        %v1019 = vpop.f32.mrb[0].mxu0
        %v1020 = vadd.f32 0.0, %v1019
        %v1021 = vpop.f32.mrb[0].mxu0
        %1022 = vmatprep.mubr.f32.mxu0 %v635
        %1023 = vmatmul.mubr.f32.gmra.mrb[0].mxu0 %v634
        %v1024 = vpop.f32.mrb[0].mxu0
        %v1025 = vadd.f32 0.0, %v1024
        %v1026 = vpop.f32.mrb[0].mxu0
        %1027 = vmatprep.mubr.f32.mxu0 %v637
        %1028 = vmatmul.mubr.f32.gmra.mrb[0].mxu0 %v636
        %v1029 = vpop.f32.mrb[0].mxu0
        %v1030 = vadd.f32 0.0, %v1029
        %v1031 = vpop.f32.mrb[0].mxu0
        %1032 = vmatprep.mubr.f32.mxu0 %v639
        %1033 = vmatmul.mubr.f32.gmra.mrb[0].mxu0 %v638
        %v1034 = vpop.f32.mrb[0].mxu0
        %v1035 = vadd.f32 0.0, %v1034
        %v1036 = vpop.f32.mrb[0].mxu0
        %1037 = vmatprep.mubr.f32.mxu0 %v641
        %1038 = vmatmul.mubr.f32.gmra.mrb[0].mxu0 %v640
        %v1039 = vpop.f32.mrb[0].mxu0
        %v1040 = vadd.f32 0.0, %v1039
        %v1041 = vpop.f32.mrb[0].mxu0
        %1042 = vmatprep.mubr.f32.mxu0 %v643
        %1043 = vmatmul.mubr.f32.gmra.mrb[0].mxu0 %v642
        %v1044 = vpop.f32.mrb[0].mxu0
        %v1045 = vadd.f32 0.0, %v1044
        %v1046 = vpop.f32.mrb[0].mxu0
        %1047 = vmatprep.mubr.f32.mxu0 %v645
        %1048 = vmatmul.mubr.f32.gmra.mrb[0].mxu0 %v644
        %v1049 = vpop.f32.mrb[0].mxu0
        %v1050 = vadd.f32 0.0, %v1049
        %v1051 = vpop.f32.mrb[0].mxu0
        %1052 = vmatprep.mubr.f32.mxu0 %v647
        %1053 = vmatmul.mubr.f32.gmra.mrb[0].mxu0 %v646
        %v1054 = vpop.f32.mrb[0].mxu0
        %v1055 = vadd.f32 0.0, %v1054
        %v1056 = vpop.f32.mrb[0].mxu0
        %1057 = vmatprep.mubr.f32.mxu0 %v649
        %1058 = vmatmul.mubr.f32.gmra.mrb[0].mxu0 %v648
        %v1059 = vpop.f32.mrb[0].mxu0
        %v1060 = vadd.f32 0.0, %v1059
        %v1061 = vpop.f32.mrb[0].mxu0
        %1062 = vmatprep.mubr.f32.mxu0 %v651
        %1063 = vmatmul.mubr.f32.gmra.mrb[0].mxu0 %v650
        %v1064 = vpop.f32.mrb[0].mxu0
        %v1065 = vadd.f32 0.0, %v1064
        %v1066 = vpop.f32.mrb[0].mxu0
        %1067 = vmatprep.mubr.f32.mxu0 %v653
        %1068 = vmatmul.mubr.f32.gmra.mrb[0].mxu0 %v652
        %v1069 = vpop.f32.mrb[0].mxu0
        %v1070 = vadd.f32 0.0, %v1069
        %v1071 = vpop.f32.mrb[0].mxu0
        %1072 = vmatprep.mubr.f32.mxu0 %v655
        %1073 = vmatmul.mubr.f32.gmra.mrb[0].mxu0 %v654
        %v1074 = vpop.f32.mrb[0].mxu0
        %v1075 = vadd.f32 0.0, %v1074
        %v1076 = vpop.f32.mrb[0].mxu0
        %1077 = vmatprep.mubr.f32.mxu0 %v657
        %1078 = vmatmul.mubr.f32.gmra.mrb[0].mxu0 %v656
        %v1079 = vpop.f32.mrb[0].mxu0
        %v1080 = vadd.f32 0.0, %v1079
        %v1081 = vpop.f32.mrb[0].mxu0
        %1082 = vdwg.mxu0
        %v1083 = vld [vmem:[%s2] sm:$0xf]
        %s1084 = scalar_lea.vmem %s2, 4
        %v1085 = vld [vmem:[%s1084] sm:$0xf]
        %vm1086 = vcmask 31744
        %v1088 = vsel %vm1086, %v765, 0
        %v1091 = vsel %vm1086, %v770, 0
        %v1094 = vsel %vm1086, %v775, 0
        %v1097 = vsel %vm1086, %v780, 0
        %v1100 = vsel %vm1086, %v785, 0
        %v1103 = vsel %vm1086, %v790, 0
        %v1106 = vsel %vm1086, %v795, 0
        %v1109 = vsel %vm1086, %v800, 0
        %vm1111 = vcmask 1043456
        %v1113 = vsel %vm1111, %v1085, 0
        %1115 = vmatprep.subr.mxu0 0.0
        %1116 = vmatpush1.msra.mxu0 %v1113
        %1117 = vmatprep.subr.mxu0 0.0
        %1118 = vmatpush1.msra.mxu0 0.0
        %1119 = vmatprep.subr.mxu0 0.0
        %1120 = vmatpush1.msra.mxu0 0.0
        %1121 = vmatprep.subr.mxu0 0.0
        %1122 = vmatpush1.msra.mxu0 0.0
        %1123 = vmatprep.subr.mxu0 0.0
        %1124 = vmatpush1.msra.mxu0 0.0
        %1125 = vmatprep.subr.mxu0 0.0
        %1126 = vmatpush1.msra.mxu0 0.0
        %1127 = vmatprep.subr.mxu0 0.0
        %1128 = vmatpush1.msra.mxu0 0.0
        %1129 = vmatprep.subr.mxu0 0.0
        %1130 = vmatpush1.msra.mxu0 0.0
        %1131 = vmatprep.subr.mxu0 0.0
        %1132 = vmatpush1.msra.mxu0 0.0
        %1133 = vmatprep.subr.mxu0 0.0
        %1134 = vmatpush1.msra.mxu0 0.0
        %1135 = vmatprep.subr.mxu0 0.0
        %1136 = vmatpush1.msra.mxu0 0.0
        %1137 = vmatprep.subr.mxu0 0.0
        %1138 = vmatpush1.msra.mxu0 0.0
        %1139 = vmatprep.subr.mxu0 0.0
        %1140 = vmatpush1.msra.mxu0 0.0
        %1141 = vmatprep.subr.mxu0 0.0
        %1142 = vmatpush1.msra.mxu0 0.0
        %1143 = vmatprep.subr.mxu0 0.0
        %1144 = vmatpush1.msra.mxu0 0.0
        %1145 = vmatprep.subr.mxu0 0.0
        %1146 = vmatpush1.msra.mxu0 0.0
        %1147 = vmatprep.subr.mxu0 0.0
        %1148 = vmatpush1.msra.mxu0 0.0
        %1149 = vmatprep.subr.mxu0 0.0
        %1150 = vmatpush1.msra.mxu0 0.0
        %1151 = vmatprep.subr.mxu0 0.0
        %1152 = vmatpush1.msra.mxu0 0.0
        %1153 = vmatprep.subr.mxu0 0.0
        %1154 = vmatpush1.msra.mxu0 0.0
        %1155 = vmatprep.subr.mxu0 0.0
        %1156 = vmatpush1.msra.mxu0 0.0
        %1157 = vmatprep.subr.mxu0 0.0
        %1158 = vmatpush1.msra.mxu0 0.0
        %1159 = vmatprep.subr.mxu0 0.0
        %1160 = vmatpush1.msra.mxu0 0.0
        %1161 = vmatprep.subr.mxu0 0.0
        %1162 = vmatpush1.msra.mxu0 0.0
        %1163 = vmatprep.subr.mxu0 0.0
        %1164 = vmatpush1.msra.mxu0 0.0
        %1165 = vmatprep.subr.mxu0 0.0
        %1166 = vmatpush1.msra.mxu0 0.0
        %1167 = vmatprep.subr.mxu0 0.0
        %1168 = vmatpush1.msra.mxu0 0.0
        %1169 = vmatprep.subr.mxu0 0.0
        %1170 = vmatpush1.msra.mxu0 0.0
        %1171 = vmatprep.subr.mxu0 0.0
        %1172 = vmatpush1.msra.mxu0 0.0
        %1173 = vmatprep.subr.mxu0 0.0
        %1174 = vmatpush1.msra.mxu0 0.0
        %1175 = vmatprep.subr.mxu0 0.0
        %1176 = vmatpush1.msra.mxu0 0.0
        %1177 = vmatprep.subr.mxu0 0.0
        %1178 = vmatpush1.msra.mxu0 0.0
        %1179 = vmatprep.mubr.f32.mxu0 0.0
        %1180 = vmatmul.mubr.f32.gmra.mrb[0].mxu0 %v1088
        %v1181 = vpop.f32.mrb[0].mxu0
        %v1182 = vadd.f32 0.0, %v1181
        %v1183 = vpop.f32.mrb[0].mxu0
        %1184 = vmatprep.mubr.f32.mxu0 0.0
        %1185 = vmatmul.mubr.f32.gmra.mrb[0].mxu0 %v1091
        %v1186 = vpop.f32.mrb[0].mxu0
        %v1187 = vadd.f32 0.0, %v1186
        %v1188 = vpop.f32.mrb[0].mxu0
        %1189 = vmatprep.mubr.f32.mxu0 0.0
        %1190 = vmatmul.mubr.f32.gmra.mrb[0].mxu0 %v1094
        %v1191 = vpop.f32.mrb[0].mxu0
        %v1192 = vadd.f32 0.0, %v1191
        %v1193 = vpop.f32.mrb[0].mxu0
        %1194 = vmatprep.mubr.f32.mxu0 0.0
        %1195 = vmatmul.mubr.f32.gmra.mrb[0].mxu0 %v1097
        %v1196 = vpop.f32.mrb[0].mxu0
        %v1197 = vadd.f32 0.0, %v1196
        %v1198 = vpop.f32.mrb[0].mxu0
        %1199 = vmatprep.mubr.f32.mxu0 0.0
        %1200 = vmatmul.mubr.f32.gmra.mrb[0].mxu0 %v1100
        %v1201 = vpop.f32.mrb[0].mxu0
        %v1202 = vadd.f32 0.0, %v1201
        %v1203 = vpop.f32.mrb[0].mxu0
        %1204 = vmatprep.mubr.f32.mxu0 0.0
        %1205 = vmatmul.mubr.f32.gmra.mrb[0].mxu0 %v1103
        %v1206 = vpop.f32.mrb[0].mxu0
        %v1207 = vadd.f32 0.0, %v1206
        %v1208 = vpop.f32.mrb[0].mxu0
        %1209 = vmatprep.mubr.f32.mxu0 0.0
        %1210 = vmatmul.mubr.f32.gmra.mrb[0].mxu0 %v1106
        %v1211 = vpop.f32.mrb[0].mxu0
        %v1212 = vadd.f32 0.0, %v1211
        %v1213 = vpop.f32.mrb[0].mxu0
        %1214 = vmatprep.mubr.f32.mxu0 0.0
        %1215 = vmatmul.mubr.f32.gmra.mrb[0].mxu0 %v1109
        %v1216 = vpop.f32.mrb[0].mxu0
        %v1217 = vadd.f32 0.0, %v1216
        %v1218 = vpop.f32.mrb[0].mxu0
        %1219 = vdwg.mxu0
        %v1221 = vsel %vm1086, %v725, 0
        %v1224 = vsel %vm1086, %v730, 0
        %v1227 = vsel %vm1086, %v735, 0
        %v1230 = vsel %vm1086, %v740, 0
        %v1233 = vsel %vm1086, %v745, 0
        %v1236 = vsel %vm1086, %v750, 0
        %v1239 = vsel %vm1086, %v755, 0
        %v1242 = vsel %vm1086, %v760, 0
        %v1245 = vsel %vm1111, %v1083, 0
        %1247 = vmatprep.subr.mxu0 0.0
        %1248 = vmatpush1.msra.mxu0 %v1245
        %1249 = vmatprep.subr.mxu0 0.0
        %1250 = vmatpush1.msra.mxu0 0.0
        %1251 = vmatprep.subr.mxu0 0.0
        %1252 = vmatpush1.msra.mxu0 0.0
        %1253 = vmatprep.subr.mxu0 0.0
        %1254 = vmatpush1.msra.mxu0 0.0
        %1255 = vmatprep.subr.mxu0 0.0
        %1256 = vmatpush1.msra.mxu0 0.0
        %1257 = vmatprep.subr.mxu0 0.0
        %1258 = vmatpush1.msra.mxu0 0.0
        %1259 = vmatprep.subr.mxu0 0.0
        %1260 = vmatpush1.msra.mxu0 0.0
        %1261 = vmatprep.subr.mxu0 0.0
        %1262 = vmatpush1.msra.mxu0 0.0
        %1263 = vmatprep.subr.mxu0 0.0
        %1264 = vmatpush1.msra.mxu0 0.0
        %1265 = vmatprep.subr.mxu0 0.0
        %1266 = vmatpush1.msra.mxu0 0.0
        %1267 = vmatprep.subr.mxu0 0.0
        %1268 = vmatpush1.msra.mxu0 0.0
        %1269 = vmatprep.subr.mxu0 0.0
        %1270 = vmatpush1.msra.mxu0 0.0
        %1271 = vmatprep.subr.mxu0 0.0
        %1272 = vmatpush1.msra.mxu0 0.0
        %1273 = vmatprep.subr.mxu0 0.0
        %1274 = vmatpush1.msra.mxu0 0.0
        %1275 = vmatprep.subr.mxu0 0.0
        %1276 = vmatpush1.msra.mxu0 0.0
        %1277 = vmatprep.subr.mxu0 0.0
        %1278 = vmatpush1.msra.mxu0 0.0
        %1279 = vmatprep.subr.mxu0 0.0
        %1280 = vmatpush1.msra.mxu0 0.0
        %1281 = vmatprep.subr.mxu0 0.0
        %1282 = vmatpush1.msra.mxu0 0.0
        %1283 = vmatprep.subr.mxu0 0.0
        %1284 = vmatpush1.msra.mxu0 0.0
        %1285 = vmatprep.subr.mxu0 0.0
        %1286 = vmatpush1.msra.mxu0 0.0
        %1287 = vmatprep.subr.mxu0 0.0
        %1288 = vmatpush1.msra.mxu0 0.0
        %1289 = vmatprep.subr.mxu0 0.0
        %1290 = vmatpush1.msra.mxu0 0.0
        %1291 = vmatprep.subr.mxu0 0.0
        %1292 = vmatpush1.msra.mxu0 0.0
        %1293 = vmatprep.subr.mxu0 0.0
        %1294 = vmatpush1.msra.mxu0 0.0
        %1295 = vmatprep.subr.mxu0 0.0
        %1296 = vmatpush1.msra.mxu0 0.0
        %1297 = vmatprep.subr.mxu0 0.0
        %1298 = vmatpush1.msra.mxu0 0.0
        %1299 = vmatprep.subr.mxu0 0.0
        %1300 = vmatpush1.msra.mxu0 0.0
        %1301 = vmatprep.subr.mxu0 0.0
        %1302 = vmatpush1.msra.mxu0 0.0
        %1303 = vmatprep.subr.mxu0 0.0
        %1304 = vmatpush1.msra.mxu0 0.0
        %1305 = vmatprep.subr.mxu0 0.0
        %1306 = vmatpush1.msra.mxu0 0.0
        %1307 = vmatprep.subr.mxu0 0.0
        %1308 = vmatpush1.msra.mxu0 0.0
        %1309 = vmatprep.subr.mxu0 0.0
        %1310 = vmatpush1.msra.mxu0 0.0
        %1311 = vmatprep.mubr.f32.mxu0 0.0
        %1312 = vmatmul.mubr.f32.gmra.mrb[0].mxu0 %v1221
        %v1313 = vpop.f32.mrb[0].mxu0
        %v1314 = vadd.f32 %v1182, %v1313
        %v1315 = vpop.f32.mrb[0].mxu0
        %1316 = vmatprep.mubr.f32.mxu0 0.0
        %1317 = vmatmul.mubr.f32.gmra.mrb[0].mxu0 %v1224
        %v1318 = vpop.f32.mrb[0].mxu0
        %v1319 = vadd.f32 %v1187, %v1318
        %v1320 = vpop.f32.mrb[0].mxu0
        %1321 = vmatprep.mubr.f32.mxu0 0.0
        %1322 = vmatmul.mubr.f32.gmra.mrb[0].mxu0 %v1227
        %v1323 = vpop.f32.mrb[0].mxu0
        %v1324 = vadd.f32 %v1192, %v1323
        %v1325 = vpop.f32.mrb[0].mxu0
        %1326 = vmatprep.mubr.f32.mxu0 0.0
        %1327 = vmatmul.mubr.f32.gmra.mrb[0].mxu0 %v1230
        %v1328 = vpop.f32.mrb[0].mxu0
        %v1329 = vadd.f32 %v1197, %v1328
        %v1330 = vpop.f32.mrb[0].mxu0
        %1331 = vmatprep.mubr.f32.mxu0 0.0
        %1332 = vmatmul.mubr.f32.gmra.mrb[0].mxu0 %v1233
        %v1333 = vpop.f32.mrb[0].mxu0
        %v1334 = vadd.f32 %v1202, %v1333
        %v1335 = vpop.f32.mrb[0].mxu0
        %1336 = vmatprep.mubr.f32.mxu0 0.0
        %1337 = vmatmul.mubr.f32.gmra.mrb[0].mxu0 %v1236
        %v1338 = vpop.f32.mrb[0].mxu0
        %v1339 = vadd.f32 %v1207, %v1338
        %v1340 = vpop.f32.mrb[0].mxu0
        %1341 = vmatprep.mubr.f32.mxu0 0.0
        %1342 = vmatmul.mubr.f32.gmra.mrb[0].mxu0 %v1239
        %v1343 = vpop.f32.mrb[0].mxu0
        %v1344 = vadd.f32 %v1212, %v1343
        %v1345 = vpop.f32.mrb[0].mxu0
        %1346 = vmatprep.mubr.f32.mxu0 0.0
        %1347 = vmatmul.mubr.f32.gmra.mrb[0].mxu0 %v1242
        %v1348 = vpop.f32.mrb[0].mxu0
        %v1349 = vadd.f32 %v1217, %v1348
        %v1350 = vpop.f32.mrb[0].mxu0
        %1351 = vdwg.mxu0
        %s1352 = scalar_lea.vmem %s2, 8
        %v1353 = vld [vmem:[%s1352] sm:$0xf]
        %v1355 = vsel %vm1086, %v805, 0
        %v1358 = vsel %vm1086, %v810, 0
        %v1361 = vsel %vm1086, %v815, 0
        %v1364 = vsel %vm1086, %v820, 0
        %v1367 = vsel %vm1086, %v825, 0
        %v1370 = vsel %vm1086, %v830, 0
        %v1373 = vsel %vm1086, %v835, 0
        %v1376 = vsel %vm1086, %v840, 0
        %v1379 = vsel %vm1111, %v1353, 0
        %1381 = vmatprep.subr.mxu0 0.0
        %1382 = vmatpush1.msra.mxu0 %v1379
        %1383 = vmatprep.subr.mxu0 0.0
        %1384 = vmatpush1.msra.mxu0 0.0
        %1385 = vmatprep.subr.mxu0 0.0
        %1386 = vmatpush1.msra.mxu0 0.0
        %1387 = vmatprep.subr.mxu0 0.0
        %1388 = vmatpush1.msra.mxu0 0.0
        %1389 = vmatprep.subr.mxu0 0.0
        %1390 = vmatpush1.msra.mxu0 0.0
        %1391 = vmatprep.subr.mxu0 0.0
        %1392 = vmatpush1.msra.mxu0 0.0
        %1393 = vmatprep.subr.mxu0 0.0
        %1394 = vmatpush1.msra.mxu0 0.0
        %1395 = vmatprep.subr.mxu0 0.0
        %1396 = vmatpush1.msra.mxu0 0.0
        %1397 = vmatprep.subr.mxu0 0.0
        %1398 = vmatpush1.msra.mxu0 0.0
        %1399 = vmatprep.subr.mxu0 0.0
        %1400 = vmatpush1.msra.mxu0 0.0
        %1401 = vmatprep.subr.mxu0 0.0
        %1402 = vmatpush1.msra.mxu0 0.0
        %1403 = vmatprep.subr.mxu0 0.0
        %1404 = vmatpush1.msra.mxu0 0.0
        %1405 = vmatprep.subr.mxu0 0.0
        %1406 = vmatpush1.msra.mxu0 0.0
        %1407 = vmatprep.subr.mxu0 0.0
        %1408 = vmatpush1.msra.mxu0 0.0
        %1409 = vmatprep.subr.mxu0 0.0
        %1410 = vmatpush1.msra.mxu0 0.0
        %1411 = vmatprep.subr.mxu0 0.0
        %1412 = vmatpush1.msra.mxu0 0.0
        %1413 = vmatprep.subr.mxu0 0.0
        %1414 = vmatpush1.msra.mxu0 0.0
        %1415 = vmatprep.subr.mxu0 0.0
        %1416 = vmatpush1.msra.mxu0 0.0
        %1417 = vmatprep.subr.mxu0 0.0
        %1418 = vmatpush1.msra.mxu0 0.0
        %1419 = vmatprep.subr.mxu0 0.0
        %1420 = vmatpush1.msra.mxu0 0.0
        %1421 = vmatprep.subr.mxu0 0.0
        %1422 = vmatpush1.msra.mxu0 0.0
        %1423 = vmatprep.subr.mxu0 0.0
        %1424 = vmatpush1.msra.mxu0 0.0
        %1425 = vmatprep.subr.mxu0 0.0
        %1426 = vmatpush1.msra.mxu0 0.0
        %1427 = vmatprep.subr.mxu0 0.0
        %1428 = vmatpush1.msra.mxu0 0.0
        %1429 = vmatprep.subr.mxu0 0.0
        %1430 = vmatpush1.msra.mxu0 0.0
        %1431 = vmatprep.subr.mxu0 0.0
        %1432 = vmatpush1.msra.mxu0 0.0
        %1433 = vmatprep.subr.mxu0 0.0
        %1434 = vmatpush1.msra.mxu0 0.0
        %1435 = vmatprep.subr.mxu0 0.0
        %1436 = vmatpush1.msra.mxu0 0.0
        %1437 = vmatprep.subr.mxu0 0.0
        %1438 = vmatpush1.msra.mxu0 0.0
        %1439 = vmatprep.subr.mxu0 0.0
        %1440 = vmatpush1.msra.mxu0 0.0
        %1441 = vmatprep.subr.mxu0 0.0
        %1442 = vmatpush1.msra.mxu0 0.0
        %1443 = vmatprep.subr.mxu0 0.0
        %1444 = vmatpush1.msra.mxu0 0.0
        %1445 = vmatprep.mubr.f32.mxu0 0.0
        %1446 = vmatmul.mubr.f32.gmra.mrb[0].mxu0 %v1355
        %v1447 = vpop.f32.mrb[0].mxu0
        %v1448 = vadd.f32 0.0, %v1447
        %v1449 = vpop.f32.mrb[0].mxu0
        %1450 = vmatprep.mubr.f32.mxu0 0.0
        %1451 = vmatmul.mubr.f32.gmra.mrb[0].mxu0 %v1358
        %v1452 = vpop.f32.mrb[0].mxu0
        %v1453 = vadd.f32 0.0, %v1452
        %v1454 = vpop.f32.mrb[0].mxu0
        %1455 = vmatprep.mubr.f32.mxu0 0.0
        %1456 = vmatmul.mubr.f32.gmra.mrb[0].mxu0 %v1361
        %v1457 = vpop.f32.mrb[0].mxu0
        %v1458 = vadd.f32 0.0, %v1457
        %v1459 = vpop.f32.mrb[0].mxu0
        %1460 = vmatprep.mubr.f32.mxu0 0.0
        %1461 = vmatmul.mubr.f32.gmra.mrb[0].mxu0 %v1364
        %v1462 = vpop.f32.mrb[0].mxu0
        %v1463 = vadd.f32 0.0, %v1462
        %v1464 = vpop.f32.mrb[0].mxu0
        %1465 = vmatprep.mubr.f32.mxu0 0.0
        %1466 = vmatmul.mubr.f32.gmra.mrb[0].mxu0 %v1367
        %v1467 = vpop.f32.mrb[0].mxu0
        %v1468 = vadd.f32 0.0, %v1467
        %v1469 = vpop.f32.mrb[0].mxu0
        %1470 = vmatprep.mubr.f32.mxu0 0.0
        %1471 = vmatmul.mubr.f32.gmra.mrb[0].mxu0 %v1370
        %v1472 = vpop.f32.mrb[0].mxu0
        %v1473 = vadd.f32 0.0, %v1472
        %v1474 = vpop.f32.mrb[0].mxu0
        %1475 = vmatprep.mubr.f32.mxu0 0.0
        %1476 = vmatmul.mubr.f32.gmra.mrb[0].mxu0 %v1373
        %v1477 = vpop.f32.mrb[0].mxu0
        %v1478 = vadd.f32 0.0, %v1477
        %v1479 = vpop.f32.mrb[0].mxu0
        %1480 = vmatprep.mubr.f32.mxu0 0.0
        %1481 = vmatmul.mubr.f32.gmra.mrb[0].mxu0 %v1376
        %v1482 = vpop.f32.mrb[0].mxu0
        %v1483 = vadd.f32 0.0, %v1482
        %v1484 = vpop.f32.mrb[0].mxu0
        %1485 = vdwg.mxu0
        %v1486 = vadd.f32 %v1314, %v1448
        %v1487 = vadd.f32 %v1319, %v1453
        %v1488 = vadd.f32 %v1324, %v1458
        %v1489 = vadd.f32 %v1329, %v1463
        %v1490 = vadd.f32 %v1334, %v1468
        %v1491 = vadd.f32 %v1339, %v1473
        %v1492 = vadd.f32 %v1344, %v1478
        %v1493 = vadd.f32 %v1349, %v1483
        %s1494 = scalar_lea.vmem %s2, 12
        %v1495 = vld [vmem:[%s1494] sm:$0xf]
        %v1497 = vsel %vm1086, %v845, 0
        %v1500 = vsel %vm1086, %v850, 0
        %v1503 = vsel %vm1086, %v855, 0
        %v1506 = vsel %vm1086, %v860, 0
        %v1509 = vsel %vm1086, %v865, 0
        %v1512 = vsel %vm1086, %v870, 0
        %v1515 = vsel %vm1086, %v875, 0
        %v1518 = vsel %vm1086, %v880, 0
        %v1521 = vsel %vm1111, %v1495, 0
        %1523 = vmatprep.subr.mxu0 0.0
        %1524 = vmatpush1.msra.mxu0 %v1521
        %1525 = vmatprep.subr.mxu0 0.0
        %1526 = vmatpush1.msra.mxu0 0.0
        %1527 = vmatprep.subr.mxu0 0.0
        %1528 = vmatpush1.msra.mxu0 0.0
        %1529 = vmatprep.subr.mxu0 0.0
        %1530 = vmatpush1.msra.mxu0 0.0
        %1531 = vmatprep.subr.mxu0 0.0
        %1532 = vmatpush1.msra.mxu0 0.0
        %1533 = vmatprep.subr.mxu0 0.0
        %1534 = vmatpush1.msra.mxu0 0.0
        %1535 = vmatprep.subr.mxu0 0.0
        %1536 = vmatpush1.msra.mxu0 0.0
        %1537 = vmatprep.subr.mxu0 0.0
        %1538 = vmatpush1.msra.mxu0 0.0
        %1539 = vmatprep.subr.mxu0 0.0
        %1540 = vmatpush1.msra.mxu0 0.0
        %1541 = vmatprep.subr.mxu0 0.0
        %1542 = vmatpush1.msra.mxu0 0.0
        %1543 = vmatprep.subr.mxu0 0.0
        %1544 = vmatpush1.msra.mxu0 0.0
        %1545 = vmatprep.subr.mxu0 0.0
        %1546 = vmatpush1.msra.mxu0 0.0
        %1547 = vmatprep.subr.mxu0 0.0
        %1548 = vmatpush1.msra.mxu0 0.0
        %1549 = vmatprep.subr.mxu0 0.0
        %1550 = vmatpush1.msra.mxu0 0.0
        %1551 = vmatprep.subr.mxu0 0.0
        %1552 = vmatpush1.msra.mxu0 0.0
        %1553 = vmatprep.subr.mxu0 0.0
        %1554 = vmatpush1.msra.mxu0 0.0
        %1555 = vmatprep.subr.mxu0 0.0
        %1556 = vmatpush1.msra.mxu0 0.0
        %1557 = vmatprep.subr.mxu0 0.0
        %1558 = vmatpush1.msra.mxu0 0.0
        %1559 = vmatprep.subr.mxu0 0.0
        %1560 = vmatpush1.msra.mxu0 0.0
        %1561 = vmatprep.subr.mxu0 0.0
        %1562 = vmatpush1.msra.mxu0 0.0
        %1563 = vmatprep.subr.mxu0 0.0
        %1564 = vmatpush1.msra.mxu0 0.0
        %1565 = vmatprep.subr.mxu0 0.0
        %1566 = vmatpush1.msra.mxu0 0.0
        %1567 = vmatprep.subr.mxu0 0.0
        %1568 = vmatpush1.msra.mxu0 0.0
        %1569 = vmatprep.subr.mxu0 0.0
        %1570 = vmatpush1.msra.mxu0 0.0
        %1571 = vmatprep.subr.mxu0 0.0
        %1572 = vmatpush1.msra.mxu0 0.0
        %1573 = vmatprep.subr.mxu0 0.0
        %1574 = vmatpush1.msra.mxu0 0.0
        %1575 = vmatprep.subr.mxu0 0.0
        %1576 = vmatpush1.msra.mxu0 0.0
        %1577 = vmatprep.subr.mxu0 0.0
        %1578 = vmatpush1.msra.mxu0 0.0
        %1579 = vmatprep.subr.mxu0 0.0
        %1580 = vmatpush1.msra.mxu0 0.0
        %1581 = vmatprep.subr.mxu0 0.0
        %1582 = vmatpush1.msra.mxu0 0.0
        %1583 = vmatprep.subr.mxu0 0.0
        %1584 = vmatpush1.msra.mxu0 0.0
        %1585 = vmatprep.subr.mxu0 0.0
        %1586 = vmatpush1.msra.mxu0 0.0
        %1587 = vmatprep.mubr.f32.mxu0 0.0
        %1588 = vmatmul.mubr.f32.gmra.mrb[0].mxu0 %v1497
        %v1589 = vpop.f32.mrb[0].mxu0
        %v1590 = vadd.f32 0.0, %v1589
        %v1591 = vpop.f32.mrb[0].mxu0
        %1592 = vmatprep.mubr.f32.mxu0 0.0
        %1593 = vmatmul.mubr.f32.gmra.mrb[0].mxu0 %v1500
        %v1594 = vpop.f32.mrb[0].mxu0
        %v1595 = vadd.f32 0.0, %v1594
        %v1596 = vpop.f32.mrb[0].mxu0
        %1597 = vmatprep.mubr.f32.mxu0 0.0
        %1598 = vmatmul.mubr.f32.gmra.mrb[0].mxu0 %v1503
        %v1599 = vpop.f32.mrb[0].mxu0
        %v1600 = vadd.f32 0.0, %v1599
        %v1601 = vpop.f32.mrb[0].mxu0
        %1602 = vmatprep.mubr.f32.mxu0 0.0
        %1603 = vmatmul.mubr.f32.gmra.mrb[0].mxu0 %v1506
        %v1604 = vpop.f32.mrb[0].mxu0
        %v1605 = vadd.f32 0.0, %v1604
        %v1606 = vpop.f32.mrb[0].mxu0
        %1607 = vmatprep.mubr.f32.mxu0 0.0
        %1608 = vmatmul.mubr.f32.gmra.mrb[0].mxu0 %v1509
        %v1609 = vpop.f32.mrb[0].mxu0
        %v1610 = vadd.f32 0.0, %v1609
        %v1611 = vpop.f32.mrb[0].mxu0
        %1612 = vmatprep.mubr.f32.mxu0 0.0
        %1613 = vmatmul.mubr.f32.gmra.mrb[0].mxu0 %v1512
        %v1614 = vpop.f32.mrb[0].mxu0
        %v1615 = vadd.f32 0.0, %v1614
        %v1616 = vpop.f32.mrb[0].mxu0
        %1617 = vmatprep.mubr.f32.mxu0 0.0
        %1618 = vmatmul.mubr.f32.gmra.mrb[0].mxu0 %v1515
        %v1619 = vpop.f32.mrb[0].mxu0
        %v1620 = vadd.f32 0.0, %v1619
        %v1621 = vpop.f32.mrb[0].mxu0
        %1622 = vmatprep.mubr.f32.mxu0 0.0
        %1623 = vmatmul.mubr.f32.gmra.mrb[0].mxu0 %v1518
        %v1624 = vpop.f32.mrb[0].mxu0
        %v1625 = vadd.f32 0.0, %v1624
        %v1626 = vpop.f32.mrb[0].mxu0
        %1627 = vdwg.mxu0
        %v1628 = vadd.f32 %v1486, %v1590
        %v1629 = vadd.f32 %v1487, %v1595
        %v1630 = vadd.f32 %v1488, %v1600
        %v1631 = vadd.f32 %v1489, %v1605
        %v1632 = vadd.f32 %v1490, %v1610
        %v1633 = vadd.f32 %v1491, %v1615
        %v1634 = vadd.f32 %v1492, %v1620
        %v1635 = vadd.f32 %v1493, %v1625
        %s1636 = scalar_lea.vmem %s2, 16
        %v1637 = vld [vmem:[%s1636] sm:$0xf]
        %v1639 = vsel %vm1086, %v885, 0
        %v1642 = vsel %vm1086, %v890, 0
        %v1645 = vsel %vm1086, %v895, 0
        %v1648 = vsel %vm1086, %v900, 0
        %v1651 = vsel %vm1086, %v905, 0
        %v1654 = vsel %vm1086, %v910, 0
        %v1657 = vsel %vm1086, %v915, 0
        %v1660 = vsel %vm1086, %v920, 0
        %v1663 = vsel %vm1111, %v1637, 0
        %1665 = vmatprep.subr.mxu0 0.0
        %1666 = vmatpush1.msra.mxu0 %v1663
        %1667 = vmatprep.subr.mxu0 0.0
        %1668 = vmatpush1.msra.mxu0 0.0
        %1669 = vmatprep.subr.mxu0 0.0
        %1670 = vmatpush1.msra.mxu0 0.0
        %1671 = vmatprep.subr.mxu0 0.0
        %1672 = vmatpush1.msra.mxu0 0.0
        %1673 = vmatprep.subr.mxu0 0.0
        %1674 = vmatpush1.msra.mxu0 0.0
        %1675 = vmatprep.subr.mxu0 0.0
        %1676 = vmatpush1.msra.mxu0 0.0
        %1677 = vmatprep.subr.mxu0 0.0
        %1678 = vmatpush1.msra.mxu0 0.0
        %1679 = vmatprep.subr.mxu0 0.0
        %1680 = vmatpush1.msra.mxu0 0.0
        %1681 = vmatprep.subr.mxu0 0.0
        %1682 = vmatpush1.msra.mxu0 0.0
        %1683 = vmatprep.subr.mxu0 0.0
        %1684 = vmatpush1.msra.mxu0 0.0
        %1685 = vmatprep.subr.mxu0 0.0
        %1686 = vmatpush1.msra.mxu0 0.0
        %1687 = vmatprep.subr.mxu0 0.0
        %1688 = vmatpush1.msra.mxu0 0.0
        %1689 = vmatprep.subr.mxu0 0.0
        %1690 = vmatpush1.msra.mxu0 0.0
        %1691 = vmatprep.subr.mxu0 0.0
        %1692 = vmatpush1.msra.mxu0 0.0
        %1693 = vmatprep.subr.mxu0 0.0
        %1694 = vmatpush1.msra.mxu0 0.0
        %1695 = vmatprep.subr.mxu0 0.0
        %1696 = vmatpush1.msra.mxu0 0.0
        %1697 = vmatprep.subr.mxu0 0.0
        %1698 = vmatpush1.msra.mxu0 0.0
        %1699 = vmatprep.subr.mxu0 0.0
        %1700 = vmatpush1.msra.mxu0 0.0
        %1701 = vmatprep.subr.mxu0 0.0
        %1702 = vmatpush1.msra.mxu0 0.0
        %1703 = vmatprep.subr.mxu0 0.0
        %1704 = vmatpush1.msra.mxu0 0.0
        %1705 = vmatprep.subr.mxu0 0.0
        %1706 = vmatpush1.msra.mxu0 0.0
        %1707 = vmatprep.subr.mxu0 0.0
        %1708 = vmatpush1.msra.mxu0 0.0
        %1709 = vmatprep.subr.mxu0 0.0
        %1710 = vmatpush1.msra.mxu0 0.0
        %1711 = vmatprep.subr.mxu0 0.0
        %1712 = vmatpush1.msra.mxu0 0.0
        %1713 = vmatprep.subr.mxu0 0.0
        %1714 = vmatpush1.msra.mxu0 0.0
        %1715 = vmatprep.subr.mxu0 0.0
        %1716 = vmatpush1.msra.mxu0 0.0
        %1717 = vmatprep.subr.mxu0 0.0
        %1718 = vmatpush1.msra.mxu0 0.0
        %1719 = vmatprep.subr.mxu0 0.0
        %1720 = vmatpush1.msra.mxu0 0.0
        %1721 = vmatprep.subr.mxu0 0.0
        %1722 = vmatpush1.msra.mxu0 0.0
        %1723 = vmatprep.subr.mxu0 0.0
        %1724 = vmatpush1.msra.mxu0 0.0
        %1725 = vmatprep.subr.mxu0 0.0
        %1726 = vmatpush1.msra.mxu0 0.0
        %1727 = vmatprep.subr.mxu0 0.0
        %1728 = vmatpush1.msra.mxu0 0.0
        %1729 = vmatprep.mubr.f32.mxu0 0.0
        %1730 = vmatmul.mubr.f32.gmra.mrb[0].mxu0 %v1639
        %v1731 = vpop.f32.mrb[0].mxu0
        %v1732 = vadd.f32 0.0, %v1731
        %v1733 = vpop.f32.mrb[0].mxu0
        %1734 = vmatprep.mubr.f32.mxu0 0.0
        %1735 = vmatmul.mubr.f32.gmra.mrb[0].mxu0 %v1642
        %v1736 = vpop.f32.mrb[0].mxu0
        %v1737 = vadd.f32 0.0, %v1736
        %v1738 = vpop.f32.mrb[0].mxu0
        %1739 = vmatprep.mubr.f32.mxu0 0.0
        %1740 = vmatmul.mubr.f32.gmra.mrb[0].mxu0 %v1645
        %v1741 = vpop.f32.mrb[0].mxu0
        %v1742 = vadd.f32 0.0, %v1741
        %v1743 = vpop.f32.mrb[0].mxu0
        %1744 = vmatprep.mubr.f32.mxu0 0.0
        %1745 = vmatmul.mubr.f32.gmra.mrb[0].mxu0 %v1648
        %v1746 = vpop.f32.mrb[0].mxu0
        %v1747 = vadd.f32 0.0, %v1746
        %v1748 = vpop.f32.mrb[0].mxu0
        %1749 = vmatprep.mubr.f32.mxu0 0.0
        %1750 = vmatmul.mubr.f32.gmra.mrb[0].mxu0 %v1651
        %v1751 = vpop.f32.mrb[0].mxu0
        %v1752 = vadd.f32 0.0, %v1751
        %v1753 = vpop.f32.mrb[0].mxu0
        %1754 = vmatprep.mubr.f32.mxu0 0.0
        %1755 = vmatmul.mubr.f32.gmra.mrb[0].mxu0 %v1654
        %v1756 = vpop.f32.mrb[0].mxu0
        %v1757 = vadd.f32 0.0, %v1756
        %v1758 = vpop.f32.mrb[0].mxu0
        %1759 = vmatprep.mubr.f32.mxu0 0.0
        %1760 = vmatmul.mubr.f32.gmra.mrb[0].mxu0 %v1657
        %v1761 = vpop.f32.mrb[0].mxu0
        %v1762 = vadd.f32 0.0, %v1761
        %v1763 = vpop.f32.mrb[0].mxu0
        %1764 = vmatprep.mubr.f32.mxu0 0.0
        %1765 = vmatmul.mubr.f32.gmra.mrb[0].mxu0 %v1660
        %v1766 = vpop.f32.mrb[0].mxu0
        %v1767 = vadd.f32 0.0, %v1766
        %v1768 = vpop.f32.mrb[0].mxu0
        %1769 = vdwg.mxu0
        %v1770 = vadd.f32 %v1628, %v1732
        %v1771 = vadd.f32 %v1629, %v1737
        %v1772 = vadd.f32 %v1630, %v1742
        %v1773 = vadd.f32 %v1631, %v1747
        %v1774 = vadd.f32 %v1632, %v1752
        %v1775 = vadd.f32 %v1633, %v1757
        %v1776 = vadd.f32 %v1634, %v1762
        %v1777 = vadd.f32 %v1635, %v1767
        %s1778 = scalar_lea.vmem %s2, 20
        %v1779 = vld [vmem:[%s1778] sm:$0xf]
        %v1781 = vsel %vm1086, %v925, 0
        %v1784 = vsel %vm1086, %v930, 0
        %v1787 = vsel %vm1086, %v935, 0
        %v1790 = vsel %vm1086, %v940, 0
        %v1793 = vsel %vm1086, %v945, 0
        %v1796 = vsel %vm1086, %v950, 0
        %v1799 = vsel %vm1086, %v955, 0
        %v1802 = vsel %vm1086, %v960, 0
        %v1805 = vsel %vm1111, %v1779, 0
        %1807 = vmatprep.subr.mxu0 0.0
        %1808 = vmatpush1.msra.mxu0 %v1805
        %1809 = vmatprep.subr.mxu0 0.0
        %1810 = vmatpush1.msra.mxu0 0.0
        %1811 = vmatprep.subr.mxu0 0.0
        %1812 = vmatpush1.msra.mxu0 0.0
        %1813 = vmatprep.subr.mxu0 0.0
        %1814 = vmatpush1.msra.mxu0 0.0
        %1815 = vmatprep.subr.mxu0 0.0
        %1816 = vmatpush1.msra.mxu0 0.0
        %1817 = vmatprep.subr.mxu0 0.0
        %1818 = vmatpush1.msra.mxu0 0.0
        %1819 = vmatprep.subr.mxu0 0.0
        %1820 = vmatpush1.msra.mxu0 0.0
        %1821 = vmatprep.subr.mxu0 0.0
        %1822 = vmatpush1.msra.mxu0 0.0
        %1823 = vmatprep.subr.mxu0 0.0
        %1824 = vmatpush1.msra.mxu0 0.0
        %1825 = vmatprep.subr.mxu0 0.0
        %1826 = vmatpush1.msra.mxu0 0.0
        %1827 = vmatprep.subr.mxu0 0.0
        %1828 = vmatpush1.msra.mxu0 0.0
        %1829 = vmatprep.subr.mxu0 0.0
        %1830 = vmatpush1.msra.mxu0 0.0
        %1831 = vmatprep.subr.mxu0 0.0
        %1832 = vmatpush1.msra.mxu0 0.0
        %1833 = vmatprep.subr.mxu0 0.0
        %1834 = vmatpush1.msra.mxu0 0.0
        %1835 = vmatprep.subr.mxu0 0.0
        %1836 = vmatpush1.msra.mxu0 0.0
        %1837 = vmatprep.subr.mxu0 0.0
        %1838 = vmatpush1.msra.mxu0 0.0
        %1839 = vmatprep.subr.mxu0 0.0
        %1840 = vmatpush1.msra.mxu0 0.0
        %1841 = vmatprep.subr.mxu0 0.0
        %1842 = vmatpush1.msra.mxu0 0.0
        %1843 = vmatprep.subr.mxu0 0.0
        %1844 = vmatpush1.msra.mxu0 0.0
        %1845 = vmatprep.subr.mxu0 0.0
        %1846 = vmatpush1.msra.mxu0 0.0
        %1847 = vmatprep.subr.mxu0 0.0
        %1848 = vmatpush1.msra.mxu0 0.0
        %1849 = vmatprep.subr.mxu0 0.0
        %1850 = vmatpush1.msra.mxu0 0.0
        %1851 = vmatprep.subr.mxu0 0.0
        %1852 = vmatpush1.msra.mxu0 0.0
        %1853 = vmatprep.subr.mxu0 0.0
        %1854 = vmatpush1.msra.mxu0 0.0
        %1855 = vmatprep.subr.mxu0 0.0
        %1856 = vmatpush1.msra.mxu0 0.0
        %1857 = vmatprep.subr.mxu0 0.0
        %1858 = vmatpush1.msra.mxu0 0.0
        %1859 = vmatprep.subr.mxu0 0.0
        %1860 = vmatpush1.msra.mxu0 0.0
        %1861 = vmatprep.subr.mxu0 0.0
        %1862 = vmatpush1.msra.mxu0 0.0
        %1863 = vmatprep.subr.mxu0 0.0
        %1864 = vmatpush1.msra.mxu0 0.0
        %1865 = vmatprep.subr.mxu0 0.0
        %1866 = vmatpush1.msra.mxu0 0.0
        %1867 = vmatprep.subr.mxu0 0.0
        %1868 = vmatpush1.msra.mxu0 0.0
        %1869 = vmatprep.subr.mxu0 0.0
        %1870 = vmatpush1.msra.mxu0 0.0
        %1871 = vmatprep.mubr.f32.mxu0 0.0
        %1872 = vmatmul.mubr.f32.gmra.mrb[0].mxu0 %v1781
        %v1873 = vpop.f32.mrb[0].mxu0
        %v1874 = vadd.f32 0.0, %v1873
        %v1875 = vpop.f32.mrb[0].mxu0
        %1876 = vmatprep.mubr.f32.mxu0 0.0
        %1877 = vmatmul.mubr.f32.gmra.mrb[0].mxu0 %v1784
        %v1878 = vpop.f32.mrb[0].mxu0
        %v1879 = vadd.f32 0.0, %v1878
        %v1880 = vpop.f32.mrb[0].mxu0
        %1881 = vmatprep.mubr.f32.mxu0 0.0
        %1882 = vmatmul.mubr.f32.gmra.mrb[0].mxu0 %v1787
        %v1883 = vpop.f32.mrb[0].mxu0
        %v1884 = vadd.f32 0.0, %v1883
        %v1885 = vpop.f32.mrb[0].mxu0
        %1886 = vmatprep.mubr.f32.mxu0 0.0
        %1887 = vmatmul.mubr.f32.gmra.mrb[0].mxu0 %v1790
        %v1888 = vpop.f32.mrb[0].mxu0
        %v1889 = vadd.f32 0.0, %v1888
        %v1890 = vpop.f32.mrb[0].mxu0
        %1891 = vmatprep.mubr.f32.mxu0 0.0
        %1892 = vmatmul.mubr.f32.gmra.mrb[0].mxu0 %v1793
        %v1893 = vpop.f32.mrb[0].mxu0
        %v1894 = vadd.f32 0.0, %v1893
        %v1895 = vpop.f32.mrb[0].mxu0
        %1896 = vmatprep.mubr.f32.mxu0 0.0
        %1897 = vmatmul.mubr.f32.gmra.mrb[0].mxu0 %v1796
        %v1898 = vpop.f32.mrb[0].mxu0
        %v1899 = vadd.f32 0.0, %v1898
        %v1900 = vpop.f32.mrb[0].mxu0
        %1901 = vmatprep.mubr.f32.mxu0 0.0
        %1902 = vmatmul.mubr.f32.gmra.mrb[0].mxu0 %v1799
        %v1903 = vpop.f32.mrb[0].mxu0
        %v1904 = vadd.f32 0.0, %v1903
        %v1905 = vpop.f32.mrb[0].mxu0
        %1906 = vmatprep.mubr.f32.mxu0 0.0
        %1907 = vmatmul.mubr.f32.gmra.mrb[0].mxu0 %v1802
        %v1908 = vpop.f32.mrb[0].mxu0
        %v1909 = vadd.f32 0.0, %v1908
        %v1910 = vpop.f32.mrb[0].mxu0
        %1911 = vdwg.mxu0
        %v1912 = vadd.f32 %v1770, %v1874
        %v1913 = vadd.f32 %v1771, %v1879
        %v1914 = vadd.f32 %v1772, %v1884
        %v1915 = vadd.f32 %v1773, %v1889
        %v1916 = vadd.f32 %v1774, %v1894
        %v1917 = vadd.f32 %v1775, %v1899
        %v1918 = vadd.f32 %v1776, %v1904
        %v1919 = vadd.f32 %v1777, %v1909
        %s1920 = scalar_lea.vmem %s2, 24
        %v1921 = vld [vmem:[%s1920] sm:$0xf]
        %v1923 = vsel %vm1086, %v965, 0
        %v1926 = vsel %vm1086, %v970, 0
        %v1929 = vsel %vm1086, %v975, 0
        %v1932 = vsel %vm1086, %v980, 0
        %v1935 = vsel %vm1086, %v985, 0
        %v1938 = vsel %vm1086, %v990, 0
        %v1941 = vsel %vm1086, %v995, 0
        %v1944 = vsel %vm1086, %v1000, 0
        %v1947 = vsel %vm1111, %v1921, 0
        %1949 = vmatprep.subr.mxu0 0.0
        %1950 = vmatpush1.msra.mxu0 %v1947
        %1951 = vmatprep.subr.mxu0 0.0
        %1952 = vmatpush1.msra.mxu0 0.0
        %1953 = vmatprep.subr.mxu0 0.0
        %1954 = vmatpush1.msra.mxu0 0.0
        %1955 = vmatprep.subr.mxu0 0.0
        %1956 = vmatpush1.msra.mxu0 0.0
        %1957 = vmatprep.subr.mxu0 0.0
        %1958 = vmatpush1.msra.mxu0 0.0
        %1959 = vmatprep.subr.mxu0 0.0
        %1960 = vmatpush1.msra.mxu0 0.0
        %1961 = vmatprep.subr.mxu0 0.0
        %1962 = vmatpush1.msra.mxu0 0.0
        %1963 = vmatprep.subr.mxu0 0.0
        %1964 = vmatpush1.msra.mxu0 0.0
        %1965 = vmatprep.subr.mxu0 0.0
        %1966 = vmatpush1.msra.mxu0 0.0
        %1967 = vmatprep.subr.mxu0 0.0
        %1968 = vmatpush1.msra.mxu0 0.0
        %1969 = vmatprep.subr.mxu0 0.0
        %1970 = vmatpush1.msra.mxu0 0.0
        %1971 = vmatprep.subr.mxu0 0.0
        %1972 = vmatpush1.msra.mxu0 0.0
        %1973 = vmatprep.subr.mxu0 0.0
        %1974 = vmatpush1.msra.mxu0 0.0
        %1975 = vmatprep.subr.mxu0 0.0
        %1976 = vmatpush1.msra.mxu0 0.0
        %1977 = vmatprep.subr.mxu0 0.0
        %1978 = vmatpush1.msra.mxu0 0.0
        %1979 = vmatprep.subr.mxu0 0.0
        %1980 = vmatpush1.msra.mxu0 0.0
        %1981 = vmatprep.subr.mxu0 0.0
        %1982 = vmatpush1.msra.mxu0 0.0
        %1983 = vmatprep.subr.mxu0 0.0
        %1984 = vmatpush1.msra.mxu0 0.0
        %1985 = vmatprep.subr.mxu0 0.0
        %1986 = vmatpush1.msra.mxu0 0.0
        %1987 = vmatprep.subr.mxu0 0.0
        %1988 = vmatpush1.msra.mxu0 0.0
        %1989 = vmatprep.subr.mxu0 0.0
        %1990 = vmatpush1.msra.mxu0 0.0
        %1991 = vmatprep.subr.mxu0 0.0
        %1992 = vmatpush1.msra.mxu0 0.0
        %1993 = vmatprep.subr.mxu0 0.0
        %1994 = vmatpush1.msra.mxu0 0.0
        %1995 = vmatprep.subr.mxu0 0.0
        %1996 = vmatpush1.msra.mxu0 0.0
        %1997 = vmatprep.subr.mxu0 0.0
        %1998 = vmatpush1.msra.mxu0 0.0
        %1999 = vmatprep.subr.mxu0 0.0
        %2000 = vmatpush1.msra.mxu0 0.0
        %2001 = vmatprep.subr.mxu0 0.0
        %2002 = vmatpush1.msra.mxu0 0.0
        %2003 = vmatprep.subr.mxu0 0.0
        %2004 = vmatpush1.msra.mxu0 0.0
        %2005 = vmatprep.subr.mxu0 0.0
        %2006 = vmatpush1.msra.mxu0 0.0
        %2007 = vmatprep.subr.mxu0 0.0
        %2008 = vmatpush1.msra.mxu0 0.0
        %2009 = vmatprep.subr.mxu0 0.0
        %2010 = vmatpush1.msra.mxu0 0.0
        %2011 = vmatprep.subr.mxu0 0.0
        %2012 = vmatpush1.msra.mxu0 0.0
        %2013 = vmatprep.mubr.f32.mxu0 0.0
        %2014 = vmatmul.mubr.f32.gmra.mrb[0].mxu0 %v1923
        %v2015 = vpop.f32.mrb[0].mxu0
        %v2016 = vadd.f32 0.0, %v2015
        %v2017 = vpop.f32.mrb[0].mxu0
        %2018 = vmatprep.mubr.f32.mxu0 0.0
        %2019 = vmatmul.mubr.f32.gmra.mrb[0].mxu0 %v1926
        %v2020 = vpop.f32.mrb[0].mxu0
        %v2021 = vadd.f32 0.0, %v2020
        %v2022 = vpop.f32.mrb[0].mxu0
        %2023 = vmatprep.mubr.f32.mxu0 0.0
        %2024 = vmatmul.mubr.f32.gmra.mrb[0].mxu0 %v1929
        %v2025 = vpop.f32.mrb[0].mxu0
        %v2026 = vadd.f32 0.0, %v2025
        %v2027 = vpop.f32.mrb[0].mxu0
        %2028 = vmatprep.mubr.f32.mxu0 0.0
        %2029 = vmatmul.mubr.f32.gmra.mrb[0].mxu0 %v1932
        %v2030 = vpop.f32.mrb[0].mxu0
        %v2031 = vadd.f32 0.0, %v2030
        %v2032 = vpop.f32.mrb[0].mxu0
        %2033 = vmatprep.mubr.f32.mxu0 0.0
        %2034 = vmatmul.mubr.f32.gmra.mrb[0].mxu0 %v1935
        %v2035 = vpop.f32.mrb[0].mxu0
        %v2036 = vadd.f32 0.0, %v2035
        %v2037 = vpop.f32.mrb[0].mxu0
        %2038 = vmatprep.mubr.f32.mxu0 0.0
        %2039 = vmatmul.mubr.f32.gmra.mrb[0].mxu0 %v1938
        %v2040 = vpop.f32.mrb[0].mxu0
        %v2041 = vadd.f32 0.0, %v2040
        %v2042 = vpop.f32.mrb[0].mxu0
        %2043 = vmatprep.mubr.f32.mxu0 0.0
        %2044 = vmatmul.mubr.f32.gmra.mrb[0].mxu0 %v1941
        %v2045 = vpop.f32.mrb[0].mxu0
        %v2046 = vadd.f32 0.0, %v2045
        %v2047 = vpop.f32.mrb[0].mxu0
        %2048 = vmatprep.mubr.f32.mxu0 0.0
        %2049 = vmatmul.mubr.f32.gmra.mrb[0].mxu0 %v1944
        %v2050 = vpop.f32.mrb[0].mxu0
        %v2051 = vadd.f32 0.0, %v2050
        %v2052 = vpop.f32.mrb[0].mxu0
        %2053 = vdwg.mxu0
        %v2054 = vadd.f32 %v1912, %v2016
        %v2055 = vadd.f32 %v1913, %v2021
        %v2056 = vadd.f32 %v1914, %v2026
        %v2057 = vadd.f32 %v1915, %v2031
        %v2058 = vadd.f32 %v1916, %v2036
        %v2059 = vadd.f32 %v1917, %v2041
        %v2060 = vadd.f32 %v1918, %v2046
        %v2061 = vadd.f32 %v1919, %v2051
        %s2062 = scalar_lea.vmem %s2, 28
        %v2063 = vld [vmem:[%s2062] sm:$0xf]
        %v2065 = vsel %vm1086, %v1005, 0
        %v2068 = vsel %vm1086, %v1010, 0
        %v2071 = vsel %vm1086, %v1015, 0
        %v2074 = vsel %vm1086, %v1020, 0
        %v2077 = vsel %vm1086, %v1025, 0
        %v2080 = vsel %vm1086, %v1030, 0
        %v2083 = vsel %vm1086, %v1035, 0
        %v2086 = vsel %vm1086, %v1040, 0
        %v2089 = vsel %vm1111, %v2063, 0
        %2091 = vmatprep.subr.mxu0 0.0
        %2092 = vmatpush1.msra.mxu0 %v2089
        %2093 = vmatprep.subr.mxu0 0.0
        %2094 = vmatpush1.msra.mxu0 0.0
        %2095 = vmatprep.subr.mxu0 0.0
        %2096 = vmatpush1.msra.mxu0 0.0
        %2097 = vmatprep.subr.mxu0 0.0
        %2098 = vmatpush1.msra.mxu0 0.0
        %2099 = vmatprep.subr.mxu0 0.0
        %2100 = vmatpush1.msra.mxu0 0.0
        %2101 = vmatprep.subr.mxu0 0.0
        %2102 = vmatpush1.msra.mxu0 0.0
        %2103 = vmatprep.subr.mxu0 0.0
        %2104 = vmatpush1.msra.mxu0 0.0
        %2105 = vmatprep.subr.mxu0 0.0
        %2106 = vmatpush1.msra.mxu0 0.0
        %2107 = vmatprep.subr.mxu0 0.0
        %2108 = vmatpush1.msra.mxu0 0.0
        %2109 = vmatprep.subr.mxu0 0.0
        %2110 = vmatpush1.msra.mxu0 0.0
        %2111 = vmatprep.subr.mxu0 0.0
        %2112 = vmatpush1.msra.mxu0 0.0
        %2113 = vmatprep.subr.mxu0 0.0
        %2114 = vmatpush1.msra.mxu0 0.0
        %2115 = vmatprep.subr.mxu0 0.0
        %2116 = vmatpush1.msra.mxu0 0.0
        %2117 = vmatprep.subr.mxu0 0.0
        %2118 = vmatpush1.msra.mxu0 0.0
        %2119 = vmatprep.subr.mxu0 0.0
        %2120 = vmatpush1.msra.mxu0 0.0
        %2121 = vmatprep.subr.mxu0 0.0
        %2122 = vmatpush1.msra.mxu0 0.0
        %2123 = vmatprep.subr.mxu0 0.0
        %2124 = vmatpush1.msra.mxu0 0.0
        %2125 = vmatprep.subr.mxu0 0.0
        %2126 = vmatpush1.msra.mxu0 0.0
        %2127 = vmatprep.subr.mxu0 0.0
        %2128 = vmatpush1.msra.mxu0 0.0
        %2129 = vmatprep.subr.mxu0 0.0
        %2130 = vmatpush1.msra.mxu0 0.0
        %2131 = vmatprep.subr.mxu0 0.0
        %2132 = vmatpush1.msra.mxu0 0.0
        %2133 = vmatprep.subr.mxu0 0.0
        %2134 = vmatpush1.msra.mxu0 0.0
        %2135 = vmatprep.subr.mxu0 0.0
        %2136 = vmatpush1.msra.mxu0 0.0
        %2137 = vmatprep.subr.mxu0 0.0
        %2138 = vmatpush1.msra.mxu0 0.0
        %2139 = vmatprep.subr.mxu0 0.0
        %2140 = vmatpush1.msra.mxu0 0.0
        %2141 = vmatprep.subr.mxu0 0.0
        %2142 = vmatpush1.msra.mxu0 0.0
        %2143 = vmatprep.subr.mxu0 0.0
        %2144 = vmatpush1.msra.mxu0 0.0
        %2145 = vmatprep.subr.mxu0 0.0
        %2146 = vmatpush1.msra.mxu0 0.0
        %2147 = vmatprep.subr.mxu0 0.0
        %2148 = vmatpush1.msra.mxu0 0.0
        %2149 = vmatprep.subr.mxu0 0.0
        %2150 = vmatpush1.msra.mxu0 0.0
        %2151 = vmatprep.subr.mxu0 0.0
        %2152 = vmatpush1.msra.mxu0 0.0
        %2153 = vmatprep.subr.mxu0 0.0
        %2154 = vmatpush1.msra.mxu0 0.0
        %2155 = vmatprep.mubr.f32.mxu0 0.0
        %2156 = vmatmul.mubr.f32.gmra.mrb[0].mxu0 %v2065
        %v2157 = vpop.f32.mrb[0].mxu0
        %v2158 = vadd.f32 0.0, %v2157
        %v2159 = vpop.f32.mrb[0].mxu0
        %2160 = vmatprep.mubr.f32.mxu0 0.0
        %2161 = vmatmul.mubr.f32.gmra.mrb[0].mxu0 %v2068
        %v2162 = vpop.f32.mrb[0].mxu0
        %v2163 = vadd.f32 0.0, %v2162
        %v2164 = vpop.f32.mrb[0].mxu0
        %2165 = vmatprep.mubr.f32.mxu0 0.0
        %2166 = vmatmul.mubr.f32.gmra.mrb[0].mxu0 %v2071
        %v2167 = vpop.f32.mrb[0].mxu0
        %v2168 = vadd.f32 0.0, %v2167
        %v2169 = vpop.f32.mrb[0].mxu0
        %2170 = vmatprep.mubr.f32.mxu0 0.0
        %2171 = vmatmul.mubr.f32.gmra.mrb[0].mxu0 %v2074
        %v2172 = vpop.f32.mrb[0].mxu0
        %v2173 = vadd.f32 0.0, %v2172
        %v2174 = vpop.f32.mrb[0].mxu0
        %2175 = vmatprep.mubr.f32.mxu0 0.0
        %2176 = vmatmul.mubr.f32.gmra.mrb[0].mxu0 %v2077
        %v2177 = vpop.f32.mrb[0].mxu0
        %v2178 = vadd.f32 0.0, %v2177
        %v2179 = vpop.f32.mrb[0].mxu0
        %2180 = vmatprep.mubr.f32.mxu0 0.0
        %2181 = vmatmul.mubr.f32.gmra.mrb[0].mxu0 %v2080
        %v2182 = vpop.f32.mrb[0].mxu0
        %v2183 = vadd.f32 0.0, %v2182
        %v2184 = vpop.f32.mrb[0].mxu0
        %2185 = vmatprep.mubr.f32.mxu0 0.0
        %2186 = vmatmul.mubr.f32.gmra.mrb[0].mxu0 %v2083
        %v2187 = vpop.f32.mrb[0].mxu0
        %v2188 = vadd.f32 0.0, %v2187
        %v2189 = vpop.f32.mrb[0].mxu0
        %2190 = vmatprep.mubr.f32.mxu0 0.0
        %2191 = vmatmul.mubr.f32.gmra.mrb[0].mxu0 %v2086
        %v2192 = vpop.f32.mrb[0].mxu0
        %v2193 = vadd.f32 0.0, %v2192
        %v2194 = vpop.f32.mrb[0].mxu0
        %2195 = vdwg.mxu0
        %v2196 = vadd.f32 %v2054, %v2158
        %v2197 = vadd.f32 %v2055, %v2163
        %v2198 = vadd.f32 %v2056, %v2168
        %v2199 = vadd.f32 %v2057, %v2173
        %v2200 = vadd.f32 %v2058, %v2178
        %v2201 = vadd.f32 %v2059, %v2183
        %v2202 = vadd.f32 %v2060, %v2188
        %v2203 = vadd.f32 %v2061, %v2193
        %s2204 = scalar_lea.vmem %s2, 32
        %v2205 = vld [vmem:[%s2204] sm:$0xf]
        %v2207 = vsel %vm1086, %v1045, 0
        %v2210 = vsel %vm1086, %v1050, 0
        %v2213 = vsel %vm1086, %v1055, 0
        %v2216 = vsel %vm1086, %v1060, 0
        %v2219 = vsel %vm1086, %v1065, 0
        %v2222 = vsel %vm1086, %v1070, 0
        %v2225 = vsel %vm1086, %v1075, 0
        %v2228 = vsel %vm1086, %v1080, 0
        %v2231 = vsel %vm1111, %v2205, 0
        %2233 = vmatprep.subr.mxu0 0.0
        %2234 = vmatpush1.msra.mxu0 %v2231
        %2235 = vmatprep.subr.mxu0 0.0
        %2236 = vmatpush1.msra.mxu0 0.0
        %2237 = vmatprep.subr.mxu0 0.0
        %2238 = vmatpush1.msra.mxu0 0.0
        %2239 = vmatprep.subr.mxu0 0.0
        %2240 = vmatpush1.msra.mxu0 0.0
        %2241 = vmatprep.subr.mxu0 0.0
        %2242 = vmatpush1.msra.mxu0 0.0
        %2243 = vmatprep.subr.mxu0 0.0
        %2244 = vmatpush1.msra.mxu0 0.0
        %2245 = vmatprep.subr.mxu0 0.0
        %2246 = vmatpush1.msra.mxu0 0.0
        %2247 = vmatprep.subr.mxu0 0.0
        %2248 = vmatpush1.msra.mxu0 0.0
        %2249 = vmatprep.subr.mxu0 0.0
        %2250 = vmatpush1.msra.mxu0 0.0
        %2251 = vmatprep.subr.mxu0 0.0
        %2252 = vmatpush1.msra.mxu0 0.0
        %2253 = vmatprep.subr.mxu0 0.0
        %2254 = vmatpush1.msra.mxu0 0.0
        %2255 = vmatprep.subr.mxu0 0.0
        %2256 = vmatpush1.msra.mxu0 0.0
        %2257 = vmatprep.subr.mxu0 0.0
        %2258 = vmatpush1.msra.mxu0 0.0
        %2259 = vmatprep.subr.mxu0 0.0
        %2260 = vmatpush1.msra.mxu0 0.0
        %2261 = vmatprep.subr.mxu0 0.0
        %2262 = vmatpush1.msra.mxu0 0.0
        %2263 = vmatprep.subr.mxu0 0.0
        %2264 = vmatpush1.msra.mxu0 0.0
        %2265 = vmatprep.subr.mxu0 0.0
        %2266 = vmatpush1.msra.mxu0 0.0
        %2267 = vmatprep.subr.mxu0 0.0
        %2268 = vmatpush1.msra.mxu0 0.0
        %2269 = vmatprep.subr.mxu0 0.0
        %2270 = vmatpush1.msra.mxu0 0.0
        %2271 = vmatprep.subr.mxu0 0.0
        %2272 = vmatpush1.msra.mxu0 0.0
        %2273 = vmatprep.subr.mxu0 0.0
        %2274 = vmatpush1.msra.mxu0 0.0
        %2275 = vmatprep.subr.mxu0 0.0
        %2276 = vmatpush1.msra.mxu0 0.0
        %2277 = vmatprep.subr.mxu0 0.0
        %2278 = vmatpush1.msra.mxu0 0.0
        %2279 = vmatprep.subr.mxu0 0.0
        %2280 = vmatpush1.msra.mxu0 0.0
        %2281 = vmatprep.subr.mxu0 0.0
        %2282 = vmatpush1.msra.mxu0 0.0
        %2283 = vmatprep.subr.mxu0 0.0
        %2284 = vmatpush1.msra.mxu0 0.0
        %2285 = vmatprep.subr.mxu0 0.0
        %2286 = vmatpush1.msra.mxu0 0.0
        %2287 = vmatprep.subr.mxu0 0.0
        %2288 = vmatpush1.msra.mxu0 0.0
        %2289 = vmatprep.subr.mxu0 0.0
        %2290 = vmatpush1.msra.mxu0 0.0
        %2291 = vmatprep.subr.mxu0 0.0
        %2292 = vmatpush1.msra.mxu0 0.0
        %2293 = vmatprep.subr.mxu0 0.0
        %2294 = vmatpush1.msra.mxu0 0.0
        %2295 = vmatprep.subr.mxu0 0.0
        %2296 = vmatpush1.msra.mxu0 0.0
        %2297 = vmatprep.mubr.f32.mxu0 0.0
        %2298 = vmatmul.mubr.f32.gmra.mrb[0].mxu0 %v2207
        %v2299 = vpop.f32.mrb[0].mxu0
        %v2300 = vadd.f32 0.0, %v2299
        %v2301 = vpop.f32.mrb[0].mxu0
        %2302 = vmatprep.mubr.f32.mxu0 0.0
        %2303 = vmatmul.mubr.f32.gmra.mrb[0].mxu0 %v2210
        %v2304 = vpop.f32.mrb[0].mxu0
        %v2305 = vadd.f32 0.0, %v2304
        %v2306 = vpop.f32.mrb[0].mxu0
        %2307 = vmatprep.mubr.f32.mxu0 0.0
        %2308 = vmatmul.mubr.f32.gmra.mrb[0].mxu0 %v2213
        %v2309 = vpop.f32.mrb[0].mxu0
        %v2310 = vadd.f32 0.0, %v2309
        %v2311 = vpop.f32.mrb[0].mxu0
        %2312 = vmatprep.mubr.f32.mxu0 0.0
        %2313 = vmatmul.mubr.f32.gmra.mrb[0].mxu0 %v2216
        %v2314 = vpop.f32.mrb[0].mxu0
        %v2315 = vadd.f32 0.0, %v2314
        %v2316 = vpop.f32.mrb[0].mxu0
        %2317 = vmatprep.mubr.f32.mxu0 0.0
        %2318 = vmatmul.mubr.f32.gmra.mrb[0].mxu0 %v2219
        %v2319 = vpop.f32.mrb[0].mxu0
        %v2320 = vadd.f32 0.0, %v2319
        %v2321 = vpop.f32.mrb[0].mxu0
        %2322 = vmatprep.mubr.f32.mxu0 0.0
        %2323 = vmatmul.mubr.f32.gmra.mrb[0].mxu0 %v2222
        %v2324 = vpop.f32.mrb[0].mxu0
        %v2325 = vadd.f32 0.0, %v2324
        %v2326 = vpop.f32.mrb[0].mxu0
        %2327 = vmatprep.mubr.f32.mxu0 0.0
        %2328 = vmatmul.mubr.f32.gmra.mrb[0].mxu0 %v2225
        %v2329 = vpop.f32.mrb[0].mxu0
        %v2330 = vadd.f32 0.0, %v2329
        %v2331 = vpop.f32.mrb[0].mxu0
        %2332 = vmatprep.mubr.f32.mxu0 0.0
        %2333 = vmatmul.mubr.f32.gmra.mrb[0].mxu0 %v2228
        %v2334 = vpop.f32.mrb[0].mxu0
        %v2335 = vadd.f32 0.0, %v2334
        %v2336 = vpop.f32.mrb[0].mxu0
        %2337 = vdwg.mxu0
        %v2338 = vadd.f32 %v2196, %v2300
        %v2339 = vadd.f32 %v2197, %v2305
        %v2340 = vadd.f32 %v2198, %v2310
        %v2341 = vadd.f32 %v2199, %v2315
        %v2342 = vadd.f32 %v2200, %v2320
        %v2343 = vadd.f32 %v2201, %v2325
        %v2344 = vadd.f32 %v2202, %v2330
        %v2345 = vadd.f32 %v2203, %v2335
        %v2346 = vld [vmem:[%s3] sm:$0x1]
        %v2348 = vlaneseq
        %v2349 = vshrl.u32 %v2348, 7
        %v2350 = vsub.s32 0, %v2349
        %v2351 = vrot.slane %v2346, %v2350
        %v2353 = vadd.f32 %v2338, %v2351
        %v2354 = vadd.f32 %v2339, %v2351
        %v2355 = vadd.f32 %v2340, %v2351
        %v2356 = vadd.f32 %v2341, %v2351
        %v2357 = vadd.f32 %v2342, %v2351
        %v2358 = vadd.f32 %v2343, %v2351
        %v2359 = vadd.f32 %v2344, %v2351
        %v2360 = vadd.f32 %v2345, %v2351
        %v2361 = vmax.f32 %v2353, 0.0
        %v2362 = vmax.f32 %v2354, 0.0
        %v2363 = vmax.f32 %v2355, 0.0
        %v2364 = vmax.f32 %v2356, 0.0
        %v2365 = vmax.f32 %v2357, 0.0
        %v2366 = vmax.f32 %v2358, 0.0
        %v2367 = vmax.f32 %v2359, 0.0
        %v2368 = vmax.f32 %v2360, 0.0
        %v2369 = vld [vmem:[%s4] sm:$0xff]
        %v2370 = vld [vmem:[%s4 + $0x8] sm:$0xff]
        %v2371 = vld [vmem:[%s4 + $0x10] sm:$0xff]
        %v2372 = vld [vmem:[%s4 + $0x18] sm:$0xff]
        %v2373 = vld [vmem:[%s4 + $0x20] sm:$0xff]
        %v2374 = vld [vmem:[%s4 + $0x28] sm:$0xff]
        %v2375 = vld [vmem:[%s4 + $0x30] sm:$0xff]
        %v2376 = vld [vmem:[%s4 + $0x38] sm:$0xff]
        %v2377 = vld [vmem:[%s4 + $0x40] sm:$0xff]
        %v2378 = vld [vmem:[%s4 + $0x48] sm:$0xff]
        %v2379 = vld [vmem:[%s4 + $0x50] sm:$0xff]
        %v2380 = vld [vmem:[%s4 + $0x58] sm:$0xff]
        %v2381 = vld [vmem:[%s4 + $0x60] sm:$0xff]
        %v2382 = vld [vmem:[%s4 + $0x68] sm:$0xff]
        %v2383 = vld [vmem:[%s4 + $0x70] sm:$0xff]
        %v2384 = vld [vmem:[%s4 + $0x78] sm:$0xff]
        %v2385 = vld [vmem:[%s4 + $0x80] sm:$0xff]
        %v2386 = vld [vmem:[%s4 + $0x88] sm:$0xff]
        %vm2387 = vcmask 523264
        %v2389 = vsel %vm2387, %v2369, 0
        %v2392 = vsel %vm2387, %v2370, 0
        %v2395 = vsel %vm2387, %v2371, 0
        %v2398 = vsel %vm2387, %v2372, 0
        %v2401 = vsel %vm2387, %v2373, 0
        %v2404 = vsel %vm2387, %v2374, 0
        %v2407 = vsel %vm2387, %v2375, 0
        %v2410 = vsel %vm2387, %v2376, 0
        %v2413 = vsel %vm2387, %v2377, 0
        %v2416 = vsel %vm2387, %v2378, 0
        %v2419 = vsel %vm2387, %v2379, 0
        %v2422 = vsel %vm2387, %v2380, 0
        %v2425 = vsel %vm2387, %v2381, 0
        %v2428 = vsel %vm2387, %v2382, 0
        %v2431 = vsel %vm2387, %v2383, 0
        %v2434 = vsel %vm2387, %v2384, 0
        %v2437 = vsel %vm2387, %v2385, 0
        %v2440 = vsel %vm2387, %v2386, 0
        %2442 = vmatprep.subr.mxu0 0.0
        %2443 = vmatpush1.msra.mxu0 %v2361
        %2444 = vmatprep.subr.mxu0 0.0
        %2445 = vmatpush1.msra.mxu0 %v2362
        %2446 = vmatprep.subr.mxu0 0.0
        %2447 = vmatpush1.msra.mxu0 %v2363
        %2448 = vmatprep.subr.mxu0 0.0
        %2449 = vmatpush1.msra.mxu0 %v2364
        %2450 = vmatprep.subr.mxu0 0.0
        %2451 = vmatpush1.msra.mxu0 %v2365
        %2452 = vmatprep.subr.mxu0 0.0
        %2453 = vmatpush1.msra.mxu0 %v2366
        %2454 = vmatprep.subr.mxu0 0.0
        %2455 = vmatpush1.msra.mxu0 %v2367
        %2456 = vmatprep.subr.mxu0 0.0
        %2457 = vmatpush1.msra.mxu0 %v2368
        %2458 = vmatprep.subr.mxu0 0.0
        %2459 = vmatpush1.msra.mxu0 0.0
        %2460 = vmatprep.subr.mxu0 0.0
        %2461 = vmatpush1.msra.mxu0 0.0
        %2462 = vmatprep.subr.mxu0 0.0
        %2463 = vmatpush1.msra.mxu0 0.0
        %2464 = vmatprep.subr.mxu0 0.0
        %2465 = vmatpush1.msra.mxu0 0.0
        %2466 = vmatprep.subr.mxu0 0.0
        %2467 = vmatpush1.msra.mxu0 0.0
        %2468 = vmatprep.subr.mxu0 0.0
        %2469 = vmatpush1.msra.mxu0 0.0
        %2470 = vmatprep.subr.mxu0 0.0
        %2471 = vmatpush1.msra.mxu0 0.0
        %2472 = vmatprep.subr.mxu0 0.0
        %2473 = vmatpush1.msra.mxu0 0.0
        %2474 = vmatprep.subr.mxu0 0.0
        %2475 = vmatpush1.msra.mxu0 0.0
        %2476 = vmatprep.subr.mxu0 0.0
        %2477 = vmatpush1.msra.mxu0 0.0
        %2478 = vmatprep.subr.mxu0 0.0
        %2479 = vmatpush1.msra.mxu0 0.0
        %2480 = vmatprep.subr.mxu0 0.0
        %2481 = vmatpush1.msra.mxu0 0.0
        %2482 = vmatprep.subr.mxu0 0.0
        %2483 = vmatpush1.msra.mxu0 0.0
        %2484 = vmatprep.subr.mxu0 0.0
        %2485 = vmatpush1.msra.mxu0 0.0
        %2486 = vmatprep.subr.mxu0 0.0
        %2487 = vmatpush1.msra.mxu0 0.0
        %2488 = vmatprep.subr.mxu0 0.0
        %2489 = vmatpush1.msra.mxu0 0.0
        %2490 = vmatprep.subr.mxu0 0.0
        %2491 = vmatpush1.msra.mxu0 0.0
        %2492 = vmatprep.subr.mxu0 0.0
        %2493 = vmatpush1.msra.mxu0 0.0
        %2494 = vmatprep.subr.mxu0 0.0
        %2495 = vmatpush1.msra.mxu0 0.0
        %2496 = vmatprep.subr.mxu0 0.0
        %2497 = vmatpush1.msra.mxu0 0.0
        %2498 = vmatprep.subr.mxu0 0.0
        %2499 = vmatpush1.msra.mxu0 0.0
        %2500 = vmatprep.subr.mxu0 0.0
        %2501 = vmatpush1.msra.mxu0 0.0
        %2502 = vmatprep.subr.mxu0 0.0
        %2503 = vmatpush1.msra.mxu0 0.0
        %2504 = vmatprep.subr.mxu0 0.0
        %2505 = vmatpush1.msra.mxu0 0.0
        %2506 = vmatprep.mubr.f32.mxu0 0.0
        %2507 = vmatmul.mubr.f32.gmra.mrb[0].mxu0 %v2389
        %v2508 = vpop.f32.mrb[0].mxu0
        %v2509 = vadd.f32 0.0, %v2508
        %v2510 = vpop.f32.mrb[0].mxu0
        %2511 = vmatprep.mubr.f32.mxu0 0.0
        %2512 = vmatmul.mubr.f32.gmra.mrb[0].mxu0 %v2392
        %v2513 = vpop.f32.mrb[0].mxu0
        %v2514 = vadd.f32 0.0, %v2513
        %v2515 = vpop.f32.mrb[0].mxu0
        %2516 = vmatprep.mubr.f32.mxu0 0.0
        %2517 = vmatmul.mubr.f32.gmra.mrb[0].mxu0 %v2395
        %v2518 = vpop.f32.mrb[0].mxu0
        %v2519 = vadd.f32 0.0, %v2518
        %v2520 = vpop.f32.mrb[0].mxu0
        %2521 = vmatprep.mubr.f32.mxu0 0.0
        %2522 = vmatmul.mubr.f32.gmra.mrb[0].mxu0 %v2398
        %v2523 = vpop.f32.mrb[0].mxu0
        %v2524 = vadd.f32 0.0, %v2523
        %v2525 = vpop.f32.mrb[0].mxu0
        %2526 = vmatprep.mubr.f32.mxu0 0.0
        %2527 = vmatmul.mubr.f32.gmra.mrb[0].mxu0 %v2401
        %v2528 = vpop.f32.mrb[0].mxu0
        %v2529 = vadd.f32 0.0, %v2528
        %v2530 = vpop.f32.mrb[0].mxu0
        %2531 = vmatprep.mubr.f32.mxu0 0.0
        %2532 = vmatmul.mubr.f32.gmra.mrb[0].mxu0 %v2404
        %v2533 = vpop.f32.mrb[0].mxu0
        %v2534 = vadd.f32 0.0, %v2533
        %v2535 = vpop.f32.mrb[0].mxu0
        %2536 = vmatprep.mubr.f32.mxu0 0.0
        %2537 = vmatmul.mubr.f32.gmra.mrb[0].mxu0 %v2407
        %v2538 = vpop.f32.mrb[0].mxu0
        %v2539 = vadd.f32 0.0, %v2538
        %v2540 = vpop.f32.mrb[0].mxu0
        %2541 = vmatprep.mubr.f32.mxu0 0.0
        %2542 = vmatmul.mubr.f32.gmra.mrb[0].mxu0 %v2410
        %v2543 = vpop.f32.mrb[0].mxu0
        %v2544 = vadd.f32 0.0, %v2543
        %v2545 = vpop.f32.mrb[0].mxu0
        %2546 = vmatprep.mubr.f32.mxu0 0.0
        %2547 = vmatmul.mubr.f32.gmra.mrb[0].mxu0 %v2413
        %v2548 = vpop.f32.mrb[0].mxu0
        %v2549 = vadd.f32 0.0, %v2548
        %v2550 = vpop.f32.mrb[0].mxu0
        %2551 = vmatprep.mubr.f32.mxu0 0.0
        %2552 = vmatmul.mubr.f32.gmra.mrb[0].mxu0 %v2416
        %v2553 = vpop.f32.mrb[0].mxu0
        %v2554 = vadd.f32 0.0, %v2553
        %v2555 = vpop.f32.mrb[0].mxu0
        %2556 = vmatprep.mubr.f32.mxu0 0.0
        %2557 = vmatmul.mubr.f32.gmra.mrb[0].mxu0 %v2419
        %v2558 = vpop.f32.mrb[0].mxu0
        %v2559 = vadd.f32 0.0, %v2558
        %v2560 = vpop.f32.mrb[0].mxu0
        %2561 = vmatprep.mubr.f32.mxu0 0.0
        %2562 = vmatmul.mubr.f32.gmra.mrb[0].mxu0 %v2422
        %v2563 = vpop.f32.mrb[0].mxu0
        %v2564 = vadd.f32 0.0, %v2563
        %v2565 = vpop.f32.mrb[0].mxu0
        %2566 = vmatprep.mubr.f32.mxu0 0.0
        %2567 = vmatmul.mubr.f32.gmra.mrb[0].mxu0 %v2425
        %v2568 = vpop.f32.mrb[0].mxu0
        %v2569 = vadd.f32 0.0, %v2568
        %v2570 = vpop.f32.mrb[0].mxu0
        %2571 = vmatprep.mubr.f32.mxu0 0.0
        %2572 = vmatmul.mubr.f32.gmra.mrb[0].mxu0 %v2428
        %v2573 = vpop.f32.mrb[0].mxu0
        %v2574 = vadd.f32 0.0, %v2573
        %v2575 = vpop.f32.mrb[0].mxu0
        %2576 = vmatprep.mubr.f32.mxu0 0.0
        %2577 = vmatmul.mubr.f32.gmra.mrb[0].mxu0 %v2431
        %v2578 = vpop.f32.mrb[0].mxu0
        %v2579 = vadd.f32 0.0, %v2578
        %v2580 = vpop.f32.mrb[0].mxu0
        %2581 = vmatprep.mubr.f32.mxu0 0.0
        %2582 = vmatmul.mubr.f32.gmra.mrb[0].mxu0 %v2434
        %v2583 = vpop.f32.mrb[0].mxu0
        %v2584 = vadd.f32 0.0, %v2583
        %v2585 = vpop.f32.mrb[0].mxu0
        %2586 = vmatprep.mubr.f32.mxu0 0.0
        %2587 = vmatmul.mubr.f32.gmra.mrb[0].mxu0 %v2437
        %v2588 = vpop.f32.mrb[0].mxu0
        %v2589 = vadd.f32 0.0, %v2588
        %v2590 = vpop.f32.mrb[0].mxu0
        %2591 = vmatprep.mubr.f32.mxu0 0.0
        %2592 = vmatmul.mubr.f32.gmra.mrb[0].mxu0 %v2440
        %v2593 = vpop.f32.mrb[0].mxu0
        %v2594 = vadd.f32 0.0, %v2593
        %v2595 = vpop.f32.mrb[0].mxu0
        %2596 = vdwg.mxu0
        %v2597 = vld [vmem:[#allocation5] sm:$0xff]
        %v2598 = vld [vmem:[#allocation5 + $0x8] sm:$0xff]
        %v2599 = vld [vmem:[#allocation5 + $0x10] sm:$0xff]
        %v2600 = vld [vmem:[#allocation5 + $0x18] sm:$0xff]
        %v2601 = vld [vmem:[#allocation5 + $0x20] sm:$0xff]
        %v2602 = vld [vmem:[#allocation5 + $0x28] sm:$0xff]
        %v2603 = vld [vmem:[#allocation5 + $0x30] sm:$0xff]
        %v2604 = vld [vmem:[#allocation5 + $0x38] sm:$0xff]
        %v2605 = vld [vmem:[#allocation5 + $0x40] sm:$0xff]
        %v2606 = vld [vmem:[#allocation5 + $0x48] sm:$0xff]
        %v2607 = vld [vmem:[#allocation5 + $0x50] sm:$0xff]
        %v2608 = vld [vmem:[#allocation5 + $0x58] sm:$0xff]
        %v2609 = vld [vmem:[#allocation5 + $0x60] sm:$0xff]
        %v2610 = vld [vmem:[#allocation5 + $0x68] sm:$0xff]
        %v2611 = vld [vmem:[#allocation5 + $0x70] sm:$0xff]
        %v2612 = vld [vmem:[#allocation5 + $0x78] sm:$0xff]
        %s2613 = scalar_lea.vmem [#allocation5], 128
        %v2614 = vld [vmem:[%s2613] sm:$0xff]
        %v2615 = vld [vmem:[%s2613 + $0x8] sm:$0xff]
        %v2616 = vld [vmem:[%s2613 + $0x10] sm:$0xff]
        %v2617 = vld [vmem:[%s2613 + $0x18] sm:$0xff]
        %v2618 = vld [vmem:[%s2613 + $0x20] sm:$0xff]
        %v2619 = vld [vmem:[%s2613 + $0x28] sm:$0xff]
        %v2620 = vld [vmem:[%s2613 + $0x30] sm:$0xff]
        %v2621 = vld [vmem:[%s2613 + $0x38] sm:$0xff]
        %v2622 = vld [vmem:[%s2613 + $0x40] sm:$0xff]
        %v2623 = vld [vmem:[%s2613 + $0x48] sm:$0xff]
        %v2624 = vld [vmem:[%s2613 + $0x50] sm:$0xff]
        %v2625 = vld [vmem:[%s2613 + $0x58] sm:$0xff]
        %v2626 = vld [vmem:[%s2613 + $0x60] sm:$0xff]
        %v2627 = vld [vmem:[%s2613 + $0x68] sm:$0xff]
        %v2628 = vld [vmem:[%s2613 + $0x70] sm:$0xff]
        %v2629 = vld [vmem:[%s2613 + $0x78] sm:$0xff]
        %2630 = vmatprep.subr.mxu0 0.0
        %2631 = vmatpush1.msra.mxu0 %v2614
        %2632 = vmatprep.subr.mxu0 0.0
        %2633 = vmatpush1.msra.mxu0 %v2615
        %2634 = vmatprep.subr.mxu0 0.0
        %2635 = vmatpush1.msra.mxu0 %v2616
        %2636 = vmatprep.subr.mxu0 0.0
        %2637 = vmatpush1.msra.mxu0 %v2617
        %2638 = vmatprep.subr.mxu0 0.0
        %2639 = vmatpush1.msra.mxu0 %v2618
        %2640 = vmatprep.subr.mxu0 0.0
        %2641 = vmatpush1.msra.mxu0 %v2619
        %2642 = vmatprep.subr.mxu0 0.0
        %2643 = vmatpush1.msra.mxu0 %v2620
        %2644 = vmatprep.subr.mxu0 0.0
        %2645 = vmatpush1.msra.mxu0 %v2621
        %2646 = vmatprep.subr.mxu0 0.0
        %2647 = vmatpush1.msra.mxu0 %v2622
        %2648 = vmatprep.subr.mxu0 0.0
        %2649 = vmatpush1.msra.mxu0 %v2623
        %2650 = vmatprep.subr.mxu0 0.0
        %2651 = vmatpush1.msra.mxu0 %v2624
        %2652 = vmatprep.subr.mxu0 0.0
        %2653 = vmatpush1.msra.mxu0 %v2625
        %2654 = vmatprep.subr.mxu0 0.0
        %2655 = vmatpush1.msra.mxu0 %v2626
        %2656 = vmatprep.subr.mxu0 0.0
        %2657 = vmatpush1.msra.mxu0 %v2627
        %2658 = vmatprep.subr.mxu0 0.0
        %2659 = vmatpush1.msra.mxu0 %v2628
        %2660 = vmatprep.subr.mxu0 0.0
        %2661 = vmatpush1.msra.mxu0 %v2629
        %2662 = vmatprep.subr.mxu0 0.0
        %2663 = vmatpush1.msra.mxu0 0.0
        %2664 = vmatprep.subr.mxu0 0.0
        %2665 = vmatpush1.msra.mxu0 0.0
        %2666 = vmatprep.subr.mxu0 0.0
        %2667 = vmatpush1.msra.mxu0 0.0
        %2668 = vmatprep.subr.mxu0 0.0
        %2669 = vmatpush1.msra.mxu0 0.0
        %2670 = vmatprep.subr.mxu0 0.0
        %2671 = vmatpush1.msra.mxu0 0.0
        %2672 = vmatprep.subr.mxu0 0.0
        %2673 = vmatpush1.msra.mxu0 0.0
        %2674 = vmatprep.subr.mxu0 0.0
        %2675 = vmatpush1.msra.mxu0 0.0
        %2676 = vmatprep.subr.mxu0 0.0
        %2677 = vmatpush1.msra.mxu0 0.0
        %2678 = vmatprep.subr.mxu0 0.0
        %2679 = vmatpush1.msra.mxu0 0.0
        %2680 = vmatprep.subr.mxu0 0.0
        %2681 = vmatpush1.msra.mxu0 0.0
        %2682 = vmatprep.subr.mxu0 0.0
        %2683 = vmatpush1.msra.mxu0 0.0
        %2684 = vmatprep.subr.mxu0 0.0
        %2685 = vmatpush1.msra.mxu0 0.0
        %2686 = vmatprep.subr.mxu0 0.0
        %2687 = vmatpush1.msra.mxu0 0.0
        %2688 = vmatprep.subr.mxu0 0.0
        %2689 = vmatpush1.msra.mxu0 0.0
        %2690 = vmatprep.subr.mxu0 0.0
        %2691 = vmatpush1.msra.mxu0 0.0
        %2692 = vmatprep.subr.mxu0 0.0
        %2693 = vmatpush1.msra.mxu0 0.0
        %2694 = vmatprep.mubr.f32.mxu0 0.0
        %2695 = vmatmul.mubr.f32.gmra.mrb[0].mxu0 %v2519
        %v2696 = vpop.f32.mrb[0].mxu0
        %v2697 = vadd.f32 0.0, %v2696
        %v2698 = vpop.f32.mrb[0].mxu0
        %2699 = vmatprep.mubr.f32.mxu0 0.0
        %2700 = vmatmul.mubr.f32.gmra.mrb[0].mxu0 %v2524
        %v2701 = vpop.f32.mrb[0].mxu0
        %v2702 = vadd.f32 0.0, %v2701
        %v2703 = vpop.f32.mrb[0].mxu0
        %2704 = vdwg.mxu0
        %2705 = vmatprep.subr.mxu0 0.0
        %2706 = vmatpush1.msra.mxu0 %v2597
        %2707 = vmatprep.subr.mxu0 0.0
        %2708 = vmatpush1.msra.mxu0 %v2598
        %2709 = vmatprep.subr.mxu0 0.0
        %2710 = vmatpush1.msra.mxu0 %v2599
        %2711 = vmatprep.subr.mxu0 0.0
        %2712 = vmatpush1.msra.mxu0 %v2600
        %2713 = vmatprep.subr.mxu0 0.0
        %2714 = vmatpush1.msra.mxu0 %v2601
        %2715 = vmatprep.subr.mxu0 0.0
        %2716 = vmatpush1.msra.mxu0 %v2602
        %2717 = vmatprep.subr.mxu0 0.0
        %2718 = vmatpush1.msra.mxu0 %v2603
        %2719 = vmatprep.subr.mxu0 0.0
        %2720 = vmatpush1.msra.mxu0 %v2604
        %2721 = vmatprep.subr.mxu0 0.0
        %2722 = vmatpush1.msra.mxu0 %v2605
        %2723 = vmatprep.subr.mxu0 0.0
        %2724 = vmatpush1.msra.mxu0 %v2606
        %2725 = vmatprep.subr.mxu0 0.0
        %2726 = vmatpush1.msra.mxu0 %v2607
        %2727 = vmatprep.subr.mxu0 0.0
        %2728 = vmatpush1.msra.mxu0 %v2608
        %2729 = vmatprep.subr.mxu0 0.0
        %2730 = vmatpush1.msra.mxu0 %v2609
        %2731 = vmatprep.subr.mxu0 0.0
        %2732 = vmatpush1.msra.mxu0 %v2610
        %2733 = vmatprep.subr.mxu0 0.0
        %2734 = vmatpush1.msra.mxu0 %v2611
        %2735 = vmatprep.subr.mxu0 0.0
        %2736 = vmatpush1.msra.mxu0 %v2612
        %2737 = vmatprep.subr.mxu0 0.0
        %2738 = vmatpush1.msra.mxu0 0.0
        %2739 = vmatprep.subr.mxu0 0.0
        %2740 = vmatpush1.msra.mxu0 0.0
        %2741 = vmatprep.subr.mxu0 0.0
        %2742 = vmatpush1.msra.mxu0 0.0
        %2743 = vmatprep.subr.mxu0 0.0
        %2744 = vmatpush1.msra.mxu0 0.0
        %2745 = vmatprep.subr.mxu0 0.0
        %2746 = vmatpush1.msra.mxu0 0.0
        %2747 = vmatprep.subr.mxu0 0.0
        %2748 = vmatpush1.msra.mxu0 0.0
        %2749 = vmatprep.subr.mxu0 0.0
        %2750 = vmatpush1.msra.mxu0 0.0
        %2751 = vmatprep.subr.mxu0 0.0
        %2752 = vmatpush1.msra.mxu0 0.0
        %2753 = vmatprep.subr.mxu0 0.0
        %2754 = vmatpush1.msra.mxu0 0.0
        %2755 = vmatprep.subr.mxu0 0.0
        %2756 = vmatpush1.msra.mxu0 0.0
        %2757 = vmatprep.subr.mxu0 0.0
        %2758 = vmatpush1.msra.mxu0 0.0
        %2759 = vmatprep.subr.mxu0 0.0
        %2760 = vmatpush1.msra.mxu0 0.0
        %2761 = vmatprep.subr.mxu0 0.0
        %2762 = vmatpush1.msra.mxu0 0.0
        %2763 = vmatprep.subr.mxu0 0.0
        %2764 = vmatpush1.msra.mxu0 0.0
        %2765 = vmatprep.subr.mxu0 0.0
        %2766 = vmatpush1.msra.mxu0 0.0
        %2767 = vmatprep.subr.mxu0 0.0
        %2768 = vmatpush1.msra.mxu0 0.0
        %2769 = vmatprep.mubr.f32.mxu0 0.0
        %2770 = vmatmul.mubr.f32.gmra.mrb[0].mxu0 %v2509
        %v2771 = vpop.f32.mrb[0].mxu0
        %v2772 = vadd.f32 %v2697, %v2771
        %v2773 = vpop.f32.mrb[0].mxu0
        %2774 = vmatprep.mubr.f32.mxu0 0.0
        %2775 = vmatmul.mubr.f32.gmra.mrb[0].mxu0 %v2514
        %v2776 = vpop.f32.mrb[0].mxu0
        %v2777 = vadd.f32 %v2702, %v2776
        %v2778 = vpop.f32.mrb[0].mxu0
        %2779 = vdwg.mxu0
        %s2780 = scalar_lea.vmem [#allocation5], 256
        %v2781 = vld [vmem:[%s2780] sm:$0xff]
        %v2782 = vld [vmem:[%s2780 + $0x8] sm:$0xff]
        %v2783 = vld [vmem:[%s2780 + $0x10] sm:$0xff]
        %v2784 = vld [vmem:[%s2780 + $0x18] sm:$0xff]
        %v2785 = vld [vmem:[%s2780 + $0x20] sm:$0xff]
        %v2786 = vld [vmem:[%s2780 + $0x28] sm:$0xff]
        %v2787 = vld [vmem:[%s2780 + $0x30] sm:$0xff]
        %v2788 = vld [vmem:[%s2780 + $0x38] sm:$0xff]
        %v2789 = vld [vmem:[%s2780 + $0x40] sm:$0xff]
        %v2790 = vld [vmem:[%s2780 + $0x48] sm:$0xff]
        %v2791 = vld [vmem:[%s2780 + $0x50] sm:$0xff]
        %v2792 = vld [vmem:[%s2780 + $0x58] sm:$0xff]
        %v2793 = vld [vmem:[%s2780 + $0x60] sm:$0xff]
        %v2794 = vld [vmem:[%s2780 + $0x68] sm:$0xff]
        %v2795 = vld [vmem:[%s2780 + $0x70] sm:$0xff]
        %v2796 = vld [vmem:[%s2780 + $0x78] sm:$0xff]
        %2797 = vmatprep.subr.mxu0 0.0
        %2798 = vmatpush1.msra.mxu0 %v2781
        %2799 = vmatprep.subr.mxu0 0.0
        %2800 = vmatpush1.msra.mxu0 %v2782
        %2801 = vmatprep.subr.mxu0 0.0
        %2802 = vmatpush1.msra.mxu0 %v2783
        %2803 = vmatprep.subr.mxu0 0.0
        %2804 = vmatpush1.msra.mxu0 %v2784
        %2805 = vmatprep.subr.mxu0 0.0
        %2806 = vmatpush1.msra.mxu0 %v2785
        %2807 = vmatprep.subr.mxu0 0.0
        %2808 = vmatpush1.msra.mxu0 %v2786
        %2809 = vmatprep.subr.mxu0 0.0
        %2810 = vmatpush1.msra.mxu0 %v2787
        %2811 = vmatprep.subr.mxu0 0.0
        %2812 = vmatpush1.msra.mxu0 %v2788
        %2813 = vmatprep.subr.mxu0 0.0
        %2814 = vmatpush1.msra.mxu0 %v2789
        %2815 = vmatprep.subr.mxu0 0.0
        %2816 = vmatpush1.msra.mxu0 %v2790
        %2817 = vmatprep.subr.mxu0 0.0
        %2818 = vmatpush1.msra.mxu0 %v2791
        %2819 = vmatprep.subr.mxu0 0.0
        %2820 = vmatpush1.msra.mxu0 %v2792
        %2821 = vmatprep.subr.mxu0 0.0
        %2822 = vmatpush1.msra.mxu0 %v2793
        %2823 = vmatprep.subr.mxu0 0.0
        %2824 = vmatpush1.msra.mxu0 %v2794
        %2825 = vmatprep.subr.mxu0 0.0
        %2826 = vmatpush1.msra.mxu0 %v2795
        %2827 = vmatprep.subr.mxu0 0.0
        %2828 = vmatpush1.msra.mxu0 %v2796
        %2829 = vmatprep.subr.mxu0 0.0
        %2830 = vmatpush1.msra.mxu0 0.0
        %2831 = vmatprep.subr.mxu0 0.0
        %2832 = vmatpush1.msra.mxu0 0.0
        %2833 = vmatprep.subr.mxu0 0.0
        %2834 = vmatpush1.msra.mxu0 0.0
        %2835 = vmatprep.subr.mxu0 0.0
        %2836 = vmatpush1.msra.mxu0 0.0
        %2837 = vmatprep.subr.mxu0 0.0
        %2838 = vmatpush1.msra.mxu0 0.0
        %2839 = vmatprep.subr.mxu0 0.0
        %2840 = vmatpush1.msra.mxu0 0.0
        %2841 = vmatprep.subr.mxu0 0.0
        %2842 = vmatpush1.msra.mxu0 0.0
        %2843 = vmatprep.subr.mxu0 0.0
        %2844 = vmatpush1.msra.mxu0 0.0
        %2845 = vmatprep.subr.mxu0 0.0
        %2846 = vmatpush1.msra.mxu0 0.0
        %2847 = vmatprep.subr.mxu0 0.0
        %2848 = vmatpush1.msra.mxu0 0.0
        %2849 = vmatprep.subr.mxu0 0.0
        %2850 = vmatpush1.msra.mxu0 0.0
        %2851 = vmatprep.subr.mxu0 0.0
        %2852 = vmatpush1.msra.mxu0 0.0
        %2853 = vmatprep.subr.mxu0 0.0
        %2854 = vmatpush1.msra.mxu0 0.0
        %2855 = vmatprep.subr.mxu0 0.0
        %2856 = vmatpush1.msra.mxu0 0.0
        %2857 = vmatprep.subr.mxu0 0.0
        %2858 = vmatpush1.msra.mxu0 0.0
        %2859 = vmatprep.subr.mxu0 0.0
        %2860 = vmatpush1.msra.mxu0 0.0
        %2861 = vmatprep.mubr.f32.mxu0 0.0
        %2862 = vmatmul.mubr.f32.gmra.mrb[0].mxu0 %v2529
        %v2863 = vpop.f32.mrb[0].mxu0
        %v2864 = vadd.f32 0.0, %v2863
        %v2865 = vpop.f32.mrb[0].mxu0
        %2866 = vmatprep.mubr.f32.mxu0 0.0
        %2867 = vmatmul.mubr.f32.gmra.mrb[0].mxu0 %v2534
        %v2868 = vpop.f32.mrb[0].mxu0
        %v2869 = vadd.f32 0.0, %v2868
        %v2870 = vpop.f32.mrb[0].mxu0
        %2871 = vdwg.mxu0
        %v2872 = vadd.f32 %v2772, %v2864
        %v2873 = vadd.f32 %v2777, %v2869
        %s2874 = scalar_lea.vmem [#allocation5], 384
        %v2875 = vld [vmem:[%s2874] sm:$0xff]
        %v2876 = vld [vmem:[%s2874 + $0x8] sm:$0xff]
        %v2877 = vld [vmem:[%s2874 + $0x10] sm:$0xff]
        %v2878 = vld [vmem:[%s2874 + $0x18] sm:$0xff]
        %v2879 = vld [vmem:[%s2874 + $0x20] sm:$0xff]
        %v2880 = vld [vmem:[%s2874 + $0x28] sm:$0xff]
        %v2881 = vld [vmem:[%s2874 + $0x30] sm:$0xff]
        %v2882 = vld [vmem:[%s2874 + $0x38] sm:$0xff]
        %v2883 = vld [vmem:[%s2874 + $0x40] sm:$0xff]
        %v2884 = vld [vmem:[%s2874 + $0x48] sm:$0xff]
        %v2885 = vld [vmem:[%s2874 + $0x50] sm:$0xff]
        %v2886 = vld [vmem:[%s2874 + $0x58] sm:$0xff]
        %v2887 = vld [vmem:[%s2874 + $0x60] sm:$0xff]
        %v2888 = vld [vmem:[%s2874 + $0x68] sm:$0xff]
        %v2889 = vld [vmem:[%s2874 + $0x70] sm:$0xff]
        %v2890 = vld [vmem:[%s2874 + $0x78] sm:$0xff]
        %2891 = vmatprep.subr.mxu0 0.0
        %2892 = vmatpush1.msra.mxu0 %v2875
        %2893 = vmatprep.subr.mxu0 0.0
        %2894 = vmatpush1.msra.mxu0 %v2876
        %2895 = vmatprep.subr.mxu0 0.0
        %2896 = vmatpush1.msra.mxu0 %v2877
        %2897 = vmatprep.subr.mxu0 0.0
        %2898 = vmatpush1.msra.mxu0 %v2878
        %2899 = vmatprep.subr.mxu0 0.0
        %2900 = vmatpush1.msra.mxu0 %v2879
        %2901 = vmatprep.subr.mxu0 0.0
        %2902 = vmatpush1.msra.mxu0 %v2880
        %2903 = vmatprep.subr.mxu0 0.0
        %2904 = vmatpush1.msra.mxu0 %v2881
        %2905 = vmatprep.subr.mxu0 0.0
        %2906 = vmatpush1.msra.mxu0 %v2882
        %2907 = vmatprep.subr.mxu0 0.0
        %2908 = vmatpush1.msra.mxu0 %v2883
        %2909 = vmatprep.subr.mxu0 0.0
        %2910 = vmatpush1.msra.mxu0 %v2884
        %2911 = vmatprep.subr.mxu0 0.0
        %2912 = vmatpush1.msra.mxu0 %v2885
        %2913 = vmatprep.subr.mxu0 0.0
        %2914 = vmatpush1.msra.mxu0 %v2886
        %2915 = vmatprep.subr.mxu0 0.0
        %2916 = vmatpush1.msra.mxu0 %v2887
        %2917 = vmatprep.subr.mxu0 0.0
        %2918 = vmatpush1.msra.mxu0 %v2888
        %2919 = vmatprep.subr.mxu0 0.0
        %2920 = vmatpush1.msra.mxu0 %v2889
        %2921 = vmatprep.subr.mxu0 0.0
        %2922 = vmatpush1.msra.mxu0 %v2890
        %2923 = vmatprep.subr.mxu0 0.0
        %2924 = vmatpush1.msra.mxu0 0.0
        %2925 = vmatprep.subr.mxu0 0.0
        %2926 = vmatpush1.msra.mxu0 0.0
        %2927 = vmatprep.subr.mxu0 0.0
        %2928 = vmatpush1.msra.mxu0 0.0
        %2929 = vmatprep.subr.mxu0 0.0
        %2930 = vmatpush1.msra.mxu0 0.0
        %2931 = vmatprep.subr.mxu0 0.0
        %2932 = vmatpush1.msra.mxu0 0.0
        %2933 = vmatprep.subr.mxu0 0.0
        %2934 = vmatpush1.msra.mxu0 0.0
        %2935 = vmatprep.subr.mxu0 0.0
        %2936 = vmatpush1.msra.mxu0 0.0
        %2937 = vmatprep.subr.mxu0 0.0
        %2938 = vmatpush1.msra.mxu0 0.0
        %2939 = vmatprep.subr.mxu0 0.0
        %2940 = vmatpush1.msra.mxu0 0.0
        %2941 = vmatprep.subr.mxu0 0.0
        %2942 = vmatpush1.msra.mxu0 0.0
        %2943 = vmatprep.subr.mxu0 0.0
        %2944 = vmatpush1.msra.mxu0 0.0
        %2945 = vmatprep.subr.mxu0 0.0
        %2946 = vmatpush1.msra.mxu0 0.0
        %2947 = vmatprep.subr.mxu0 0.0
        %2948 = vmatpush1.msra.mxu0 0.0
        %2949 = vmatprep.subr.mxu0 0.0
        %2950 = vmatpush1.msra.mxu0 0.0
        %2951 = vmatprep.subr.mxu0 0.0
        %2952 = vmatpush1.msra.mxu0 0.0
        %2953 = vmatprep.subr.mxu0 0.0
        %2954 = vmatpush1.msra.mxu0 0.0
        %2955 = vmatprep.mubr.f32.mxu0 0.0
        %2956 = vmatmul.mubr.f32.gmra.mrb[0].mxu0 %v2539
        %v2957 = vpop.f32.mrb[0].mxu0
        %v2958 = vadd.f32 0.0, %v2957
        %v2959 = vpop.f32.mrb[0].mxu0
        %2960 = vmatprep.mubr.f32.mxu0 0.0
        %2961 = vmatmul.mubr.f32.gmra.mrb[0].mxu0 %v2544
        %v2962 = vpop.f32.mrb[0].mxu0
        %v2963 = vadd.f32 0.0, %v2962
        %v2964 = vpop.f32.mrb[0].mxu0
        %2965 = vdwg.mxu0
        %v2966 = vadd.f32 %v2872, %v2958
        %v2967 = vadd.f32 %v2873, %v2963
        %s2968 = scalar_lea.vmem [#allocation5], 512
        %v2969 = vld [vmem:[%s2968] sm:$0xff]
        %v2970 = vld [vmem:[%s2968 + $0x8] sm:$0xff]
        %v2971 = vld [vmem:[%s2968 + $0x10] sm:$0xff]
        %v2972 = vld [vmem:[%s2968 + $0x18] sm:$0xff]
        %v2973 = vld [vmem:[%s2968 + $0x20] sm:$0xff]
        %v2974 = vld [vmem:[%s2968 + $0x28] sm:$0xff]
        %v2975 = vld [vmem:[%s2968 + $0x30] sm:$0xff]
        %v2976 = vld [vmem:[%s2968 + $0x38] sm:$0xff]
        %v2977 = vld [vmem:[%s2968 + $0x40] sm:$0xff]
        %v2978 = vld [vmem:[%s2968 + $0x48] sm:$0xff]
        %v2979 = vld [vmem:[%s2968 + $0x50] sm:$0xff]
        %v2980 = vld [vmem:[%s2968 + $0x58] sm:$0xff]
        %v2981 = vld [vmem:[%s2968 + $0x60] sm:$0xff]
        %v2982 = vld [vmem:[%s2968 + $0x68] sm:$0xff]
        %v2983 = vld [vmem:[%s2968 + $0x70] sm:$0xff]
        %v2984 = vld [vmem:[%s2968 + $0x78] sm:$0xff]
        %2985 = vmatprep.subr.mxu0 0.0
        %2986 = vmatpush1.msra.mxu0 %v2969
        %2987 = vmatprep.subr.mxu0 0.0
        %2988 = vmatpush1.msra.mxu0 %v2970
        %2989 = vmatprep.subr.mxu0 0.0
        %2990 = vmatpush1.msra.mxu0 %v2971
        %2991 = vmatprep.subr.mxu0 0.0
        %2992 = vmatpush1.msra.mxu0 %v2972
        %2993 = vmatprep.subr.mxu0 0.0
        %2994 = vmatpush1.msra.mxu0 %v2973
        %2995 = vmatprep.subr.mxu0 0.0
        %2996 = vmatpush1.msra.mxu0 %v2974
        %2997 = vmatprep.subr.mxu0 0.0
        %2998 = vmatpush1.msra.mxu0 %v2975
        %2999 = vmatprep.subr.mxu0 0.0
        %3000 = vmatpush1.msra.mxu0 %v2976
        %3001 = vmatprep.subr.mxu0 0.0
        %3002 = vmatpush1.msra.mxu0 %v2977
        %3003 = vmatprep.subr.mxu0 0.0
        %3004 = vmatpush1.msra.mxu0 %v2978
        %3005 = vmatprep.subr.mxu0 0.0
        %3006 = vmatpush1.msra.mxu0 %v2979
        %3007 = vmatprep.subr.mxu0 0.0
        %3008 = vmatpush1.msra.mxu0 %v2980
        %3009 = vmatprep.subr.mxu0 0.0
        %3010 = vmatpush1.msra.mxu0 %v2981
        %3011 = vmatprep.subr.mxu0 0.0
        %3012 = vmatpush1.msra.mxu0 %v2982
        %3013 = vmatprep.subr.mxu0 0.0
        %3014 = vmatpush1.msra.mxu0 %v2983
        %3015 = vmatprep.subr.mxu0 0.0
        %3016 = vmatpush1.msra.mxu0 %v2984
        %3017 = vmatprep.subr.mxu0 0.0
        %3018 = vmatpush1.msra.mxu0 0.0
        %3019 = vmatprep.subr.mxu0 0.0
        %3020 = vmatpush1.msra.mxu0 0.0
        %3021 = vmatprep.subr.mxu0 0.0
        %3022 = vmatpush1.msra.mxu0 0.0
        %3023 = vmatprep.subr.mxu0 0.0
        %3024 = vmatpush1.msra.mxu0 0.0
        %3025 = vmatprep.subr.mxu0 0.0
        %3026 = vmatpush1.msra.mxu0 0.0
        %3027 = vmatprep.subr.mxu0 0.0
        %3028 = vmatpush1.msra.mxu0 0.0
        %3029 = vmatprep.subr.mxu0 0.0
        %3030 = vmatpush1.msra.mxu0 0.0
        %3031 = vmatprep.subr.mxu0 0.0
        %3032 = vmatpush1.msra.mxu0 0.0
        %3033 = vmatprep.subr.mxu0 0.0
        %3034 = vmatpush1.msra.mxu0 0.0
        %3035 = vmatprep.subr.mxu0 0.0
        %3036 = vmatpush1.msra.mxu0 0.0
        %3037 = vmatprep.subr.mxu0 0.0
        %3038 = vmatpush1.msra.mxu0 0.0
        %3039 = vmatprep.subr.mxu0 0.0
        %3040 = vmatpush1.msra.mxu0 0.0
        %3041 = vmatprep.subr.mxu0 0.0
        %3042 = vmatpush1.msra.mxu0 0.0
        %3043 = vmatprep.subr.mxu0 0.0
        %3044 = vmatpush1.msra.mxu0 0.0
        %3045 = vmatprep.subr.mxu0 0.0
        %3046 = vmatpush1.msra.mxu0 0.0
        %3047 = vmatprep.subr.mxu0 0.0
        %3048 = vmatpush1.msra.mxu0 0.0
        %3049 = vmatprep.mubr.f32.mxu0 0.0
        %3050 = vmatmul.mubr.f32.gmra.mrb[0].mxu0 %v2549
        %v3051 = vpop.f32.mrb[0].mxu0
        %v3052 = vadd.f32 0.0, %v3051
        %v3053 = vpop.f32.mrb[0].mxu0
        %3054 = vmatprep.mubr.f32.mxu0 0.0
        %3055 = vmatmul.mubr.f32.gmra.mrb[0].mxu0 %v2554
        %v3056 = vpop.f32.mrb[0].mxu0
        %v3057 = vadd.f32 0.0, %v3056
        %v3058 = vpop.f32.mrb[0].mxu0
        %3059 = vdwg.mxu0
        %v3060 = vadd.f32 %v2966, %v3052
        %v3061 = vadd.f32 %v2967, %v3057
        %s3062 = scalar_lea.vmem [#allocation5], 640
        %v3063 = vld [vmem:[%s3062] sm:$0xff]
        %v3064 = vld [vmem:[%s3062 + $0x8] sm:$0xff]
        %v3065 = vld [vmem:[%s3062 + $0x10] sm:$0xff]
        %v3066 = vld [vmem:[%s3062 + $0x18] sm:$0xff]
        %v3067 = vld [vmem:[%s3062 + $0x20] sm:$0xff]
        %v3068 = vld [vmem:[%s3062 + $0x28] sm:$0xff]
        %v3069 = vld [vmem:[%s3062 + $0x30] sm:$0xff]
        %v3070 = vld [vmem:[%s3062 + $0x38] sm:$0xff]
        %v3071 = vld [vmem:[%s3062 + $0x40] sm:$0xff]
        %v3072 = vld [vmem:[%s3062 + $0x48] sm:$0xff]
        %v3073 = vld [vmem:[%s3062 + $0x50] sm:$0xff]
        %v3074 = vld [vmem:[%s3062 + $0x58] sm:$0xff]
        %v3075 = vld [vmem:[%s3062 + $0x60] sm:$0xff]
        %v3076 = vld [vmem:[%s3062 + $0x68] sm:$0xff]
        %v3077 = vld [vmem:[%s3062 + $0x70] sm:$0xff]
        %v3078 = vld [vmem:[%s3062 + $0x78] sm:$0xff]
        %3079 = vmatprep.subr.mxu0 0.0
        %3080 = vmatpush1.msra.mxu0 %v3063
        %3081 = vmatprep.subr.mxu0 0.0
        %3082 = vmatpush1.msra.mxu0 %v3064
        %3083 = vmatprep.subr.mxu0 0.0
        %3084 = vmatpush1.msra.mxu0 %v3065
        %3085 = vmatprep.subr.mxu0 0.0
        %3086 = vmatpush1.msra.mxu0 %v3066
        %3087 = vmatprep.subr.mxu0 0.0
        %3088 = vmatpush1.msra.mxu0 %v3067
        %3089 = vmatprep.subr.mxu0 0.0
        %3090 = vmatpush1.msra.mxu0 %v3068
        %3091 = vmatprep.subr.mxu0 0.0
        %3092 = vmatpush1.msra.mxu0 %v3069
        %3093 = vmatprep.subr.mxu0 0.0
        %3094 = vmatpush1.msra.mxu0 %v3070
        %3095 = vmatprep.subr.mxu0 0.0
        %3096 = vmatpush1.msra.mxu0 %v3071
        %3097 = vmatprep.subr.mxu0 0.0
        %3098 = vmatpush1.msra.mxu0 %v3072
        %3099 = vmatprep.subr.mxu0 0.0
        %3100 = vmatpush1.msra.mxu0 %v3073
        %3101 = vmatprep.subr.mxu0 0.0
        %3102 = vmatpush1.msra.mxu0 %v3074
        %3103 = vmatprep.subr.mxu0 0.0
        %3104 = vmatpush1.msra.mxu0 %v3075
        %3105 = vmatprep.subr.mxu0 0.0
        %3106 = vmatpush1.msra.mxu0 %v3076
        %3107 = vmatprep.subr.mxu0 0.0
        %3108 = vmatpush1.msra.mxu0 %v3077
        %3109 = vmatprep.subr.mxu0 0.0
        %3110 = vmatpush1.msra.mxu0 %v3078
        %3111 = vmatprep.subr.mxu0 0.0
        %3112 = vmatpush1.msra.mxu0 0.0
        %3113 = vmatprep.subr.mxu0 0.0
        %3114 = vmatpush1.msra.mxu0 0.0
        %3115 = vmatprep.subr.mxu0 0.0
        %3116 = vmatpush1.msra.mxu0 0.0
        %3117 = vmatprep.subr.mxu0 0.0
        %3118 = vmatpush1.msra.mxu0 0.0
        %3119 = vmatprep.subr.mxu0 0.0
        %3120 = vmatpush1.msra.mxu0 0.0
        %3121 = vmatprep.subr.mxu0 0.0
        %3122 = vmatpush1.msra.mxu0 0.0
        %3123 = vmatprep.subr.mxu0 0.0
        %3124 = vmatpush1.msra.mxu0 0.0
        %3125 = vmatprep.subr.mxu0 0.0
        %3126 = vmatpush1.msra.mxu0 0.0
        %3127 = vmatprep.subr.mxu0 0.0
        %3128 = vmatpush1.msra.mxu0 0.0
        %3129 = vmatprep.subr.mxu0 0.0
        %3130 = vmatpush1.msra.mxu0 0.0
        %3131 = vmatprep.subr.mxu0 0.0
        %3132 = vmatpush1.msra.mxu0 0.0
        %3133 = vmatprep.subr.mxu0 0.0
        %3134 = vmatpush1.msra.mxu0 0.0
        %3135 = vmatprep.subr.mxu0 0.0
        %3136 = vmatpush1.msra.mxu0 0.0
        %3137 = vmatprep.subr.mxu0 0.0
        %3138 = vmatpush1.msra.mxu0 0.0
        %3139 = vmatprep.subr.mxu0 0.0
        %3140 = vmatpush1.msra.mxu0 0.0
        %3141 = vmatprep.subr.mxu0 0.0
        %3142 = vmatpush1.msra.mxu0 0.0
        %3143 = vmatprep.mubr.f32.mxu0 0.0
        %3144 = vmatmul.mubr.f32.gmra.mrb[0].mxu0 %v2559
        %v3145 = vpop.f32.mrb[0].mxu0
        %v3146 = vadd.f32 0.0, %v3145
        %v3147 = vpop.f32.mrb[0].mxu0
        %3148 = vmatprep.mubr.f32.mxu0 0.0
        %3149 = vmatmul.mubr.f32.gmra.mrb[0].mxu0 %v2564
        %v3150 = vpop.f32.mrb[0].mxu0
        %v3151 = vadd.f32 0.0, %v3150
        %v3152 = vpop.f32.mrb[0].mxu0
        %3153 = vdwg.mxu0
        %v3154 = vadd.f32 %v3060, %v3146
        %v3155 = vadd.f32 %v3061, %v3151
        %s3156 = scalar_lea.vmem [#allocation5], 768
        %v3157 = vld [vmem:[%s3156] sm:$0xff]
        %v3158 = vld [vmem:[%s3156 + $0x8] sm:$0xff]
        %v3159 = vld [vmem:[%s3156 + $0x10] sm:$0xff]
        %v3160 = vld [vmem:[%s3156 + $0x18] sm:$0xff]
        %v3161 = vld [vmem:[%s3156 + $0x20] sm:$0xff]
        %v3162 = vld [vmem:[%s3156 + $0x28] sm:$0xff]
        %v3163 = vld [vmem:[%s3156 + $0x30] sm:$0xff]
        %v3164 = vld [vmem:[%s3156 + $0x38] sm:$0xff]
        %v3165 = vld [vmem:[%s3156 + $0x40] sm:$0xff]
        %v3166 = vld [vmem:[%s3156 + $0x48] sm:$0xff]
        %v3167 = vld [vmem:[%s3156 + $0x50] sm:$0xff]
        %v3168 = vld [vmem:[%s3156 + $0x58] sm:$0xff]
        %v3169 = vld [vmem:[%s3156 + $0x60] sm:$0xff]
        %v3170 = vld [vmem:[%s3156 + $0x68] sm:$0xff]
        %v3171 = vld [vmem:[%s3156 + $0x70] sm:$0xff]
        %v3172 = vld [vmem:[%s3156 + $0x78] sm:$0xff]
        %3173 = vmatprep.subr.mxu0 0.0
        %3174 = vmatpush1.msra.mxu0 %v3157
        %3175 = vmatprep.subr.mxu0 0.0
        %3176 = vmatpush1.msra.mxu0 %v3158
        %3177 = vmatprep.subr.mxu0 0.0
        %3178 = vmatpush1.msra.mxu0 %v3159
        %3179 = vmatprep.subr.mxu0 0.0
        %3180 = vmatpush1.msra.mxu0 %v3160
        %3181 = vmatprep.subr.mxu0 0.0
        %3182 = vmatpush1.msra.mxu0 %v3161
        %3183 = vmatprep.subr.mxu0 0.0
        %3184 = vmatpush1.msra.mxu0 %v3162
        %3185 = vmatprep.subr.mxu0 0.0
        %3186 = vmatpush1.msra.mxu0 %v3163
        %3187 = vmatprep.subr.mxu0 0.0
        %3188 = vmatpush1.msra.mxu0 %v3164
        %3189 = vmatprep.subr.mxu0 0.0
        %3190 = vmatpush1.msra.mxu0 %v3165
        %3191 = vmatprep.subr.mxu0 0.0
        %3192 = vmatpush1.msra.mxu0 %v3166
        %3193 = vmatprep.subr.mxu0 0.0
        %3194 = vmatpush1.msra.mxu0 %v3167
        %3195 = vmatprep.subr.mxu0 0.0
        %3196 = vmatpush1.msra.mxu0 %v3168
        %3197 = vmatprep.subr.mxu0 0.0
        %3198 = vmatpush1.msra.mxu0 %v3169
        %3199 = vmatprep.subr.mxu0 0.0
        %3200 = vmatpush1.msra.mxu0 %v3170
        %3201 = vmatprep.subr.mxu0 0.0
        %3202 = vmatpush1.msra.mxu0 %v3171
        %3203 = vmatprep.subr.mxu0 0.0
        %3204 = vmatpush1.msra.mxu0 %v3172
        %3205 = vmatprep.subr.mxu0 0.0
        %3206 = vmatpush1.msra.mxu0 0.0
        %3207 = vmatprep.subr.mxu0 0.0
        %3208 = vmatpush1.msra.mxu0 0.0
        %3209 = vmatprep.subr.mxu0 0.0
        %3210 = vmatpush1.msra.mxu0 0.0
        %3211 = vmatprep.subr.mxu0 0.0
        %3212 = vmatpush1.msra.mxu0 0.0
        %3213 = vmatprep.subr.mxu0 0.0
        %3214 = vmatpush1.msra.mxu0 0.0
        %3215 = vmatprep.subr.mxu0 0.0
        %3216 = vmatpush1.msra.mxu0 0.0
        %3217 = vmatprep.subr.mxu0 0.0
        %3218 = vmatpush1.msra.mxu0 0.0
        %3219 = vmatprep.subr.mxu0 0.0
        %3220 = vmatpush1.msra.mxu0 0.0
        %3221 = vmatprep.subr.mxu0 0.0
        %3222 = vmatpush1.msra.mxu0 0.0
        %3223 = vmatprep.subr.mxu0 0.0
        %3224 = vmatpush1.msra.mxu0 0.0
        %3225 = vmatprep.subr.mxu0 0.0
        %3226 = vmatpush1.msra.mxu0 0.0
        %3227 = vmatprep.subr.mxu0 0.0
        %3228 = vmatpush1.msra.mxu0 0.0
        %3229 = vmatprep.subr.mxu0 0.0
        %3230 = vmatpush1.msra.mxu0 0.0
        %3231 = vmatprep.subr.mxu0 0.0
        %3232 = vmatpush1.msra.mxu0 0.0
        %3233 = vmatprep.subr.mxu0 0.0
        %3234 = vmatpush1.msra.mxu0 0.0
        %3235 = vmatprep.subr.mxu0 0.0
        %3236 = vmatpush1.msra.mxu0 0.0
        %3237 = vmatprep.mubr.f32.mxu0 0.0
        %3238 = vmatmul.mubr.f32.gmra.mrb[0].mxu0 %v2569
        %v3239 = vpop.f32.mrb[0].mxu0
        %v3240 = vadd.f32 0.0, %v3239
        %v3241 = vpop.f32.mrb[0].mxu0
        %3242 = vmatprep.mubr.f32.mxu0 0.0
        %3243 = vmatmul.mubr.f32.gmra.mrb[0].mxu0 %v2574
        %v3244 = vpop.f32.mrb[0].mxu0
        %v3245 = vadd.f32 0.0, %v3244
        %v3246 = vpop.f32.mrb[0].mxu0
        %3247 = vdwg.mxu0
        %v3248 = vadd.f32 %v3154, %v3240
        %v3249 = vadd.f32 %v3155, %v3245
        %s3250 = scalar_lea.vmem [#allocation5], 896
        %v3251 = vld [vmem:[%s3250] sm:$0xff]
        %v3252 = vld [vmem:[%s3250 + $0x8] sm:$0xff]
        %v3253 = vld [vmem:[%s3250 + $0x10] sm:$0xff]
        %v3254 = vld [vmem:[%s3250 + $0x18] sm:$0xff]
        %v3255 = vld [vmem:[%s3250 + $0x20] sm:$0xff]
        %v3256 = vld [vmem:[%s3250 + $0x28] sm:$0xff]
        %v3257 = vld [vmem:[%s3250 + $0x30] sm:$0xff]
        %v3258 = vld [vmem:[%s3250 + $0x38] sm:$0xff]
        %v3259 = vld [vmem:[%s3250 + $0x40] sm:$0xff]
        %v3260 = vld [vmem:[%s3250 + $0x48] sm:$0xff]
        %v3261 = vld [vmem:[%s3250 + $0x50] sm:$0xff]
        %v3262 = vld [vmem:[%s3250 + $0x58] sm:$0xff]
        %v3263 = vld [vmem:[%s3250 + $0x60] sm:$0xff]
        %v3264 = vld [vmem:[%s3250 + $0x68] sm:$0xff]
        %v3265 = vld [vmem:[%s3250 + $0x70] sm:$0xff]
        %v3266 = vld [vmem:[%s3250 + $0x78] sm:$0xff]
        %3267 = vmatprep.subr.mxu0 0.0
        %3268 = vmatpush1.msra.mxu0 %v3251
        %3269 = vmatprep.subr.mxu0 0.0
        %3270 = vmatpush1.msra.mxu0 %v3252
        %3271 = vmatprep.subr.mxu0 0.0
        %3272 = vmatpush1.msra.mxu0 %v3253
        %3273 = vmatprep.subr.mxu0 0.0
        %3274 = vmatpush1.msra.mxu0 %v3254
        %3275 = vmatprep.subr.mxu0 0.0
        %3276 = vmatpush1.msra.mxu0 %v3255
        %3277 = vmatprep.subr.mxu0 0.0
        %3278 = vmatpush1.msra.mxu0 %v3256
        %3279 = vmatprep.subr.mxu0 0.0
        %3280 = vmatpush1.msra.mxu0 %v3257
        %3281 = vmatprep.subr.mxu0 0.0
        %3282 = vmatpush1.msra.mxu0 %v3258
        %3283 = vmatprep.subr.mxu0 0.0
        %3284 = vmatpush1.msra.mxu0 %v3259
        %3285 = vmatprep.subr.mxu0 0.0
        %3286 = vmatpush1.msra.mxu0 %v3260
        %3287 = vmatprep.subr.mxu0 0.0
        %3288 = vmatpush1.msra.mxu0 %v3261
        %3289 = vmatprep.subr.mxu0 0.0
        %3290 = vmatpush1.msra.mxu0 %v3262
        %3291 = vmatprep.subr.mxu0 0.0
        %3292 = vmatpush1.msra.mxu0 %v3263
        %3293 = vmatprep.subr.mxu0 0.0
        %3294 = vmatpush1.msra.mxu0 %v3264
        %3295 = vmatprep.subr.mxu0 0.0
        %3296 = vmatpush1.msra.mxu0 %v3265
        %3297 = vmatprep.subr.mxu0 0.0
        %3298 = vmatpush1.msra.mxu0 %v3266
        %3299 = vmatprep.subr.mxu0 0.0
        %3300 = vmatpush1.msra.mxu0 0.0
        %3301 = vmatprep.subr.mxu0 0.0
        %3302 = vmatpush1.msra.mxu0 0.0
        %3303 = vmatprep.subr.mxu0 0.0
        %3304 = vmatpush1.msra.mxu0 0.0
        %3305 = vmatprep.subr.mxu0 0.0
        %3306 = vmatpush1.msra.mxu0 0.0
        %3307 = vmatprep.subr.mxu0 0.0
        %3308 = vmatpush1.msra.mxu0 0.0
        %3309 = vmatprep.subr.mxu0 0.0
        %3310 = vmatpush1.msra.mxu0 0.0
        %3311 = vmatprep.subr.mxu0 0.0
        %3312 = vmatpush1.msra.mxu0 0.0
        %3313 = vmatprep.subr.mxu0 0.0
        %3314 = vmatpush1.msra.mxu0 0.0
        %3315 = vmatprep.subr.mxu0 0.0
        %3316 = vmatpush1.msra.mxu0 0.0
        %3317 = vmatprep.subr.mxu0 0.0
        %3318 = vmatpush1.msra.mxu0 0.0
        %3319 = vmatprep.subr.mxu0 0.0
        %3320 = vmatpush1.msra.mxu0 0.0
        %3321 = vmatprep.subr.mxu0 0.0
        %3322 = vmatpush1.msra.mxu0 0.0
        %3323 = vmatprep.subr.mxu0 0.0
        %3324 = vmatpush1.msra.mxu0 0.0
        %3325 = vmatprep.subr.mxu0 0.0
        %3326 = vmatpush1.msra.mxu0 0.0
        %3327 = vmatprep.subr.mxu0 0.0
        %3328 = vmatpush1.msra.mxu0 0.0
        %3329 = vmatprep.subr.mxu0 0.0
        %3330 = vmatpush1.msra.mxu0 0.0
        %3331 = vmatprep.mubr.f32.mxu0 0.0
        %3332 = vmatmul.mubr.f32.gmra.mrb[0].mxu0 %v2579
        %v3333 = vpop.f32.mrb[0].mxu0
        %v3334 = vadd.f32 0.0, %v3333
        %v3335 = vpop.f32.mrb[0].mxu0
        %3336 = vmatprep.mubr.f32.mxu0 0.0
        %3337 = vmatmul.mubr.f32.gmra.mrb[0].mxu0 %v2584
        %v3338 = vpop.f32.mrb[0].mxu0
        %v3339 = vadd.f32 0.0, %v3338
        %v3340 = vpop.f32.mrb[0].mxu0
        %3341 = vdwg.mxu0
        %v3342 = vadd.f32 %v3248, %v3334
        %v3343 = vadd.f32 %v3249, %v3339
        %s3344 = scalar_lea.vmem [#allocation5], 1024
        %v3345 = vld [vmem:[%s3344] sm:$0xff]
        %v3346 = vld [vmem:[%s3344 + $0x8] sm:$0xff]
        %v3347 = vld [vmem:[%s3344 + $0x10] sm:$0xff]
        %v3348 = vld [vmem:[%s3344 + $0x18] sm:$0xff]
        %v3349 = vld [vmem:[%s3344 + $0x20] sm:$0xff]
        %v3350 = vld [vmem:[%s3344 + $0x28] sm:$0xff]
        %v3351 = vld [vmem:[%s3344 + $0x30] sm:$0xff]
        %v3352 = vld [vmem:[%s3344 + $0x38] sm:$0xff]
        %v3353 = vld [vmem:[%s3344 + $0x40] sm:$0xff]
        %v3354 = vld [vmem:[%s3344 + $0x48] sm:$0xff]
        %v3355 = vld [vmem:[%s3344 + $0x50] sm:$0xff]
        %v3356 = vld [vmem:[%s3344 + $0x58] sm:$0xff]
        %v3357 = vld [vmem:[%s3344 + $0x60] sm:$0xff]
        %v3358 = vld [vmem:[%s3344 + $0x68] sm:$0xff]
        %v3359 = vld [vmem:[%s3344 + $0x70] sm:$0xff]
        %v3360 = vld [vmem:[%s3344 + $0x78] sm:$0xff]
        %3361 = vmatprep.subr.mxu0 0.0
        %3362 = vmatpush1.msra.mxu0 %v3345
        %3363 = vmatprep.subr.mxu0 0.0
        %3364 = vmatpush1.msra.mxu0 %v3346
        %3365 = vmatprep.subr.mxu0 0.0
        %3366 = vmatpush1.msra.mxu0 %v3347
        %3367 = vmatprep.subr.mxu0 0.0
        %3368 = vmatpush1.msra.mxu0 %v3348
        %3369 = vmatprep.subr.mxu0 0.0
        %3370 = vmatpush1.msra.mxu0 %v3349
        %3371 = vmatprep.subr.mxu0 0.0
        %3372 = vmatpush1.msra.mxu0 %v3350
        %3373 = vmatprep.subr.mxu0 0.0
        %3374 = vmatpush1.msra.mxu0 %v3351
        %3375 = vmatprep.subr.mxu0 0.0
        %3376 = vmatpush1.msra.mxu0 %v3352
        %3377 = vmatprep.subr.mxu0 0.0
        %3378 = vmatpush1.msra.mxu0 %v3353
        %3379 = vmatprep.subr.mxu0 0.0
        %3380 = vmatpush1.msra.mxu0 %v3354
        %3381 = vmatprep.subr.mxu0 0.0
        %3382 = vmatpush1.msra.mxu0 %v3355
        %3383 = vmatprep.subr.mxu0 0.0
        %3384 = vmatpush1.msra.mxu0 %v3356
        %3385 = vmatprep.subr.mxu0 0.0
        %3386 = vmatpush1.msra.mxu0 %v3357
        %3387 = vmatprep.subr.mxu0 0.0
        %3388 = vmatpush1.msra.mxu0 %v3358
        %3389 = vmatprep.subr.mxu0 0.0
        %3390 = vmatpush1.msra.mxu0 %v3359
        %3391 = vmatprep.subr.mxu0 0.0
        %3392 = vmatpush1.msra.mxu0 %v3360
        %3393 = vmatprep.subr.mxu0 0.0
        %3394 = vmatpush1.msra.mxu0 0.0
        %3395 = vmatprep.subr.mxu0 0.0
        %3396 = vmatpush1.msra.mxu0 0.0
        %3397 = vmatprep.subr.mxu0 0.0
        %3398 = vmatpush1.msra.mxu0 0.0
        %3399 = vmatprep.subr.mxu0 0.0
        %3400 = vmatpush1.msra.mxu0 0.0
        %3401 = vmatprep.subr.mxu0 0.0
        %3402 = vmatpush1.msra.mxu0 0.0
        %3403 = vmatprep.subr.mxu0 0.0
        %3404 = vmatpush1.msra.mxu0 0.0
        %3405 = vmatprep.subr.mxu0 0.0
        %3406 = vmatpush1.msra.mxu0 0.0
        %3407 = vmatprep.subr.mxu0 0.0
        %3408 = vmatpush1.msra.mxu0 0.0
        %3409 = vmatprep.subr.mxu0 0.0
        %3410 = vmatpush1.msra.mxu0 0.0
        %3411 = vmatprep.subr.mxu0 0.0
        %3412 = vmatpush1.msra.mxu0 0.0
        %3413 = vmatprep.subr.mxu0 0.0
        %3414 = vmatpush1.msra.mxu0 0.0
        %3415 = vmatprep.subr.mxu0 0.0
        %3416 = vmatpush1.msra.mxu0 0.0
        %3417 = vmatprep.subr.mxu0 0.0
        %3418 = vmatpush1.msra.mxu0 0.0
        %3419 = vmatprep.subr.mxu0 0.0
        %3420 = vmatpush1.msra.mxu0 0.0
        %3421 = vmatprep.subr.mxu0 0.0
        %3422 = vmatpush1.msra.mxu0 0.0
        %3423 = vmatprep.subr.mxu0 0.0
        %3424 = vmatpush1.msra.mxu0 0.0
        %3425 = vmatprep.mubr.f32.mxu0 0.0
        %3426 = vmatmul.mubr.f32.gmra.mrb[0].mxu0 %v2589
        %v3427 = vpop.f32.mrb[0].mxu0
        %v3428 = vadd.f32 0.0, %v3427
        %v3429 = vpop.f32.mrb[0].mxu0
        %3430 = vmatprep.mubr.f32.mxu0 0.0
        %3431 = vmatmul.mubr.f32.gmra.mrb[0].mxu0 %v2594
        %v3432 = vpop.f32.mrb[0].mxu0
        %v3433 = vadd.f32 0.0, %v3432
        %v3434 = vpop.f32.mrb[0].mxu0
        %3435 = vdwg.mxu0
        %v3436 = vadd.f32 %v3342, %v3428
        %v3437 = vadd.f32 %v3343, %v3433
        %v3438 = vld [vmem:[%s6] sm:$0x1]
        %v3440 = vlaneseq
        %v3441 = vshrl.u32 %v3440, 7
        %v3442 = vsub.s32 0, %v3441
        %v3443 = vrot.slane %v3438, %v3442
        %v3445 = vadd.f32 %v3436, %v3443
        %v3446 = vadd.f32 %v3437, %v3443
        %v3447 = vmax.f32 %v3445, 0.0
        %v3448 = vmax.f32 %v3446, 0.0
        %v3449 = vld [vmem:[#allocation7] sm:$0xff]
        %v3450 = vld [vmem:[#allocation7 + $0x8] sm:$0xff]
        %v3451 = vld [vmem:[#allocation7 + $0x10] sm:$0xff]
        %v3452 = vld [vmem:[#allocation7 + $0x18] sm:$0xff]
        %v3453 = vld [vmem:[#allocation7 + $0x20] sm:$0xff]
        %v3454 = vld [vmem:[#allocation7 + $0x28] sm:$0xff]
        %v3455 = vld [vmem:[#allocation7 + $0x30] sm:$0xff]
        %v3456 = vld [vmem:[#allocation7 + $0x38] sm:$0xff]
        %v3457 = vld [vmem:[#allocation7 + $0x40] sm:$0xff]
        %v3458 = vld [vmem:[#allocation7 + $0x48] sm:$0xff]
        %v3459 = vld [vmem:[#allocation7 + $0x50] sm:$0xff]
        %v3460 = vld [vmem:[#allocation7 + $0x58] sm:$0xff]
        %v3461 = vld [vmem:[#allocation7 + $0x60] sm:$0xff]
        %v3462 = vld [vmem:[#allocation7 + $0x68] sm:$0xff]
        %v3463 = vld [vmem:[#allocation7 + $0x70] sm:$0xff]
        %v3464 = vld [vmem:[#allocation7 + $0x78] sm:$0xff]
        %s3465 = scalar_lea.vmem [#allocation7], 128
        %v3466 = vld [vmem:[%s3465] sm:$0xff]
        %v3467 = vld [vmem:[%s3465 + $0x8] sm:$0xff]
        %v3468 = vld [vmem:[%s3465 + $0x10] sm:$0xff]
        %v3469 = vld [vmem:[%s3465 + $0x18] sm:$0xff]
        %v3470 = vld [vmem:[%s3465 + $0x20] sm:$0xff]
        %v3471 = vld [vmem:[%s3465 + $0x28] sm:$0xff]
        %v3472 = vld [vmem:[%s3465 + $0x30] sm:$0xff]
        %v3473 = vld [vmem:[%s3465 + $0x38] sm:$0xff]
        %v3474 = vld [vmem:[%s3465 + $0x40] sm:$0xff]
        %v3475 = vld [vmem:[%s3465 + $0x48] sm:$0xff]
        %v3476 = vld [vmem:[%s3465 + $0x50] sm:$0xff]
        %v3477 = vld [vmem:[%s3465 + $0x58] sm:$0xff]
        %v3478 = vld [vmem:[%s3465 + $0x60] sm:$0xff]
        %v3479 = vld [vmem:[%s3465 + $0x68] sm:$0xff]
        %v3480 = vld [vmem:[%s3465 + $0x70] sm:$0xff]
        %v3481 = vld [vmem:[%s3465 + $0x78] sm:$0xff]
        %v3483 = vrot.slane %v3447, 1
        %3485 = vmatprep.subr.mxu0 0.0
        %3486 = vmatpush1.msra.mxu0 %v3466
        %3487 = vmatprep.subr.mxu0 0.0
        %3488 = vmatpush1.msra.mxu0 %v3467
        %3489 = vmatprep.subr.mxu0 0.0
        %3490 = vmatpush1.msra.mxu0 %v3468
        %3491 = vmatprep.subr.mxu0 0.0
        %3492 = vmatpush1.msra.mxu0 %v3469
        %3493 = vmatprep.subr.mxu0 0.0
        %3494 = vmatpush1.msra.mxu0 %v3470
        %3495 = vmatprep.subr.mxu0 0.0
        %3496 = vmatpush1.msra.mxu0 %v3471
        %3497 = vmatprep.subr.mxu0 0.0
        %3498 = vmatpush1.msra.mxu0 %v3472
        %3499 = vmatprep.subr.mxu0 0.0
        %3500 = vmatpush1.msra.mxu0 %v3473
        %3501 = vmatprep.subr.mxu0 0.0
        %3502 = vmatpush1.msra.mxu0 %v3474
        %3503 = vmatprep.subr.mxu0 0.0
        %3504 = vmatpush1.msra.mxu0 %v3475
        %3505 = vmatprep.subr.mxu0 0.0
        %3506 = vmatpush1.msra.mxu0 %v3476
        %3507 = vmatprep.subr.mxu0 0.0
        %3508 = vmatpush1.msra.mxu0 %v3477
        %3509 = vmatprep.subr.mxu0 0.0
        %3510 = vmatpush1.msra.mxu0 %v3478
        %3511 = vmatprep.subr.mxu0 0.0
        %3512 = vmatpush1.msra.mxu0 %v3479
        %3513 = vmatprep.subr.mxu0 0.0
        %3514 = vmatpush1.msra.mxu0 %v3480
        %3515 = vmatprep.subr.mxu0 0.0
        %3516 = vmatpush1.msra.mxu0 %v3481
        %3517 = vmatprep.subr.mxu0 0.0
        %3518 = vmatpush1.msra.mxu0 0.0
        %3519 = vmatprep.subr.mxu0 0.0
        %3520 = vmatpush1.msra.mxu0 0.0
        %3521 = vmatprep.subr.mxu0 0.0
        %3522 = vmatpush1.msra.mxu0 0.0
        %3523 = vmatprep.subr.mxu0 0.0
        %3524 = vmatpush1.msra.mxu0 0.0
        %3525 = vmatprep.subr.mxu0 0.0
        %3526 = vmatpush1.msra.mxu0 0.0
        %3527 = vmatprep.subr.mxu0 0.0
        %3528 = vmatpush1.msra.mxu0 0.0
        %3529 = vmatprep.subr.mxu0 0.0
        %3530 = vmatpush1.msra.mxu0 0.0
        %3531 = vmatprep.subr.mxu0 0.0
        %3532 = vmatpush1.msra.mxu0 0.0
        %3533 = vmatprep.subr.mxu0 0.0
        %3534 = vmatpush1.msra.mxu0 0.0
        %3535 = vmatprep.subr.mxu0 0.0
        %3536 = vmatpush1.msra.mxu0 0.0
        %3537 = vmatprep.subr.mxu0 0.0
        %3538 = vmatpush1.msra.mxu0 0.0
        %3539 = vmatprep.subr.mxu0 0.0
        %3540 = vmatpush1.msra.mxu0 0.0
        %3541 = vmatprep.subr.mxu0 0.0
        %3542 = vmatpush1.msra.mxu0 0.0
        %3543 = vmatprep.subr.mxu0 0.0
        %3544 = vmatpush1.msra.mxu0 0.0
        %3545 = vmatprep.subr.mxu0 0.0
        %3546 = vmatpush1.msra.mxu0 0.0
        %3547 = vmatprep.subr.mxu0 0.0
        %3548 = vmatpush1.msra.mxu0 0.0
        %3549 = vmatprep.mubr.f32.mxu0 0.0
        %3550 = vmatmul.mubr.f32.gmra.mrb[0].mxu0 %v3483
        %v3551 = vpop.f32.mrb[0].mxu0
        %v3552 = vadd.f32 0.0, %v3551
        %v3553 = vpop.f32.mrb[0].mxu0
        %3554 = vdwg.mxu0
        %3555 = vmatprep.subr.mxu0 0.0
        %3556 = vmatpush1.msra.mxu0 %v3449
        %3557 = vmatprep.subr.mxu0 0.0
        %3558 = vmatpush1.msra.mxu0 %v3450
        %3559 = vmatprep.subr.mxu0 0.0
        %3560 = vmatpush1.msra.mxu0 %v3451
        %3561 = vmatprep.subr.mxu0 0.0
        %3562 = vmatpush1.msra.mxu0 %v3452
        %3563 = vmatprep.subr.mxu0 0.0
        %3564 = vmatpush1.msra.mxu0 %v3453
        %3565 = vmatprep.subr.mxu0 0.0
        %3566 = vmatpush1.msra.mxu0 %v3454
        %3567 = vmatprep.subr.mxu0 0.0
        %3568 = vmatpush1.msra.mxu0 %v3455
        %3569 = vmatprep.subr.mxu0 0.0
        %3570 = vmatpush1.msra.mxu0 %v3456
        %3571 = vmatprep.subr.mxu0 0.0
        %3572 = vmatpush1.msra.mxu0 %v3457
        %3573 = vmatprep.subr.mxu0 0.0
        %3574 = vmatpush1.msra.mxu0 %v3458
        %3575 = vmatprep.subr.mxu0 0.0
        %3576 = vmatpush1.msra.mxu0 %v3459
        %3577 = vmatprep.subr.mxu0 0.0
        %3578 = vmatpush1.msra.mxu0 %v3460
        %3579 = vmatprep.subr.mxu0 0.0
        %3580 = vmatpush1.msra.mxu0 %v3461
        %3581 = vmatprep.subr.mxu0 0.0
        %3582 = vmatpush1.msra.mxu0 %v3462
        %3583 = vmatprep.subr.mxu0 0.0
        %3584 = vmatpush1.msra.mxu0 %v3463
        %3585 = vmatprep.subr.mxu0 0.0
        %3586 = vmatpush1.msra.mxu0 %v3464
        %3587 = vmatprep.subr.mxu0 0.0
        %3588 = vmatpush1.msra.mxu0 0.0
        %3589 = vmatprep.subr.mxu0 0.0
        %3590 = vmatpush1.msra.mxu0 0.0
        %3591 = vmatprep.subr.mxu0 0.0
        %3592 = vmatpush1.msra.mxu0 0.0
        %3593 = vmatprep.subr.mxu0 0.0
        %3594 = vmatpush1.msra.mxu0 0.0
        %3595 = vmatprep.subr.mxu0 0.0
        %3596 = vmatpush1.msra.mxu0 0.0
        %3597 = vmatprep.subr.mxu0 0.0
        %3598 = vmatpush1.msra.mxu0 0.0
        %3599 = vmatprep.subr.mxu0 0.0
        %3600 = vmatpush1.msra.mxu0 0.0
        %3601 = vmatprep.subr.mxu0 0.0
        %3602 = vmatpush1.msra.mxu0 0.0
        %3603 = vmatprep.subr.mxu0 0.0
        %3604 = vmatpush1.msra.mxu0 0.0
        %3605 = vmatprep.subr.mxu0 0.0
        %3606 = vmatpush1.msra.mxu0 0.0
        %3607 = vmatprep.subr.mxu0 0.0
        %3608 = vmatpush1.msra.mxu0 0.0
        %3609 = vmatprep.subr.mxu0 0.0
        %3610 = vmatpush1.msra.mxu0 0.0
        %3611 = vmatprep.subr.mxu0 0.0
        %3612 = vmatpush1.msra.mxu0 0.0
        %3613 = vmatprep.subr.mxu0 0.0
        %3614 = vmatpush1.msra.mxu0 0.0
        %3615 = vmatprep.subr.mxu0 0.0
        %3616 = vmatpush1.msra.mxu0 0.0
        %3617 = vmatprep.subr.mxu0 0.0
        %3618 = vmatpush1.msra.mxu0 0.0
        %3619 = vmatprep.mubr.f32.mxu0 0.0
        %3620 = vmatmul.mubr.f32.gmra.mrb[0].mxu0 %v3447
        %v3621 = vpop.f32.mrb[0].mxu0
        %v3622 = vadd.f32 %v3552, %v3621
        %v3623 = vpop.f32.mrb[0].mxu0
        %3624 = vdwg.mxu0
        %s3625 = scalar_lea.vmem [#allocation7], 256
        %v3626 = vld [vmem:[%s3625] sm:$0xff]
        %v3627 = vld [vmem:[%s3625 + $0x8] sm:$0xff]
        %v3628 = vld [vmem:[%s3625 + $0x10] sm:$0xff]
        %v3629 = vld [vmem:[%s3625 + $0x18] sm:$0xff]
        %v3630 = vld [vmem:[%s3625 + $0x20] sm:$0xff]
        %v3631 = vld [vmem:[%s3625 + $0x28] sm:$0xff]
        %v3632 = vld [vmem:[%s3625 + $0x30] sm:$0xff]
        %v3633 = vld [vmem:[%s3625 + $0x38] sm:$0xff]
        %v3634 = vld [vmem:[%s3625 + $0x40] sm:$0xff]
        %v3635 = vld [vmem:[%s3625 + $0x48] sm:$0xff]
        %v3636 = vld [vmem:[%s3625 + $0x50] sm:$0xff]
        %v3637 = vld [vmem:[%s3625 + $0x58] sm:$0xff]
        %v3638 = vld [vmem:[%s3625 + $0x60] sm:$0xff]
        %v3639 = vld [vmem:[%s3625 + $0x68] sm:$0xff]
        %v3640 = vld [vmem:[%s3625 + $0x70] sm:$0xff]
        %v3641 = vld [vmem:[%s3625 + $0x78] sm:$0xff]
        %v3642 = vrot.slane %v3447, 2
        %3644 = vmatprep.subr.mxu0 0.0
        %3645 = vmatpush1.msra.mxu0 %v3626
        %3646 = vmatprep.subr.mxu0 0.0
        %3647 = vmatpush1.msra.mxu0 %v3627
        %3648 = vmatprep.subr.mxu0 0.0
        %3649 = vmatpush1.msra.mxu0 %v3628
        %3650 = vmatprep.subr.mxu0 0.0
        %3651 = vmatpush1.msra.mxu0 %v3629
        %3652 = vmatprep.subr.mxu0 0.0
        %3653 = vmatpush1.msra.mxu0 %v3630
        %3654 = vmatprep.subr.mxu0 0.0
        %3655 = vmatpush1.msra.mxu0 %v3631
        %3656 = vmatprep.subr.mxu0 0.0
        %3657 = vmatpush1.msra.mxu0 %v3632
        %3658 = vmatprep.subr.mxu0 0.0
        %3659 = vmatpush1.msra.mxu0 %v3633
        %3660 = vmatprep.subr.mxu0 0.0
        %3661 = vmatpush1.msra.mxu0 %v3634
        %3662 = vmatprep.subr.mxu0 0.0
        %3663 = vmatpush1.msra.mxu0 %v3635
        %3664 = vmatprep.subr.mxu0 0.0
        %3665 = vmatpush1.msra.mxu0 %v3636
        %3666 = vmatprep.subr.mxu0 0.0
        %3667 = vmatpush1.msra.mxu0 %v3637
        %3668 = vmatprep.subr.mxu0 0.0
        %3669 = vmatpush1.msra.mxu0 %v3638
        %3670 = vmatprep.subr.mxu0 0.0
        %3671 = vmatpush1.msra.mxu0 %v3639
        %3672 = vmatprep.subr.mxu0 0.0
        %3673 = vmatpush1.msra.mxu0 %v3640
        %3674 = vmatprep.subr.mxu0 0.0
        %3675 = vmatpush1.msra.mxu0 %v3641
        %3676 = vmatprep.subr.mxu0 0.0
        %3677 = vmatpush1.msra.mxu0 0.0
        %3678 = vmatprep.subr.mxu0 0.0
        %3679 = vmatpush1.msra.mxu0 0.0
        %3680 = vmatprep.subr.mxu0 0.0
        %3681 = vmatpush1.msra.mxu0 0.0
        %3682 = vmatprep.subr.mxu0 0.0
        %3683 = vmatpush1.msra.mxu0 0.0
        %3684 = vmatprep.subr.mxu0 0.0
        %3685 = vmatpush1.msra.mxu0 0.0
        %3686 = vmatprep.subr.mxu0 0.0
        %3687 = vmatpush1.msra.mxu0 0.0
        %3688 = vmatprep.subr.mxu0 0.0
        %3689 = vmatpush1.msra.mxu0 0.0
        %3690 = vmatprep.subr.mxu0 0.0
        %3691 = vmatpush1.msra.mxu0 0.0
        %3692 = vmatprep.subr.mxu0 0.0
        %3693 = vmatpush1.msra.mxu0 0.0
        %3694 = vmatprep.subr.mxu0 0.0
        %3695 = vmatpush1.msra.mxu0 0.0
        %3696 = vmatprep.subr.mxu0 0.0
        %3697 = vmatpush1.msra.mxu0 0.0
        %3698 = vmatprep.subr.mxu0 0.0
        %3699 = vmatpush1.msra.mxu0 0.0
        %3700 = vmatprep.subr.mxu0 0.0
        %3701 = vmatpush1.msra.mxu0 0.0
        %3702 = vmatprep.subr.mxu0 0.0
        %3703 = vmatpush1.msra.mxu0 0.0
        %3704 = vmatprep.subr.mxu0 0.0
        %3705 = vmatpush1.msra.mxu0 0.0
        %3706 = vmatprep.subr.mxu0 0.0
        %3707 = vmatpush1.msra.mxu0 0.0
        %3708 = vmatprep.mubr.f32.mxu0 0.0
        %3709 = vmatmul.mubr.f32.gmra.mrb[0].mxu0 %v3642
        %v3710 = vpop.f32.mrb[0].mxu0
        %v3711 = vadd.f32 0.0, %v3710
        %v3712 = vpop.f32.mrb[0].mxu0
        %3713 = vdwg.mxu0
        %v3714 = vadd.f32 %v3622, %v3711
        %s3715 = scalar_lea.vmem [#allocation7], 384
        %v3716 = vld [vmem:[%s3715] sm:$0xff]
        %v3717 = vld [vmem:[%s3715 + $0x8] sm:$0xff]
        %v3718 = vld [vmem:[%s3715 + $0x10] sm:$0xff]
        %v3719 = vld [vmem:[%s3715 + $0x18] sm:$0xff]
        %v3720 = vld [vmem:[%s3715 + $0x20] sm:$0xff]
        %v3721 = vld [vmem:[%s3715 + $0x28] sm:$0xff]
        %v3722 = vld [vmem:[%s3715 + $0x30] sm:$0xff]
        %v3723 = vld [vmem:[%s3715 + $0x38] sm:$0xff]
        %v3724 = vld [vmem:[%s3715 + $0x40] sm:$0xff]
        %v3725 = vld [vmem:[%s3715 + $0x48] sm:$0xff]
        %v3726 = vld [vmem:[%s3715 + $0x50] sm:$0xff]
        %v3727 = vld [vmem:[%s3715 + $0x58] sm:$0xff]
        %v3728 = vld [vmem:[%s3715 + $0x60] sm:$0xff]
        %v3729 = vld [vmem:[%s3715 + $0x68] sm:$0xff]
        %v3730 = vld [vmem:[%s3715 + $0x70] sm:$0xff]
        %v3731 = vld [vmem:[%s3715 + $0x78] sm:$0xff]
        %v3732 = vrot.slane %v3447, 3
        %3734 = vmatprep.subr.mxu0 0.0
        %3735 = vmatpush1.msra.mxu0 %v3716
        %3736 = vmatprep.subr.mxu0 0.0
        %3737 = vmatpush1.msra.mxu0 %v3717
        %3738 = vmatprep.subr.mxu0 0.0
        %3739 = vmatpush1.msra.mxu0 %v3718
        %3740 = vmatprep.subr.mxu0 0.0
        %3741 = vmatpush1.msra.mxu0 %v3719
        %3742 = vmatprep.subr.mxu0 0.0
        %3743 = vmatpush1.msra.mxu0 %v3720
        %3744 = vmatprep.subr.mxu0 0.0
        %3745 = vmatpush1.msra.mxu0 %v3721
        %3746 = vmatprep.subr.mxu0 0.0
        %3747 = vmatpush1.msra.mxu0 %v3722
        %3748 = vmatprep.subr.mxu0 0.0
        %3749 = vmatpush1.msra.mxu0 %v3723
        %3750 = vmatprep.subr.mxu0 0.0
        %3751 = vmatpush1.msra.mxu0 %v3724
        %3752 = vmatprep.subr.mxu0 0.0
        %3753 = vmatpush1.msra.mxu0 %v3725
        %3754 = vmatprep.subr.mxu0 0.0
        %3755 = vmatpush1.msra.mxu0 %v3726
        %3756 = vmatprep.subr.mxu0 0.0
        %3757 = vmatpush1.msra.mxu0 %v3727
        %3758 = vmatprep.subr.mxu0 0.0
        %3759 = vmatpush1.msra.mxu0 %v3728
        %3760 = vmatprep.subr.mxu0 0.0
        %3761 = vmatpush1.msra.mxu0 %v3729
        %3762 = vmatprep.subr.mxu0 0.0
        %3763 = vmatpush1.msra.mxu0 %v3730
        %3764 = vmatprep.subr.mxu0 0.0
        %3765 = vmatpush1.msra.mxu0 %v3731
        %3766 = vmatprep.subr.mxu0 0.0
        %3767 = vmatpush1.msra.mxu0 0.0
        %3768 = vmatprep.subr.mxu0 0.0
        %3769 = vmatpush1.msra.mxu0 0.0
        %3770 = vmatprep.subr.mxu0 0.0
        %3771 = vmatpush1.msra.mxu0 0.0
        %3772 = vmatprep.subr.mxu0 0.0
        %3773 = vmatpush1.msra.mxu0 0.0
        %3774 = vmatprep.subr.mxu0 0.0
        %3775 = vmatpush1.msra.mxu0 0.0
        %3776 = vmatprep.subr.mxu0 0.0
        %3777 = vmatpush1.msra.mxu0 0.0
        %3778 = vmatprep.subr.mxu0 0.0
        %3779 = vmatpush1.msra.mxu0 0.0
        %3780 = vmatprep.subr.mxu0 0.0
        %3781 = vmatpush1.msra.mxu0 0.0
        %3782 = vmatprep.subr.mxu0 0.0
        %3783 = vmatpush1.msra.mxu0 0.0
        %3784 = vmatprep.subr.mxu0 0.0
        %3785 = vmatpush1.msra.mxu0 0.0
        %3786 = vmatprep.subr.mxu0 0.0
        %3787 = vmatpush1.msra.mxu0 0.0
        %3788 = vmatprep.subr.mxu0 0.0
        %3789 = vmatpush1.msra.mxu0 0.0
        %3790 = vmatprep.subr.mxu0 0.0
        %3791 = vmatpush1.msra.mxu0 0.0
        %3792 = vmatprep.subr.mxu0 0.0
        %3793 = vmatpush1.msra.mxu0 0.0
        %3794 = vmatprep.subr.mxu0 0.0
        %3795 = vmatpush1.msra.mxu0 0.0
        %3796 = vmatprep.subr.mxu0 0.0
        %3797 = vmatpush1.msra.mxu0 0.0
        %3798 = vmatprep.mubr.f32.mxu0 0.0
        %3799 = vmatmul.mubr.f32.gmra.mrb[0].mxu0 %v3732
        %v3800 = vpop.f32.mrb[0].mxu0
        %v3801 = vadd.f32 0.0, %v3800
        %v3802 = vpop.f32.mrb[0].mxu0
        %3803 = vdwg.mxu0
        %v3804 = vadd.f32 %v3714, %v3801
        %s3805 = scalar_lea.vmem [#allocation7], 512
        %v3806 = vld [vmem:[%s3805] sm:$0xff]
        %v3807 = vld [vmem:[%s3805 + $0x8] sm:$0xff]
        %v3808 = vld [vmem:[%s3805 + $0x10] sm:$0xff]
        %v3809 = vld [vmem:[%s3805 + $0x18] sm:$0xff]
        %v3810 = vld [vmem:[%s3805 + $0x20] sm:$0xff]
        %v3811 = vld [vmem:[%s3805 + $0x28] sm:$0xff]
        %v3812 = vld [vmem:[%s3805 + $0x30] sm:$0xff]
        %v3813 = vld [vmem:[%s3805 + $0x38] sm:$0xff]
        %v3814 = vld [vmem:[%s3805 + $0x40] sm:$0xff]
        %v3815 = vld [vmem:[%s3805 + $0x48] sm:$0xff]
        %v3816 = vld [vmem:[%s3805 + $0x50] sm:$0xff]
        %v3817 = vld [vmem:[%s3805 + $0x58] sm:$0xff]
        %v3818 = vld [vmem:[%s3805 + $0x60] sm:$0xff]
        %v3819 = vld [vmem:[%s3805 + $0x68] sm:$0xff]
        %v3820 = vld [vmem:[%s3805 + $0x70] sm:$0xff]
        %v3821 = vld [vmem:[%s3805 + $0x78] sm:$0xff]
        %v3822 = vrot.slane %v3447, 4
        %3824 = vmatprep.subr.mxu0 0.0
        %3825 = vmatpush1.msra.mxu0 %v3806
        %3826 = vmatprep.subr.mxu0 0.0
        %3827 = vmatpush1.msra.mxu0 %v3807
        %3828 = vmatprep.subr.mxu0 0.0
        %3829 = vmatpush1.msra.mxu0 %v3808
        %3830 = vmatprep.subr.mxu0 0.0
        %3831 = vmatpush1.msra.mxu0 %v3809
        %3832 = vmatprep.subr.mxu0 0.0
        %3833 = vmatpush1.msra.mxu0 %v3810
        %3834 = vmatprep.subr.mxu0 0.0
        %3835 = vmatpush1.msra.mxu0 %v3811
        %3836 = vmatprep.subr.mxu0 0.0
        %3837 = vmatpush1.msra.mxu0 %v3812
        %3838 = vmatprep.subr.mxu0 0.0
        %3839 = vmatpush1.msra.mxu0 %v3813
        %3840 = vmatprep.subr.mxu0 0.0
        %3841 = vmatpush1.msra.mxu0 %v3814
        %3842 = vmatprep.subr.mxu0 0.0
        %3843 = vmatpush1.msra.mxu0 %v3815
        %3844 = vmatprep.subr.mxu0 0.0
        %3845 = vmatpush1.msra.mxu0 %v3816
        %3846 = vmatprep.subr.mxu0 0.0
        %3847 = vmatpush1.msra.mxu0 %v3817
        %3848 = vmatprep.subr.mxu0 0.0
        %3849 = vmatpush1.msra.mxu0 %v3818
        %3850 = vmatprep.subr.mxu0 0.0
        %3851 = vmatpush1.msra.mxu0 %v3819
        %3852 = vmatprep.subr.mxu0 0.0
        %3853 = vmatpush1.msra.mxu0 %v3820
        %3854 = vmatprep.subr.mxu0 0.0
        %3855 = vmatpush1.msra.mxu0 %v3821
        %3856 = vmatprep.subr.mxu0 0.0
        %3857 = vmatpush1.msra.mxu0 0.0
        %3858 = vmatprep.subr.mxu0 0.0
        %3859 = vmatpush1.msra.mxu0 0.0
        %3860 = vmatprep.subr.mxu0 0.0
        %3861 = vmatpush1.msra.mxu0 0.0
        %3862 = vmatprep.subr.mxu0 0.0
        %3863 = vmatpush1.msra.mxu0 0.0
        %3864 = vmatprep.subr.mxu0 0.0
        %3865 = vmatpush1.msra.mxu0 0.0
        %3866 = vmatprep.subr.mxu0 0.0
        %3867 = vmatpush1.msra.mxu0 0.0
        %3868 = vmatprep.subr.mxu0 0.0
        %3869 = vmatpush1.msra.mxu0 0.0
        %3870 = vmatprep.subr.mxu0 0.0
        %3871 = vmatpush1.msra.mxu0 0.0
        %3872 = vmatprep.subr.mxu0 0.0
        %3873 = vmatpush1.msra.mxu0 0.0
        %3874 = vmatprep.subr.mxu0 0.0
        %3875 = vmatpush1.msra.mxu0 0.0
        %3876 = vmatprep.subr.mxu0 0.0
        %3877 = vmatpush1.msra.mxu0 0.0
        %3878 = vmatprep.subr.mxu0 0.0
        %3879 = vmatpush1.msra.mxu0 0.0
        %3880 = vmatprep.subr.mxu0 0.0
        %3881 = vmatpush1.msra.mxu0 0.0
        %3882 = vmatprep.subr.mxu0 0.0
        %3883 = vmatpush1.msra.mxu0 0.0
        %3884 = vmatprep.subr.mxu0 0.0
        %3885 = vmatpush1.msra.mxu0 0.0
        %3886 = vmatprep.subr.mxu0 0.0
        %3887 = vmatpush1.msra.mxu0 0.0
        %3888 = vmatprep.mubr.f32.mxu0 0.0
        %3889 = vmatmul.mubr.f32.gmra.mrb[0].mxu0 %v3822
        %v3890 = vpop.f32.mrb[0].mxu0
        %v3891 = vadd.f32 0.0, %v3890
        %v3892 = vpop.f32.mrb[0].mxu0
        %3893 = vdwg.mxu0
        %v3894 = vadd.f32 %v3804, %v3891
        %s3895 = scalar_lea.vmem [#allocation7], 640
        %v3896 = vld [vmem:[%s3895] sm:$0xff]
        %v3897 = vld [vmem:[%s3895 + $0x8] sm:$0xff]
        %v3898 = vld [vmem:[%s3895 + $0x10] sm:$0xff]
        %v3899 = vld [vmem:[%s3895 + $0x18] sm:$0xff]
        %v3900 = vld [vmem:[%s3895 + $0x20] sm:$0xff]
        %v3901 = vld [vmem:[%s3895 + $0x28] sm:$0xff]
        %v3902 = vld [vmem:[%s3895 + $0x30] sm:$0xff]
        %v3903 = vld [vmem:[%s3895 + $0x38] sm:$0xff]
        %v3904 = vld [vmem:[%s3895 + $0x40] sm:$0xff]
        %v3905 = vld [vmem:[%s3895 + $0x48] sm:$0xff]
        %v3906 = vld [vmem:[%s3895 + $0x50] sm:$0xff]
        %v3907 = vld [vmem:[%s3895 + $0x58] sm:$0xff]
        %v3908 = vld [vmem:[%s3895 + $0x60] sm:$0xff]
        %v3909 = vld [vmem:[%s3895 + $0x68] sm:$0xff]
        %v3910 = vld [vmem:[%s3895 + $0x70] sm:$0xff]
        %v3911 = vld [vmem:[%s3895 + $0x78] sm:$0xff]
        %v3912 = vrot.slane %v3447, 5
        %3914 = vmatprep.subr.mxu0 0.0
        %3915 = vmatpush1.msra.mxu0 %v3896
        %3916 = vmatprep.subr.mxu0 0.0
        %3917 = vmatpush1.msra.mxu0 %v3897
        %3918 = vmatprep.subr.mxu0 0.0
        %3919 = vmatpush1.msra.mxu0 %v3898
        %3920 = vmatprep.subr.mxu0 0.0
        %3921 = vmatpush1.msra.mxu0 %v3899
        %3922 = vmatprep.subr.mxu0 0.0
        %3923 = vmatpush1.msra.mxu0 %v3900
        %3924 = vmatprep.subr.mxu0 0.0
        %3925 = vmatpush1.msra.mxu0 %v3901
        %3926 = vmatprep.subr.mxu0 0.0
        %3927 = vmatpush1.msra.mxu0 %v3902
        %3928 = vmatprep.subr.mxu0 0.0
        %3929 = vmatpush1.msra.mxu0 %v3903
        %3930 = vmatprep.subr.mxu0 0.0
        %3931 = vmatpush1.msra.mxu0 %v3904
        %3932 = vmatprep.subr.mxu0 0.0
        %3933 = vmatpush1.msra.mxu0 %v3905
        %3934 = vmatprep.subr.mxu0 0.0
        %3935 = vmatpush1.msra.mxu0 %v3906
        %3936 = vmatprep.subr.mxu0 0.0
        %3937 = vmatpush1.msra.mxu0 %v3907
        %3938 = vmatprep.subr.mxu0 0.0
        %3939 = vmatpush1.msra.mxu0 %v3908
        %3940 = vmatprep.subr.mxu0 0.0
        %3941 = vmatpush1.msra.mxu0 %v3909
        %3942 = vmatprep.subr.mxu0 0.0
        %3943 = vmatpush1.msra.mxu0 %v3910
        %3944 = vmatprep.subr.mxu0 0.0
        %3945 = vmatpush1.msra.mxu0 %v3911
        %3946 = vmatprep.subr.mxu0 0.0
        %3947 = vmatpush1.msra.mxu0 0.0
        %3948 = vmatprep.subr.mxu0 0.0
        %3949 = vmatpush1.msra.mxu0 0.0
        %3950 = vmatprep.subr.mxu0 0.0
        %3951 = vmatpush1.msra.mxu0 0.0
        %3952 = vmatprep.subr.mxu0 0.0
        %3953 = vmatpush1.msra.mxu0 0.0
        %3954 = vmatprep.subr.mxu0 0.0
        %3955 = vmatpush1.msra.mxu0 0.0
        %3956 = vmatprep.subr.mxu0 0.0
        %3957 = vmatpush1.msra.mxu0 0.0
        %3958 = vmatprep.subr.mxu0 0.0
        %3959 = vmatpush1.msra.mxu0 0.0
        %3960 = vmatprep.subr.mxu0 0.0
        %3961 = vmatpush1.msra.mxu0 0.0
        %3962 = vmatprep.subr.mxu0 0.0
        %3963 = vmatpush1.msra.mxu0 0.0
        %3964 = vmatprep.subr.mxu0 0.0
        %3965 = vmatpush1.msra.mxu0 0.0
        %3966 = vmatprep.subr.mxu0 0.0
        %3967 = vmatpush1.msra.mxu0 0.0
        %3968 = vmatprep.subr.mxu0 0.0
        %3969 = vmatpush1.msra.mxu0 0.0
        %3970 = vmatprep.subr.mxu0 0.0
        %3971 = vmatpush1.msra.mxu0 0.0
        %3972 = vmatprep.subr.mxu0 0.0
        %3973 = vmatpush1.msra.mxu0 0.0
        %3974 = vmatprep.subr.mxu0 0.0
        %3975 = vmatpush1.msra.mxu0 0.0
        %3976 = vmatprep.subr.mxu0 0.0
        %3977 = vmatpush1.msra.mxu0 0.0
        %3978 = vmatprep.mubr.f32.mxu0 0.0
        %3979 = vmatmul.mubr.f32.gmra.mrb[0].mxu0 %v3912
        %v3980 = vpop.f32.mrb[0].mxu0
        %v3981 = vadd.f32 0.0, %v3980
        %v3982 = vpop.f32.mrb[0].mxu0
        %3983 = vdwg.mxu0
        %v3984 = vadd.f32 %v3894, %v3981
        %s3985 = scalar_lea.vmem [#allocation7], 768
        %v3986 = vld [vmem:[%s3985] sm:$0xff]
        %v3987 = vld [vmem:[%s3985 + $0x8] sm:$0xff]
        %v3988 = vld [vmem:[%s3985 + $0x10] sm:$0xff]
        %v3989 = vld [vmem:[%s3985 + $0x18] sm:$0xff]
        %v3990 = vld [vmem:[%s3985 + $0x20] sm:$0xff]
        %v3991 = vld [vmem:[%s3985 + $0x28] sm:$0xff]
        %v3992 = vld [vmem:[%s3985 + $0x30] sm:$0xff]
        %v3993 = vld [vmem:[%s3985 + $0x38] sm:$0xff]
        %v3994 = vld [vmem:[%s3985 + $0x40] sm:$0xff]
        %v3995 = vld [vmem:[%s3985 + $0x48] sm:$0xff]
        %v3996 = vld [vmem:[%s3985 + $0x50] sm:$0xff]
        %v3997 = vld [vmem:[%s3985 + $0x58] sm:$0xff]
        %v3998 = vld [vmem:[%s3985 + $0x60] sm:$0xff]
        %v3999 = vld [vmem:[%s3985 + $0x68] sm:$0xff]
        %v4000 = vld [vmem:[%s3985 + $0x70] sm:$0xff]
        %v4001 = vld [vmem:[%s3985 + $0x78] sm:$0xff]
        %v4002 = vrot.slane %v3447, 6
        %4004 = vmatprep.subr.mxu0 0.0
        %4005 = vmatpush1.msra.mxu0 %v3986
        %4006 = vmatprep.subr.mxu0 0.0
        %4007 = vmatpush1.msra.mxu0 %v3987
        %4008 = vmatprep.subr.mxu0 0.0
        %4009 = vmatpush1.msra.mxu0 %v3988
        %4010 = vmatprep.subr.mxu0 0.0
        %4011 = vmatpush1.msra.mxu0 %v3989
        %4012 = vmatprep.subr.mxu0 0.0
        %4013 = vmatpush1.msra.mxu0 %v3990
        %4014 = vmatprep.subr.mxu0 0.0
        %4015 = vmatpush1.msra.mxu0 %v3991
        %4016 = vmatprep.subr.mxu0 0.0
        %4017 = vmatpush1.msra.mxu0 %v3992
        %4018 = vmatprep.subr.mxu0 0.0
        %4019 = vmatpush1.msra.mxu0 %v3993
        %4020 = vmatprep.subr.mxu0 0.0
        %4021 = vmatpush1.msra.mxu0 %v3994
        %4022 = vmatprep.subr.mxu0 0.0
        %4023 = vmatpush1.msra.mxu0 %v3995
        %4024 = vmatprep.subr.mxu0 0.0
        %4025 = vmatpush1.msra.mxu0 %v3996
        %4026 = vmatprep.subr.mxu0 0.0
        %4027 = vmatpush1.msra.mxu0 %v3997
        %4028 = vmatprep.subr.mxu0 0.0
        %4029 = vmatpush1.msra.mxu0 %v3998
        %4030 = vmatprep.subr.mxu0 0.0
        %4031 = vmatpush1.msra.mxu0 %v3999
        %4032 = vmatprep.subr.mxu0 0.0
        %4033 = vmatpush1.msra.mxu0 %v4000
        %4034 = vmatprep.subr.mxu0 0.0
        %4035 = vmatpush1.msra.mxu0 %v4001
        %4036 = vmatprep.subr.mxu0 0.0
        %4037 = vmatpush1.msra.mxu0 0.0
        %4038 = vmatprep.subr.mxu0 0.0
        %4039 = vmatpush1.msra.mxu0 0.0
        %4040 = vmatprep.subr.mxu0 0.0
        %4041 = vmatpush1.msra.mxu0 0.0
        %4042 = vmatprep.subr.mxu0 0.0
        %4043 = vmatpush1.msra.mxu0 0.0
        %4044 = vmatprep.subr.mxu0 0.0
        %4045 = vmatpush1.msra.mxu0 0.0
        %4046 = vmatprep.subr.mxu0 0.0
        %4047 = vmatpush1.msra.mxu0 0.0
        %4048 = vmatprep.subr.mxu0 0.0
        %4049 = vmatpush1.msra.mxu0 0.0
        %4050 = vmatprep.subr.mxu0 0.0
        %4051 = vmatpush1.msra.mxu0 0.0
        %4052 = vmatprep.subr.mxu0 0.0
        %4053 = vmatpush1.msra.mxu0 0.0
        %4054 = vmatprep.subr.mxu0 0.0
        %4055 = vmatpush1.msra.mxu0 0.0
        %4056 = vmatprep.subr.mxu0 0.0
        %4057 = vmatpush1.msra.mxu0 0.0
        %4058 = vmatprep.subr.mxu0 0.0
        %4059 = vmatpush1.msra.mxu0 0.0
        %4060 = vmatprep.subr.mxu0 0.0
        %4061 = vmatpush1.msra.mxu0 0.0
        %4062 = vmatprep.subr.mxu0 0.0
        %4063 = vmatpush1.msra.mxu0 0.0
        %4064 = vmatprep.subr.mxu0 0.0
        %4065 = vmatpush1.msra.mxu0 0.0
        %4066 = vmatprep.subr.mxu0 0.0
        %4067 = vmatpush1.msra.mxu0 0.0
        %4068 = vmatprep.mubr.f32.mxu0 0.0
        %4069 = vmatmul.mubr.f32.gmra.mrb[0].mxu0 %v4002
        %v4070 = vpop.f32.mrb[0].mxu0
        %v4071 = vadd.f32 0.0, %v4070
        %v4072 = vpop.f32.mrb[0].mxu0
        %4073 = vdwg.mxu0
        %v4074 = vadd.f32 %v3984, %v4071
        %s4075 = scalar_lea.vmem [#allocation7], 896
        %v4076 = vld [vmem:[%s4075] sm:$0xff]
        %v4077 = vld [vmem:[%s4075 + $0x8] sm:$0xff]
        %v4078 = vld [vmem:[%s4075 + $0x10] sm:$0xff]
        %v4079 = vld [vmem:[%s4075 + $0x18] sm:$0xff]
        %v4080 = vld [vmem:[%s4075 + $0x20] sm:$0xff]
        %v4081 = vld [vmem:[%s4075 + $0x28] sm:$0xff]
        %v4082 = vld [vmem:[%s4075 + $0x30] sm:$0xff]
        %v4083 = vld [vmem:[%s4075 + $0x38] sm:$0xff]
        %v4084 = vld [vmem:[%s4075 + $0x40] sm:$0xff]
        %v4085 = vld [vmem:[%s4075 + $0x48] sm:$0xff]
        %v4086 = vld [vmem:[%s4075 + $0x50] sm:$0xff]
        %v4087 = vld [vmem:[%s4075 + $0x58] sm:$0xff]
        %v4088 = vld [vmem:[%s4075 + $0x60] sm:$0xff]
        %v4089 = vld [vmem:[%s4075 + $0x68] sm:$0xff]
        %v4090 = vld [vmem:[%s4075 + $0x70] sm:$0xff]
        %v4091 = vld [vmem:[%s4075 + $0x78] sm:$0xff]
        %v4092 = vrot.slane %v3447, 7
        %4094 = vmatprep.subr.mxu0 0.0
        %4095 = vmatpush1.msra.mxu0 %v4076
        %4096 = vmatprep.subr.mxu0 0.0
        %4097 = vmatpush1.msra.mxu0 %v4077
        %4098 = vmatprep.subr.mxu0 0.0
        %4099 = vmatpush1.msra.mxu0 %v4078
        %4100 = vmatprep.subr.mxu0 0.0
        %4101 = vmatpush1.msra.mxu0 %v4079
        %4102 = vmatprep.subr.mxu0 0.0
        %4103 = vmatpush1.msra.mxu0 %v4080
        %4104 = vmatprep.subr.mxu0 0.0
        %4105 = vmatpush1.msra.mxu0 %v4081
        %4106 = vmatprep.subr.mxu0 0.0
        %4107 = vmatpush1.msra.mxu0 %v4082
        %4108 = vmatprep.subr.mxu0 0.0
        %4109 = vmatpush1.msra.mxu0 %v4083
        %4110 = vmatprep.subr.mxu0 0.0
        %4111 = vmatpush1.msra.mxu0 %v4084
        %4112 = vmatprep.subr.mxu0 0.0
        %4113 = vmatpush1.msra.mxu0 %v4085
        %4114 = vmatprep.subr.mxu0 0.0
        %4115 = vmatpush1.msra.mxu0 %v4086
        %4116 = vmatprep.subr.mxu0 0.0
        %4117 = vmatpush1.msra.mxu0 %v4087
        %4118 = vmatprep.subr.mxu0 0.0
        %4119 = vmatpush1.msra.mxu0 %v4088
        %4120 = vmatprep.subr.mxu0 0.0
        %4121 = vmatpush1.msra.mxu0 %v4089
        %4122 = vmatprep.subr.mxu0 0.0
        %4123 = vmatpush1.msra.mxu0 %v4090
        %4124 = vmatprep.subr.mxu0 0.0
        %4125 = vmatpush1.msra.mxu0 %v4091
        %4126 = vmatprep.subr.mxu0 0.0
        %4127 = vmatpush1.msra.mxu0 0.0
        %4128 = vmatprep.subr.mxu0 0.0
        %4129 = vmatpush1.msra.mxu0 0.0
        %4130 = vmatprep.subr.mxu0 0.0
        %4131 = vmatpush1.msra.mxu0 0.0
        %4132 = vmatprep.subr.mxu0 0.0
        %4133 = vmatpush1.msra.mxu0 0.0
        %4134 = vmatprep.subr.mxu0 0.0
        %4135 = vmatpush1.msra.mxu0 0.0
        %4136 = vmatprep.subr.mxu0 0.0
        %4137 = vmatpush1.msra.mxu0 0.0
        %4138 = vmatprep.subr.mxu0 0.0
        %4139 = vmatpush1.msra.mxu0 0.0
        %4140 = vmatprep.subr.mxu0 0.0
        %4141 = vmatpush1.msra.mxu0 0.0
        %4142 = vmatprep.subr.mxu0 0.0
        %4143 = vmatpush1.msra.mxu0 0.0
        %4144 = vmatprep.subr.mxu0 0.0
        %4145 = vmatpush1.msra.mxu0 0.0
        %4146 = vmatprep.subr.mxu0 0.0
        %4147 = vmatpush1.msra.mxu0 0.0
        %4148 = vmatprep.subr.mxu0 0.0
        %4149 = vmatpush1.msra.mxu0 0.0
        %4150 = vmatprep.subr.mxu0 0.0
        %4151 = vmatpush1.msra.mxu0 0.0
        %4152 = vmatprep.subr.mxu0 0.0
        %4153 = vmatpush1.msra.mxu0 0.0
        %4154 = vmatprep.subr.mxu0 0.0
        %4155 = vmatpush1.msra.mxu0 0.0
        %4156 = vmatprep.subr.mxu0 0.0
        %4157 = vmatpush1.msra.mxu0 0.0
        %4158 = vmatprep.mubr.f32.mxu0 0.0
        %4159 = vmatmul.mubr.f32.gmra.mrb[0].mxu0 %v4092
        %v4160 = vpop.f32.mrb[0].mxu0
        %v4161 = vadd.f32 0.0, %v4160
        %v4162 = vpop.f32.mrb[0].mxu0
        %4163 = vdwg.mxu0
        %v4164 = vadd.f32 %v4074, %v4161
        %s4165 = scalar_lea.vmem [#allocation7], 1024
        %v4166 = vld [vmem:[%s4165] sm:$0xff]
        %v4167 = vld [vmem:[%s4165 + $0x8] sm:$0xff]
        %v4168 = vld [vmem:[%s4165 + $0x10] sm:$0xff]
        %v4169 = vld [vmem:[%s4165 + $0x18] sm:$0xff]
        %v4170 = vld [vmem:[%s4165 + $0x20] sm:$0xff]
        %v4171 = vld [vmem:[%s4165 + $0x28] sm:$0xff]
        %v4172 = vld [vmem:[%s4165 + $0x30] sm:$0xff]
        %v4173 = vld [vmem:[%s4165 + $0x38] sm:$0xff]
        %v4174 = vld [vmem:[%s4165 + $0x40] sm:$0xff]
        %v4175 = vld [vmem:[%s4165 + $0x48] sm:$0xff]
        %v4176 = vld [vmem:[%s4165 + $0x50] sm:$0xff]
        %v4177 = vld [vmem:[%s4165 + $0x58] sm:$0xff]
        %v4178 = vld [vmem:[%s4165 + $0x60] sm:$0xff]
        %v4179 = vld [vmem:[%s4165 + $0x68] sm:$0xff]
        %v4180 = vld [vmem:[%s4165 + $0x70] sm:$0xff]
        %v4181 = vld [vmem:[%s4165 + $0x78] sm:$0xff]
        %4182 = vmatprep.subr.mxu0 0.0
        %4183 = vmatpush1.msra.mxu0 %v4166
        %4184 = vmatprep.subr.mxu0 0.0
        %4185 = vmatpush1.msra.mxu0 %v4167
        %4186 = vmatprep.subr.mxu0 0.0
        %4187 = vmatpush1.msra.mxu0 %v4168
        %4188 = vmatprep.subr.mxu0 0.0
        %4189 = vmatpush1.msra.mxu0 %v4169
        %4190 = vmatprep.subr.mxu0 0.0
        %4191 = vmatpush1.msra.mxu0 %v4170
        %4192 = vmatprep.subr.mxu0 0.0
        %4193 = vmatpush1.msra.mxu0 %v4171
        %4194 = vmatprep.subr.mxu0 0.0
        %4195 = vmatpush1.msra.mxu0 %v4172
        %4196 = vmatprep.subr.mxu0 0.0
        %4197 = vmatpush1.msra.mxu0 %v4173
        %4198 = vmatprep.subr.mxu0 0.0
        %4199 = vmatpush1.msra.mxu0 %v4174
        %4200 = vmatprep.subr.mxu0 0.0
        %4201 = vmatpush1.msra.mxu0 %v4175
        %4202 = vmatprep.subr.mxu0 0.0
        %4203 = vmatpush1.msra.mxu0 %v4176
        %4204 = vmatprep.subr.mxu0 0.0
        %4205 = vmatpush1.msra.mxu0 %v4177
        %4206 = vmatprep.subr.mxu0 0.0
        %4207 = vmatpush1.msra.mxu0 %v4178
        %4208 = vmatprep.subr.mxu0 0.0
        %4209 = vmatpush1.msra.mxu0 %v4179
        %4210 = vmatprep.subr.mxu0 0.0
        %4211 = vmatpush1.msra.mxu0 %v4180
        %4212 = vmatprep.subr.mxu0 0.0
        %4213 = vmatpush1.msra.mxu0 %v4181
        %4214 = vmatprep.subr.mxu0 0.0
        %4215 = vmatpush1.msra.mxu0 0.0
        %4216 = vmatprep.subr.mxu0 0.0
        %4217 = vmatpush1.msra.mxu0 0.0
        %4218 = vmatprep.subr.mxu0 0.0
        %4219 = vmatpush1.msra.mxu0 0.0
        %4220 = vmatprep.subr.mxu0 0.0
        %4221 = vmatpush1.msra.mxu0 0.0
        %4222 = vmatprep.subr.mxu0 0.0
        %4223 = vmatpush1.msra.mxu0 0.0
        %4224 = vmatprep.subr.mxu0 0.0
        %4225 = vmatpush1.msra.mxu0 0.0
        %4226 = vmatprep.subr.mxu0 0.0
        %4227 = vmatpush1.msra.mxu0 0.0
        %4228 = vmatprep.subr.mxu0 0.0
        %4229 = vmatpush1.msra.mxu0 0.0
        %4230 = vmatprep.subr.mxu0 0.0
        %4231 = vmatpush1.msra.mxu0 0.0
        %4232 = vmatprep.subr.mxu0 0.0
        %4233 = vmatpush1.msra.mxu0 0.0
        %4234 = vmatprep.subr.mxu0 0.0
        %4235 = vmatpush1.msra.mxu0 0.0
        %4236 = vmatprep.subr.mxu0 0.0
        %4237 = vmatpush1.msra.mxu0 0.0
        %4238 = vmatprep.subr.mxu0 0.0
        %4239 = vmatpush1.msra.mxu0 0.0
        %4240 = vmatprep.subr.mxu0 0.0
        %4241 = vmatpush1.msra.mxu0 0.0
        %4242 = vmatprep.subr.mxu0 0.0
        %4243 = vmatpush1.msra.mxu0 0.0
        %4244 = vmatprep.subr.mxu0 0.0
        %4245 = vmatpush1.msra.mxu0 0.0
        %4246 = vmatprep.mubr.f32.mxu0 0.0
        %4247 = vmatmul.mubr.f32.gmra.mrb[0].mxu0 %v3448
        %v4248 = vpop.f32.mrb[0].mxu0
        %v4249 = vadd.f32 0.0, %v4248
        %v4250 = vpop.f32.mrb[0].mxu0
        %4251 = vdwg.mxu0
        %v4252 = vadd.f32 %v4164, %v4249
        %s4253 = scalar_lea.vmem [#allocation7], 1152
        %v4254 = vld [vmem:[%s4253] sm:$0xff]
        %v4255 = vld [vmem:[%s4253 + $0x8] sm:$0xff]
        %v4256 = vld [vmem:[%s4253 + $0x10] sm:$0xff]
        %v4257 = vld [vmem:[%s4253 + $0x18] sm:$0xff]
        %v4258 = vld [vmem:[%s4253 + $0x20] sm:$0xff]
        %v4259 = vld [vmem:[%s4253 + $0x28] sm:$0xff]
        %v4260 = vld [vmem:[%s4253 + $0x30] sm:$0xff]
        %v4261 = vld [vmem:[%s4253 + $0x38] sm:$0xff]
        %v4262 = vld [vmem:[%s4253 + $0x40] sm:$0xff]
        %v4263 = vld [vmem:[%s4253 + $0x48] sm:$0xff]
        %v4264 = vld [vmem:[%s4253 + $0x50] sm:$0xff]
        %v4265 = vld [vmem:[%s4253 + $0x58] sm:$0xff]
        %v4266 = vld [vmem:[%s4253 + $0x60] sm:$0xff]
        %v4267 = vld [vmem:[%s4253 + $0x68] sm:$0xff]
        %v4268 = vld [vmem:[%s4253 + $0x70] sm:$0xff]
        %v4269 = vld [vmem:[%s4253 + $0x78] sm:$0xff]
        %v4271 = vrot.slane %v3448, 1
        %4273 = vmatprep.subr.mxu0 0.0
        %4274 = vmatpush1.msra.mxu0 %v4254
        %4275 = vmatprep.subr.mxu0 0.0
        %4276 = vmatpush1.msra.mxu0 %v4255
        %4277 = vmatprep.subr.mxu0 0.0
        %4278 = vmatpush1.msra.mxu0 %v4256
        %4279 = vmatprep.subr.mxu0 0.0
        %4280 = vmatpush1.msra.mxu0 %v4257
        %4281 = vmatprep.subr.mxu0 0.0
        %4282 = vmatpush1.msra.mxu0 %v4258
        %4283 = vmatprep.subr.mxu0 0.0
        %4284 = vmatpush1.msra.mxu0 %v4259
        %4285 = vmatprep.subr.mxu0 0.0
        %4286 = vmatpush1.msra.mxu0 %v4260
        %4287 = vmatprep.subr.mxu0 0.0
        %4288 = vmatpush1.msra.mxu0 %v4261
        %4289 = vmatprep.subr.mxu0 0.0
        %4290 = vmatpush1.msra.mxu0 %v4262
        %4291 = vmatprep.subr.mxu0 0.0
        %4292 = vmatpush1.msra.mxu0 %v4263
        %4293 = vmatprep.subr.mxu0 0.0
        %4294 = vmatpush1.msra.mxu0 %v4264
        %4295 = vmatprep.subr.mxu0 0.0
        %4296 = vmatpush1.msra.mxu0 %v4265
        %4297 = vmatprep.subr.mxu0 0.0
        %4298 = vmatpush1.msra.mxu0 %v4266
        %4299 = vmatprep.subr.mxu0 0.0
        %4300 = vmatpush1.msra.mxu0 %v4267
        %4301 = vmatprep.subr.mxu0 0.0
        %4302 = vmatpush1.msra.mxu0 %v4268
        %4303 = vmatprep.subr.mxu0 0.0
        %4304 = vmatpush1.msra.mxu0 %v4269
        %4305 = vmatprep.subr.mxu0 0.0
        %4306 = vmatpush1.msra.mxu0 0.0
        %4307 = vmatprep.subr.mxu0 0.0
        %4308 = vmatpush1.msra.mxu0 0.0
        %4309 = vmatprep.subr.mxu0 0.0
        %4310 = vmatpush1.msra.mxu0 0.0
        %4311 = vmatprep.subr.mxu0 0.0
        %4312 = vmatpush1.msra.mxu0 0.0
        %4313 = vmatprep.subr.mxu0 0.0
        %4314 = vmatpush1.msra.mxu0 0.0
        %4315 = vmatprep.subr.mxu0 0.0
        %4316 = vmatpush1.msra.mxu0 0.0
        %4317 = vmatprep.subr.mxu0 0.0
        %4318 = vmatpush1.msra.mxu0 0.0
        %4319 = vmatprep.subr.mxu0 0.0
        %4320 = vmatpush1.msra.mxu0 0.0
        %4321 = vmatprep.subr.mxu0 0.0
        %4322 = vmatpush1.msra.mxu0 0.0
        %4323 = vmatprep.subr.mxu0 0.0
        %4324 = vmatpush1.msra.mxu0 0.0
        %4325 = vmatprep.subr.mxu0 0.0
        %4326 = vmatpush1.msra.mxu0 0.0
        %4327 = vmatprep.subr.mxu0 0.0
        %4328 = vmatpush1.msra.mxu0 0.0
        %4329 = vmatprep.subr.mxu0 0.0
        %4330 = vmatpush1.msra.mxu0 0.0
        %4331 = vmatprep.subr.mxu0 0.0
        %4332 = vmatpush1.msra.mxu0 0.0
        %4333 = vmatprep.subr.mxu0 0.0
        %4334 = vmatpush1.msra.mxu0 0.0
        %4335 = vmatprep.subr.mxu0 0.0
        %4336 = vmatpush1.msra.mxu0 0.0
        %4337 = vmatprep.mubr.f32.mxu0 0.0
        %4338 = vmatmul.mubr.f32.gmra.mrb[0].mxu0 %v4271
        %v4339 = vpop.f32.mrb[0].mxu0
        %v4340 = vadd.f32 0.0, %v4339
        %v4341 = vpop.f32.mrb[0].mxu0
        %4342 = vdwg.mxu0
        %v4343 = vadd.f32 %v4252, %v4340
        %s4344 = scalar_lea.vmem [#allocation7], 1280
        %v4345 = vld [vmem:[%s4344] sm:$0xff]
        %v4346 = vld [vmem:[%s4344 + $0x8] sm:$0xff]
        %v4347 = vld [vmem:[%s4344 + $0x10] sm:$0xff]
        %v4348 = vld [vmem:[%s4344 + $0x18] sm:$0xff]
        %v4349 = vld [vmem:[%s4344 + $0x20] sm:$0xff]
        %v4350 = vld [vmem:[%s4344 + $0x28] sm:$0xff]
        %v4351 = vld [vmem:[%s4344 + $0x30] sm:$0xff]
        %v4352 = vld [vmem:[%s4344 + $0x38] sm:$0xff]
        %v4353 = vld [vmem:[%s4344 + $0x40] sm:$0xff]
        %v4354 = vld [vmem:[%s4344 + $0x48] sm:$0xff]
        %v4355 = vld [vmem:[%s4344 + $0x50] sm:$0xff]
        %v4356 = vld [vmem:[%s4344 + $0x58] sm:$0xff]
        %v4357 = vld [vmem:[%s4344 + $0x60] sm:$0xff]
        %v4358 = vld [vmem:[%s4344 + $0x68] sm:$0xff]
        %v4359 = vld [vmem:[%s4344 + $0x70] sm:$0xff]
        %v4360 = vld [vmem:[%s4344 + $0x78] sm:$0xff]
        %v4361 = vrot.slane %v3448, 2
        %4363 = vmatprep.subr.mxu0 0.0
        %4364 = vmatpush1.msra.mxu0 %v4345
        %4365 = vmatprep.subr.mxu0 0.0
        %4366 = vmatpush1.msra.mxu0 %v4346
        %4367 = vmatprep.subr.mxu0 0.0
        %4368 = vmatpush1.msra.mxu0 %v4347
        %4369 = vmatprep.subr.mxu0 0.0
        %4370 = vmatpush1.msra.mxu0 %v4348
        %4371 = vmatprep.subr.mxu0 0.0
        %4372 = vmatpush1.msra.mxu0 %v4349
        %4373 = vmatprep.subr.mxu0 0.0
        %4374 = vmatpush1.msra.mxu0 %v4350
        %4375 = vmatprep.subr.mxu0 0.0
        %4376 = vmatpush1.msra.mxu0 %v4351
        %4377 = vmatprep.subr.mxu0 0.0
        %4378 = vmatpush1.msra.mxu0 %v4352
        %4379 = vmatprep.subr.mxu0 0.0
        %4380 = vmatpush1.msra.mxu0 %v4353
        %4381 = vmatprep.subr.mxu0 0.0
        %4382 = vmatpush1.msra.mxu0 %v4354
        %4383 = vmatprep.subr.mxu0 0.0
        %4384 = vmatpush1.msra.mxu0 %v4355
        %4385 = vmatprep.subr.mxu0 0.0
        %4386 = vmatpush1.msra.mxu0 %v4356
        %4387 = vmatprep.subr.mxu0 0.0
        %4388 = vmatpush1.msra.mxu0 %v4357
        %4389 = vmatprep.subr.mxu0 0.0
        %4390 = vmatpush1.msra.mxu0 %v4358
        %4391 = vmatprep.subr.mxu0 0.0
        %4392 = vmatpush1.msra.mxu0 %v4359
        %4393 = vmatprep.subr.mxu0 0.0
        %4394 = vmatpush1.msra.mxu0 %v4360
        %4395 = vmatprep.subr.mxu0 0.0
        %4396 = vmatpush1.msra.mxu0 0.0
        %4397 = vmatprep.subr.mxu0 0.0
        %4398 = vmatpush1.msra.mxu0 0.0
        %4399 = vmatprep.subr.mxu0 0.0
        %4400 = vmatpush1.msra.mxu0 0.0
        %4401 = vmatprep.subr.mxu0 0.0
        %4402 = vmatpush1.msra.mxu0 0.0
        %4403 = vmatprep.subr.mxu0 0.0
        %4404 = vmatpush1.msra.mxu0 0.0
        %4405 = vmatprep.subr.mxu0 0.0
        %4406 = vmatpush1.msra.mxu0 0.0
        %4407 = vmatprep.subr.mxu0 0.0
        %4408 = vmatpush1.msra.mxu0 0.0
        %4409 = vmatprep.subr.mxu0 0.0
        %4410 = vmatpush1.msra.mxu0 0.0
        %4411 = vmatprep.subr.mxu0 0.0
        %4412 = vmatpush1.msra.mxu0 0.0
        %4413 = vmatprep.subr.mxu0 0.0
        %4414 = vmatpush1.msra.mxu0 0.0
        %4415 = vmatprep.subr.mxu0 0.0
        %4416 = vmatpush1.msra.mxu0 0.0
        %4417 = vmatprep.subr.mxu0 0.0
        %4418 = vmatpush1.msra.mxu0 0.0
        %4419 = vmatprep.subr.mxu0 0.0
        %4420 = vmatpush1.msra.mxu0 0.0
        %4421 = vmatprep.subr.mxu0 0.0
        %4422 = vmatpush1.msra.mxu0 0.0
        %4423 = vmatprep.subr.mxu0 0.0
        %4424 = vmatpush1.msra.mxu0 0.0
        %4425 = vmatprep.subr.mxu0 0.0
        %4426 = vmatpush1.msra.mxu0 0.0
        %4427 = vmatprep.mubr.f32.mxu0 0.0
        %4428 = vmatmul.mubr.f32.gmra.mrb[0].mxu0 %v4361
        %v4429 = vpop.f32.mrb[0].mxu0
        %v4430 = vadd.f32 0.0, %v4429
        %v4431 = vpop.f32.mrb[0].mxu0
        %4432 = vdwg.mxu0
        %v4433 = vadd.f32 %v4343, %v4430
        %s4434 = scalar_lea.vmem [#allocation7], 1408
        %v4435 = vld [vmem:[%s4434] sm:$0xff]
        %v4436 = vld [vmem:[%s4434 + $0x8] sm:$0xff]
        %v4437 = vld [vmem:[%s4434 + $0x10] sm:$0xff]
        %v4438 = vld [vmem:[%s4434 + $0x18] sm:$0xff]
        %v4439 = vld [vmem:[%s4434 + $0x20] sm:$0xff]
        %v4440 = vld [vmem:[%s4434 + $0x28] sm:$0xff]
        %v4441 = vld [vmem:[%s4434 + $0x30] sm:$0xff]
        %v4442 = vld [vmem:[%s4434 + $0x38] sm:$0xff]
        %v4443 = vld [vmem:[%s4434 + $0x40] sm:$0xff]
        %v4444 = vld [vmem:[%s4434 + $0x48] sm:$0xff]
        %v4445 = vld [vmem:[%s4434 + $0x50] sm:$0xff]
        %v4446 = vld [vmem:[%s4434 + $0x58] sm:$0xff]
        %v4447 = vld [vmem:[%s4434 + $0x60] sm:$0xff]
        %v4448 = vld [vmem:[%s4434 + $0x68] sm:$0xff]
        %v4449 = vld [vmem:[%s4434 + $0x70] sm:$0xff]
        %v4450 = vld [vmem:[%s4434 + $0x78] sm:$0xff]
        %v4451 = vrot.slane %v3448, 3
        %4453 = vmatprep.subr.mxu0 0.0
        %4454 = vmatpush1.msra.mxu0 %v4435
        %4455 = vmatprep.subr.mxu0 0.0
        %4456 = vmatpush1.msra.mxu0 %v4436
        %4457 = vmatprep.subr.mxu0 0.0
        %4458 = vmatpush1.msra.mxu0 %v4437
        %4459 = vmatprep.subr.mxu0 0.0
        %4460 = vmatpush1.msra.mxu0 %v4438
        %4461 = vmatprep.subr.mxu0 0.0
        %4462 = vmatpush1.msra.mxu0 %v4439
        %4463 = vmatprep.subr.mxu0 0.0
        %4464 = vmatpush1.msra.mxu0 %v4440
        %4465 = vmatprep.subr.mxu0 0.0
        %4466 = vmatpush1.msra.mxu0 %v4441
        %4467 = vmatprep.subr.mxu0 0.0
        %4468 = vmatpush1.msra.mxu0 %v4442
        %4469 = vmatprep.subr.mxu0 0.0
        %4470 = vmatpush1.msra.mxu0 %v4443
        %4471 = vmatprep.subr.mxu0 0.0
        %4472 = vmatpush1.msra.mxu0 %v4444
        %4473 = vmatprep.subr.mxu0 0.0
        %4474 = vmatpush1.msra.mxu0 %v4445
        %4475 = vmatprep.subr.mxu0 0.0
        %4476 = vmatpush1.msra.mxu0 %v4446
        %4477 = vmatprep.subr.mxu0 0.0
        %4478 = vmatpush1.msra.mxu0 %v4447
        %4479 = vmatprep.subr.mxu0 0.0
        %4480 = vmatpush1.msra.mxu0 %v4448
        %4481 = vmatprep.subr.mxu0 0.0
        %4482 = vmatpush1.msra.mxu0 %v4449
        %4483 = vmatprep.subr.mxu0 0.0
        %4484 = vmatpush1.msra.mxu0 %v4450
        %4485 = vmatprep.subr.mxu0 0.0
        %4486 = vmatpush1.msra.mxu0 0.0
        %4487 = vmatprep.subr.mxu0 0.0
        %4488 = vmatpush1.msra.mxu0 0.0
        %4489 = vmatprep.subr.mxu0 0.0
        %4490 = vmatpush1.msra.mxu0 0.0
        %4491 = vmatprep.subr.mxu0 0.0
        %4492 = vmatpush1.msra.mxu0 0.0
        %4493 = vmatprep.subr.mxu0 0.0
        %4494 = vmatpush1.msra.mxu0 0.0
        %4495 = vmatprep.subr.mxu0 0.0
        %4496 = vmatpush1.msra.mxu0 0.0
        %4497 = vmatprep.subr.mxu0 0.0
        %4498 = vmatpush1.msra.mxu0 0.0
        %4499 = vmatprep.subr.mxu0 0.0
        %4500 = vmatpush1.msra.mxu0 0.0
        %4501 = vmatprep.subr.mxu0 0.0
        %4502 = vmatpush1.msra.mxu0 0.0
        %4503 = vmatprep.subr.mxu0 0.0
        %4504 = vmatpush1.msra.mxu0 0.0
        %4505 = vmatprep.subr.mxu0 0.0
        %4506 = vmatpush1.msra.mxu0 0.0
        %4507 = vmatprep.subr.mxu0 0.0
        %4508 = vmatpush1.msra.mxu0 0.0
        %4509 = vmatprep.subr.mxu0 0.0
        %4510 = vmatpush1.msra.mxu0 0.0
        %4511 = vmatprep.subr.mxu0 0.0
        %4512 = vmatpush1.msra.mxu0 0.0
        %4513 = vmatprep.subr.mxu0 0.0
        %4514 = vmatpush1.msra.mxu0 0.0
        %4515 = vmatprep.subr.mxu0 0.0
        %4516 = vmatpush1.msra.mxu0 0.0
        %4517 = vmatprep.mubr.f32.mxu0 0.0
        %4518 = vmatmul.mubr.f32.gmra.mrb[0].mxu0 %v4451
        %v4519 = vpop.f32.mrb[0].mxu0
        %v4520 = vadd.f32 0.0, %v4519
        %v4521 = vpop.f32.mrb[0].mxu0
        %4522 = vdwg.mxu0
        %v4523 = vadd.f32 %v4433, %v4520
        %s4524 = scalar_lea.vmem [#allocation7], 1536
        %v4525 = vld [vmem:[%s4524] sm:$0xff]
        %v4526 = vld [vmem:[%s4524 + $0x8] sm:$0xff]
        %v4527 = vld [vmem:[%s4524 + $0x10] sm:$0xff]
        %v4528 = vld [vmem:[%s4524 + $0x18] sm:$0xff]
        %v4529 = vld [vmem:[%s4524 + $0x20] sm:$0xff]
        %v4530 = vld [vmem:[%s4524 + $0x28] sm:$0xff]
        %v4531 = vld [vmem:[%s4524 + $0x30] sm:$0xff]
        %v4532 = vld [vmem:[%s4524 + $0x38] sm:$0xff]
        %v4533 = vld [vmem:[%s4524 + $0x40] sm:$0xff]
        %v4534 = vld [vmem:[%s4524 + $0x48] sm:$0xff]
        %v4535 = vld [vmem:[%s4524 + $0x50] sm:$0xff]
        %v4536 = vld [vmem:[%s4524 + $0x58] sm:$0xff]
        %v4537 = vld [vmem:[%s4524 + $0x60] sm:$0xff]
        %v4538 = vld [vmem:[%s4524 + $0x68] sm:$0xff]
        %v4539 = vld [vmem:[%s4524 + $0x70] sm:$0xff]
        %v4540 = vld [vmem:[%s4524 + $0x78] sm:$0xff]
        %v4541 = vrot.slane %v3448, 4
        %4543 = vmatprep.subr.mxu0 0.0
        %4544 = vmatpush1.msra.mxu0 %v4525
        %4545 = vmatprep.subr.mxu0 0.0
        %4546 = vmatpush1.msra.mxu0 %v4526
        %4547 = vmatprep.subr.mxu0 0.0
        %4548 = vmatpush1.msra.mxu0 %v4527
        %4549 = vmatprep.subr.mxu0 0.0
        %4550 = vmatpush1.msra.mxu0 %v4528
        %4551 = vmatprep.subr.mxu0 0.0
        %4552 = vmatpush1.msra.mxu0 %v4529
        %4553 = vmatprep.subr.mxu0 0.0
        %4554 = vmatpush1.msra.mxu0 %v4530
        %4555 = vmatprep.subr.mxu0 0.0
        %4556 = vmatpush1.msra.mxu0 %v4531
        %4557 = vmatprep.subr.mxu0 0.0
        %4558 = vmatpush1.msra.mxu0 %v4532
        %4559 = vmatprep.subr.mxu0 0.0
        %4560 = vmatpush1.msra.mxu0 %v4533
        %4561 = vmatprep.subr.mxu0 0.0
        %4562 = vmatpush1.msra.mxu0 %v4534
        %4563 = vmatprep.subr.mxu0 0.0
        %4564 = vmatpush1.msra.mxu0 %v4535
        %4565 = vmatprep.subr.mxu0 0.0
        %4566 = vmatpush1.msra.mxu0 %v4536
        %4567 = vmatprep.subr.mxu0 0.0
        %4568 = vmatpush1.msra.mxu0 %v4537
        %4569 = vmatprep.subr.mxu0 0.0
        %4570 = vmatpush1.msra.mxu0 %v4538
        %4571 = vmatprep.subr.mxu0 0.0
        %4572 = vmatpush1.msra.mxu0 %v4539
        %4573 = vmatprep.subr.mxu0 0.0
        %4574 = vmatpush1.msra.mxu0 %v4540
        %4575 = vmatprep.subr.mxu0 0.0
        %4576 = vmatpush1.msra.mxu0 0.0
        %4577 = vmatprep.subr.mxu0 0.0
        %4578 = vmatpush1.msra.mxu0 0.0
        %4579 = vmatprep.subr.mxu0 0.0
        %4580 = vmatpush1.msra.mxu0 0.0
        %4581 = vmatprep.subr.mxu0 0.0
        %4582 = vmatpush1.msra.mxu0 0.0
        %4583 = vmatprep.subr.mxu0 0.0
        %4584 = vmatpush1.msra.mxu0 0.0
        %4585 = vmatprep.subr.mxu0 0.0
        %4586 = vmatpush1.msra.mxu0 0.0
        %4587 = vmatprep.subr.mxu0 0.0
        %4588 = vmatpush1.msra.mxu0 0.0
        %4589 = vmatprep.subr.mxu0 0.0
        %4590 = vmatpush1.msra.mxu0 0.0
        %4591 = vmatprep.subr.mxu0 0.0
        %4592 = vmatpush1.msra.mxu0 0.0
        %4593 = vmatprep.subr.mxu0 0.0
        %4594 = vmatpush1.msra.mxu0 0.0
        %4595 = vmatprep.subr.mxu0 0.0
        %4596 = vmatpush1.msra.mxu0 0.0
        %4597 = vmatprep.subr.mxu0 0.0
        %4598 = vmatpush1.msra.mxu0 0.0
        %4599 = vmatprep.subr.mxu0 0.0
        %4600 = vmatpush1.msra.mxu0 0.0
        %4601 = vmatprep.subr.mxu0 0.0
        %4602 = vmatpush1.msra.mxu0 0.0
        %4603 = vmatprep.subr.mxu0 0.0
        %4604 = vmatpush1.msra.mxu0 0.0
        %4605 = vmatprep.subr.mxu0 0.0
        %4606 = vmatpush1.msra.mxu0 0.0
        %4607 = vmatprep.mubr.f32.mxu0 0.0
        %4608 = vmatmul.mubr.f32.gmra.mrb[0].mxu0 %v4541
        %v4609 = vpop.f32.mrb[0].mxu0
        %v4610 = vadd.f32 0.0, %v4609
        %v4611 = vpop.f32.mrb[0].mxu0
        %4612 = vdwg.mxu0
        %v4613 = vadd.f32 %v4523, %v4610
        %s4614 = scalar_lea.vmem [#allocation7], 1664
        %v4615 = vld [vmem:[%s4614] sm:$0xff]
        %v4616 = vld [vmem:[%s4614 + $0x8] sm:$0xff]
        %v4617 = vld [vmem:[%s4614 + $0x10] sm:$0xff]
        %v4618 = vld [vmem:[%s4614 + $0x18] sm:$0xff]
        %v4619 = vld [vmem:[%s4614 + $0x20] sm:$0xff]
        %v4620 = vld [vmem:[%s4614 + $0x28] sm:$0xff]
        %v4621 = vld [vmem:[%s4614 + $0x30] sm:$0xff]
        %v4622 = vld [vmem:[%s4614 + $0x38] sm:$0xff]
        %v4623 = vld [vmem:[%s4614 + $0x40] sm:$0xff]
        %v4624 = vld [vmem:[%s4614 + $0x48] sm:$0xff]
        %v4625 = vld [vmem:[%s4614 + $0x50] sm:$0xff]
        %v4626 = vld [vmem:[%s4614 + $0x58] sm:$0xff]
        %v4627 = vld [vmem:[%s4614 + $0x60] sm:$0xff]
        %v4628 = vld [vmem:[%s4614 + $0x68] sm:$0xff]
        %v4629 = vld [vmem:[%s4614 + $0x70] sm:$0xff]
        %v4630 = vld [vmem:[%s4614 + $0x78] sm:$0xff]
        %v4631 = vrot.slane %v3448, 5
        %4633 = vmatprep.subr.mxu0 0.0
        %4634 = vmatpush1.msra.mxu0 %v4615
        %4635 = vmatprep.subr.mxu0 0.0
        %4636 = vmatpush1.msra.mxu0 %v4616
        %4637 = vmatprep.subr.mxu0 0.0
        %4638 = vmatpush1.msra.mxu0 %v4617
        %4639 = vmatprep.subr.mxu0 0.0
        %4640 = vmatpush1.msra.mxu0 %v4618
        %4641 = vmatprep.subr.mxu0 0.0
        %4642 = vmatpush1.msra.mxu0 %v4619
        %4643 = vmatprep.subr.mxu0 0.0
        %4644 = vmatpush1.msra.mxu0 %v4620
        %4645 = vmatprep.subr.mxu0 0.0
        %4646 = vmatpush1.msra.mxu0 %v4621
        %4647 = vmatprep.subr.mxu0 0.0
        %4648 = vmatpush1.msra.mxu0 %v4622
        %4649 = vmatprep.subr.mxu0 0.0
        %4650 = vmatpush1.msra.mxu0 %v4623
        %4651 = vmatprep.subr.mxu0 0.0
        %4652 = vmatpush1.msra.mxu0 %v4624
        %4653 = vmatprep.subr.mxu0 0.0
        %4654 = vmatpush1.msra.mxu0 %v4625
        %4655 = vmatprep.subr.mxu0 0.0
        %4656 = vmatpush1.msra.mxu0 %v4626
        %4657 = vmatprep.subr.mxu0 0.0
        %4658 = vmatpush1.msra.mxu0 %v4627
        %4659 = vmatprep.subr.mxu0 0.0
        %4660 = vmatpush1.msra.mxu0 %v4628
        %4661 = vmatprep.subr.mxu0 0.0
        %4662 = vmatpush1.msra.mxu0 %v4629
        %4663 = vmatprep.subr.mxu0 0.0
        %4664 = vmatpush1.msra.mxu0 %v4630
        %4665 = vmatprep.subr.mxu0 0.0
        %4666 = vmatpush1.msra.mxu0 0.0
        %4667 = vmatprep.subr.mxu0 0.0
        %4668 = vmatpush1.msra.mxu0 0.0
        %4669 = vmatprep.subr.mxu0 0.0
        %4670 = vmatpush1.msra.mxu0 0.0
        %4671 = vmatprep.subr.mxu0 0.0
        %4672 = vmatpush1.msra.mxu0 0.0
        %4673 = vmatprep.subr.mxu0 0.0
        %4674 = vmatpush1.msra.mxu0 0.0
        %4675 = vmatprep.subr.mxu0 0.0
        %4676 = vmatpush1.msra.mxu0 0.0
        %4677 = vmatprep.subr.mxu0 0.0
        %4678 = vmatpush1.msra.mxu0 0.0
        %4679 = vmatprep.subr.mxu0 0.0
        %4680 = vmatpush1.msra.mxu0 0.0
        %4681 = vmatprep.subr.mxu0 0.0
        %4682 = vmatpush1.msra.mxu0 0.0
        %4683 = vmatprep.subr.mxu0 0.0
        %4684 = vmatpush1.msra.mxu0 0.0
        %4685 = vmatprep.subr.mxu0 0.0
        %4686 = vmatpush1.msra.mxu0 0.0
        %4687 = vmatprep.subr.mxu0 0.0
        %4688 = vmatpush1.msra.mxu0 0.0
        %4689 = vmatprep.subr.mxu0 0.0
        %4690 = vmatpush1.msra.mxu0 0.0
        %4691 = vmatprep.subr.mxu0 0.0
        %4692 = vmatpush1.msra.mxu0 0.0
        %4693 = vmatprep.subr.mxu0 0.0
        %4694 = vmatpush1.msra.mxu0 0.0
        %4695 = vmatprep.subr.mxu0 0.0
        %4696 = vmatpush1.msra.mxu0 0.0
        %4697 = vmatprep.mubr.f32.mxu0 0.0
        %4698 = vmatmul.mubr.f32.gmra.mrb[0].mxu0 %v4631
        %v4699 = vpop.f32.mrb[0].mxu0
        %v4700 = vadd.f32 0.0, %v4699
        %v4701 = vpop.f32.mrb[0].mxu0
        %4702 = vdwg.mxu0
        %v4703 = vadd.f32 %v4613, %v4700
        %s4704 = scalar_lea.vmem [#allocation7], 1792
        %v4705 = vld [vmem:[%s4704] sm:$0xff]
        %v4706 = vld [vmem:[%s4704 + $0x8] sm:$0xff]
        %v4707 = vld [vmem:[%s4704 + $0x10] sm:$0xff]
        %v4708 = vld [vmem:[%s4704 + $0x18] sm:$0xff]
        %v4709 = vld [vmem:[%s4704 + $0x20] sm:$0xff]
        %v4710 = vld [vmem:[%s4704 + $0x28] sm:$0xff]
        %v4711 = vld [vmem:[%s4704 + $0x30] sm:$0xff]
        %v4712 = vld [vmem:[%s4704 + $0x38] sm:$0xff]
        %v4713 = vld [vmem:[%s4704 + $0x40] sm:$0xff]
        %v4714 = vld [vmem:[%s4704 + $0x48] sm:$0xff]
        %v4715 = vld [vmem:[%s4704 + $0x50] sm:$0xff]
        %v4716 = vld [vmem:[%s4704 + $0x58] sm:$0xff]
        %v4717 = vld [vmem:[%s4704 + $0x60] sm:$0xff]
        %v4718 = vld [vmem:[%s4704 + $0x68] sm:$0xff]
        %v4719 = vld [vmem:[%s4704 + $0x70] sm:$0xff]
        %v4720 = vld [vmem:[%s4704 + $0x78] sm:$0xff]
        %v4721 = vrot.slane %v3448, 6
        %4723 = vmatprep.subr.mxu0 0.0
        %4724 = vmatpush1.msra.mxu0 %v4705
        %4725 = vmatprep.subr.mxu0 0.0
        %4726 = vmatpush1.msra.mxu0 %v4706
        %4727 = vmatprep.subr.mxu0 0.0
        %4728 = vmatpush1.msra.mxu0 %v4707
        %4729 = vmatprep.subr.mxu0 0.0
        %4730 = vmatpush1.msra.mxu0 %v4708
        %4731 = vmatprep.subr.mxu0 0.0
        %4732 = vmatpush1.msra.mxu0 %v4709
        %4733 = vmatprep.subr.mxu0 0.0
        %4734 = vmatpush1.msra.mxu0 %v4710
        %4735 = vmatprep.subr.mxu0 0.0
        %4736 = vmatpush1.msra.mxu0 %v4711
        %4737 = vmatprep.subr.mxu0 0.0
        %4738 = vmatpush1.msra.mxu0 %v4712
        %4739 = vmatprep.subr.mxu0 0.0
        %4740 = vmatpush1.msra.mxu0 %v4713
        %4741 = vmatprep.subr.mxu0 0.0
        %4742 = vmatpush1.msra.mxu0 %v4714
        %4743 = vmatprep.subr.mxu0 0.0
        %4744 = vmatpush1.msra.mxu0 %v4715
        %4745 = vmatprep.subr.mxu0 0.0
        %4746 = vmatpush1.msra.mxu0 %v4716
        %4747 = vmatprep.subr.mxu0 0.0
        %4748 = vmatpush1.msra.mxu0 %v4717
        %4749 = vmatprep.subr.mxu0 0.0
        %4750 = vmatpush1.msra.mxu0 %v4718
        %4751 = vmatprep.subr.mxu0 0.0
        %4752 = vmatpush1.msra.mxu0 %v4719
        %4753 = vmatprep.subr.mxu0 0.0
        %4754 = vmatpush1.msra.mxu0 %v4720
        %4755 = vmatprep.subr.mxu0 0.0
        %4756 = vmatpush1.msra.mxu0 0.0
        %4757 = vmatprep.subr.mxu0 0.0
        %4758 = vmatpush1.msra.mxu0 0.0
        %4759 = vmatprep.subr.mxu0 0.0
        %4760 = vmatpush1.msra.mxu0 0.0
        %4761 = vmatprep.subr.mxu0 0.0
        %4762 = vmatpush1.msra.mxu0 0.0
        %4763 = vmatprep.subr.mxu0 0.0
        %4764 = vmatpush1.msra.mxu0 0.0
        %4765 = vmatprep.subr.mxu0 0.0
        %4766 = vmatpush1.msra.mxu0 0.0
        %4767 = vmatprep.subr.mxu0 0.0
        %4768 = vmatpush1.msra.mxu0 0.0
        %4769 = vmatprep.subr.mxu0 0.0
        %4770 = vmatpush1.msra.mxu0 0.0
        %4771 = vmatprep.subr.mxu0 0.0
        %4772 = vmatpush1.msra.mxu0 0.0
        %4773 = vmatprep.subr.mxu0 0.0
        %4774 = vmatpush1.msra.mxu0 0.0
        %4775 = vmatprep.subr.mxu0 0.0
        %4776 = vmatpush1.msra.mxu0 0.0
        %4777 = vmatprep.subr.mxu0 0.0
        %4778 = vmatpush1.msra.mxu0 0.0
        %4779 = vmatprep.subr.mxu0 0.0
        %4780 = vmatpush1.msra.mxu0 0.0
        %4781 = vmatprep.subr.mxu0 0.0
        %4782 = vmatpush1.msra.mxu0 0.0
        %4783 = vmatprep.subr.mxu0 0.0
        %4784 = vmatpush1.msra.mxu0 0.0
        %4785 = vmatprep.subr.mxu0 0.0
        %4786 = vmatpush1.msra.mxu0 0.0
        %4787 = vmatprep.mubr.f32.mxu0 0.0
        %4788 = vmatmul.mubr.f32.gmra.mrb[0].mxu0 %v4721
        %v4789 = vpop.f32.mrb[0].mxu0
        %v4790 = vadd.f32 0.0, %v4789
        %v4791 = vpop.f32.mrb[0].mxu0
        %4792 = vdwg.mxu0
        %v4793 = vadd.f32 %v4703, %v4790
        %s4794 = scalar_lea.vmem [#allocation7], 1920
        %v4795 = vld [vmem:[%s4794] sm:$0xff]
        %v4796 = vld [vmem:[%s4794 + $0x8] sm:$0xff]
        %v4797 = vld [vmem:[%s4794 + $0x10] sm:$0xff]
        %v4798 = vld [vmem:[%s4794 + $0x18] sm:$0xff]
        %v4799 = vld [vmem:[%s4794 + $0x20] sm:$0xff]
        %v4800 = vld [vmem:[%s4794 + $0x28] sm:$0xff]
        %v4801 = vld [vmem:[%s4794 + $0x30] sm:$0xff]
        %v4802 = vld [vmem:[%s4794 + $0x38] sm:$0xff]
        %v4803 = vld [vmem:[%s4794 + $0x40] sm:$0xff]
        %v4804 = vld [vmem:[%s4794 + $0x48] sm:$0xff]
        %v4805 = vld [vmem:[%s4794 + $0x50] sm:$0xff]
        %v4806 = vld [vmem:[%s4794 + $0x58] sm:$0xff]
        %v4807 = vld [vmem:[%s4794 + $0x60] sm:$0xff]
        %v4808 = vld [vmem:[%s4794 + $0x68] sm:$0xff]
        %v4809 = vld [vmem:[%s4794 + $0x70] sm:$0xff]
        %v4810 = vld [vmem:[%s4794 + $0x78] sm:$0xff]
        %v4811 = vrot.slane %v3448, 7
        %4813 = vmatprep.subr.mxu0 0.0
        %4814 = vmatpush1.msra.mxu0 %v4795
        %4815 = vmatprep.subr.mxu0 0.0
        %4816 = vmatpush1.msra.mxu0 %v4796
        %4817 = vmatprep.subr.mxu0 0.0
        %4818 = vmatpush1.msra.mxu0 %v4797
        %4819 = vmatprep.subr.mxu0 0.0
        %4820 = vmatpush1.msra.mxu0 %v4798
        %4821 = vmatprep.subr.mxu0 0.0
        %4822 = vmatpush1.msra.mxu0 %v4799
        %4823 = vmatprep.subr.mxu0 0.0
        %4824 = vmatpush1.msra.mxu0 %v4800
        %4825 = vmatprep.subr.mxu0 0.0
        %4826 = vmatpush1.msra.mxu0 %v4801
        %4827 = vmatprep.subr.mxu0 0.0
        %4828 = vmatpush1.msra.mxu0 %v4802
        %4829 = vmatprep.subr.mxu0 0.0
        %4830 = vmatpush1.msra.mxu0 %v4803
        %4831 = vmatprep.subr.mxu0 0.0
        %4832 = vmatpush1.msra.mxu0 %v4804
        %4833 = vmatprep.subr.mxu0 0.0
        %4834 = vmatpush1.msra.mxu0 %v4805
        %4835 = vmatprep.subr.mxu0 0.0
        %4836 = vmatpush1.msra.mxu0 %v4806
        %4837 = vmatprep.subr.mxu0 0.0
        %4838 = vmatpush1.msra.mxu0 %v4807
        %4839 = vmatprep.subr.mxu0 0.0
        %4840 = vmatpush1.msra.mxu0 %v4808
        %4841 = vmatprep.subr.mxu0 0.0
        %4842 = vmatpush1.msra.mxu0 %v4809
        %4843 = vmatprep.subr.mxu0 0.0
        %4844 = vmatpush1.msra.mxu0 %v4810
        %4845 = vmatprep.subr.mxu0 0.0
        %4846 = vmatpush1.msra.mxu0 0.0
        %4847 = vmatprep.subr.mxu0 0.0
        %4848 = vmatpush1.msra.mxu0 0.0
        %4849 = vmatprep.subr.mxu0 0.0
        %4850 = vmatpush1.msra.mxu0 0.0
        %4851 = vmatprep.subr.mxu0 0.0
        %4852 = vmatpush1.msra.mxu0 0.0
        %4853 = vmatprep.subr.mxu0 0.0
        %4854 = vmatpush1.msra.mxu0 0.0
        %4855 = vmatprep.subr.mxu0 0.0
        %4856 = vmatpush1.msra.mxu0 0.0
        %4857 = vmatprep.subr.mxu0 0.0
        %4858 = vmatpush1.msra.mxu0 0.0
        %4859 = vmatprep.subr.mxu0 0.0
        %4860 = vmatpush1.msra.mxu0 0.0
        %4861 = vmatprep.subr.mxu0 0.0
        %4862 = vmatpush1.msra.mxu0 0.0
        %4863 = vmatprep.subr.mxu0 0.0
        %4864 = vmatpush1.msra.mxu0 0.0
        %4865 = vmatprep.subr.mxu0 0.0
        %4866 = vmatpush1.msra.mxu0 0.0
        %4867 = vmatprep.subr.mxu0 0.0
        %4868 = vmatpush1.msra.mxu0 0.0
        %4869 = vmatprep.subr.mxu0 0.0
        %4870 = vmatpush1.msra.mxu0 0.0
        %4871 = vmatprep.subr.mxu0 0.0
        %4872 = vmatpush1.msra.mxu0 0.0
        %4873 = vmatprep.subr.mxu0 0.0
        %4874 = vmatpush1.msra.mxu0 0.0
        %4875 = vmatprep.subr.mxu0 0.0
        %4876 = vmatpush1.msra.mxu0 0.0
        %4877 = vmatprep.mubr.f32.mxu0 0.0
        %4878 = vmatmul.mubr.f32.gmra.mrb[0].mxu0 %v4811
        %v4879 = vpop.f32.mrb[0].mxu0
        %v4880 = vadd.f32 0.0, %v4879
        %v4881 = vpop.f32.mrb[0].mxu0
        %4882 = vdwg.mxu0
        %v4883 = vadd.f32 %v4793, %v4880
        %v4884 = vld [vmem:[%s8] sm:$0x1]
        %v4885 = vadd.f32 %v4883, %v4884
        %v4886 = vmax.f32 %v4885, 0.0
        %v4887 = vld [vmem:[%s9] sm:$0xff]
        %v4888 = vld [vmem:[%s9 + $0x8] sm:$0xff]
        %v4889 = vld [vmem:[%s9 + $0x10] sm:$0xff]
        %v4890 = vld [vmem:[%s9 + $0x18] sm:$0xff]
        %v4891 = vld [vmem:[%s9 + $0x20] sm:$0xff]
        %v4892 = vld [vmem:[%s9 + $0x28] sm:$0xff]
        %v4893 = vld [vmem:[%s9 + $0x30] sm:$0xff]
        %v4894 = vld [vmem:[%s9 + $0x38] sm:$0xff]
        %v4895 = vld [vmem:[%s9 + $0x40] sm:$0xff]
        %v4896 = vld [vmem:[%s9 + $0x48] sm:$0xff]
        %v4897 = vld [vmem:[%s9 + $0x50] sm:$0xff]
        %v4898 = vld [vmem:[%s9 + $0x58] sm:$0xff]
        %v4899 = vld [vmem:[%s9 + $0x60] sm:$0xff]
        %v4900 = vld [vmem:[%s9 + $0x68] sm:$0xff]
        %v4901 = vld [vmem:[%s9 + $0x70] sm:$0xff]
        %v4902 = vld [vmem:[%s9 + $0x78] sm:$0xff]
        %v4903 = vld [vmem:[%s10] sm:$0x1]
        %4904 = vmatprep.subr.mxu0 0.0
        %4905 = vmatpush1.msra.mxu0 %v4887
        %4906 = vmatprep.subr.mxu0 0.0
        %4907 = vmatpush1.msra.mxu0 %v4888
        %4908 = vmatprep.subr.mxu0 0.0
        %4909 = vmatpush1.msra.mxu0 %v4889
        %4910 = vmatprep.subr.mxu0 0.0
        %4911 = vmatpush1.msra.mxu0 %v4890
        %4912 = vmatprep.subr.mxu0 0.0
        %4913 = vmatpush1.msra.mxu0 %v4891
        %4914 = vmatprep.subr.mxu0 0.0
        %4915 = vmatpush1.msra.mxu0 %v4892
        %4916 = vmatprep.subr.mxu0 0.0
        %4917 = vmatpush1.msra.mxu0 %v4893
        %4918 = vmatprep.subr.mxu0 0.0
        %4919 = vmatpush1.msra.mxu0 %v4894
        %4920 = vmatprep.subr.mxu0 0.0
        %4921 = vmatpush1.msra.mxu0 %v4895
        %4922 = vmatprep.subr.mxu0 0.0
        %4923 = vmatpush1.msra.mxu0 %v4896
        %4924 = vmatprep.subr.mxu0 0.0
        %4925 = vmatpush1.msra.mxu0 %v4897
        %4926 = vmatprep.subr.mxu0 0.0
        %4927 = vmatpush1.msra.mxu0 %v4898
        %4928 = vmatprep.subr.mxu0 0.0
        %4929 = vmatpush1.msra.mxu0 %v4899
        %4930 = vmatprep.subr.mxu0 0.0
        %4931 = vmatpush1.msra.mxu0 %v4900
        %4932 = vmatprep.subr.mxu0 0.0
        %4933 = vmatpush1.msra.mxu0 %v4901
        %4934 = vmatprep.subr.mxu0 0.0
        %4935 = vmatpush1.msra.mxu0 %v4902
        %4936 = vmatprep.subr.mxu0 0.0
        %4937 = vmatpush1.msra.mxu0 0.0
        %4938 = vmatprep.subr.mxu0 0.0
        %4939 = vmatpush1.msra.mxu0 0.0
        %4940 = vmatprep.subr.mxu0 0.0
        %4941 = vmatpush1.msra.mxu0 0.0
        %4942 = vmatprep.subr.mxu0 0.0
        %4943 = vmatpush1.msra.mxu0 0.0
        %4944 = vmatprep.subr.mxu0 0.0
        %4945 = vmatpush1.msra.mxu0 0.0
        %4946 = vmatprep.subr.mxu0 0.0
        %4947 = vmatpush1.msra.mxu0 0.0
        %4948 = vmatprep.subr.mxu0 0.0
        %4949 = vmatpush1.msra.mxu0 0.0
        %4950 = vmatprep.subr.mxu0 0.0
        %4951 = vmatpush1.msra.mxu0 0.0
        %4952 = vmatprep.subr.mxu0 0.0
        %4953 = vmatpush1.msra.mxu0 0.0
        %4954 = vmatprep.subr.mxu0 0.0
        %4955 = vmatpush1.msra.mxu0 0.0
        %4956 = vmatprep.subr.mxu0 0.0
        %4957 = vmatpush1.msra.mxu0 0.0
        %4958 = vmatprep.subr.mxu0 0.0
        %4959 = vmatpush1.msra.mxu0 0.0
        %4960 = vmatprep.subr.mxu0 0.0
        %4961 = vmatpush1.msra.mxu0 0.0
        %4962 = vmatprep.subr.mxu0 0.0
        %4963 = vmatpush1.msra.mxu0 0.0
        %4964 = vmatprep.subr.mxu0 0.0
        %4965 = vmatpush1.msra.mxu0 0.0
        %4966 = vmatprep.subr.mxu0 0.0
        %4967 = vmatpush1.msra.mxu0 0.0
        %4968 = vmatprep.mubr.f32.mxu0 0.0
        %4969 = vmatmul.mubr.f32.gmra.mrb[0].mxu0 %v4886
        %v4970 = vpop.f32.mrb[0].mxu0
        %v4971 = vadd.f32 %v4903, %v4970
        %v4972 = vpop.f32.mrb[0].mxu0
        %4973 = vdwg.mxu0
        %v4974 = vmax.f32 %v4971, 0.0
        %v4975 = vld [vmem:[%s11] sm:$0xff]
        %v4976 = vld [vmem:[%s11 + $0x8] sm:$0xff]
        %v4977 = vld [vmem:[%s11 + $0x10] sm:$0xff]
        %v4978 = vld [vmem:[%s11 + $0x18] sm:$0xff]
        %v4979 = vld [vmem:[%s11 + $0x20] sm:$0xff]
        %v4980 = vld [vmem:[%s11 + $0x28] sm:$0xff]
        %v4981 = vld [vmem:[%s11 + $0x30] sm:$0xff]
        %v4982 = vld [vmem:[%s11 + $0x38] sm:$0xff]
        %v4983 = vld [vmem:[%s11 + $0x40] sm:$0xff]
        %v4984 = vld [vmem:[%s11 + $0x48] sm:$0xff]
        %v4985 = vld [vmem:[%s11 + $0x50] sm:$0xff]
        %v4986 = vld [vmem:[%s11 + $0x58] sm:$0xff]
        %v4987 = vld [vmem:[%s11 + $0x60] sm:$0xff]
        %v4988 = vld [vmem:[%s11 + $0x68] sm:$0xff]
        %v4989 = vld [vmem:[%s11 + $0x70] sm:$0xff]
        %v4990 = vld [vmem:[%s11 + $0x78] sm:$0xff]
        %v4991 = vld [vmem:[%s12] sm:$0x1]
        %4992 = vmatprep.subr.mxu0 0.0
        %4993 = vmatpush1.msra.mxu0 %v4975
        %4994 = vmatprep.subr.mxu0 0.0
        %4995 = vmatpush1.msra.mxu0 %v4976
        %4996 = vmatprep.subr.mxu0 0.0
        %4997 = vmatpush1.msra.mxu0 %v4977
        %4998 = vmatprep.subr.mxu0 0.0
        %4999 = vmatpush1.msra.mxu0 %v4978
        %5000 = vmatprep.subr.mxu0 0.0
        %5001 = vmatpush1.msra.mxu0 %v4979
        %5002 = vmatprep.subr.mxu0 0.0
        %5003 = vmatpush1.msra.mxu0 %v4980
        %5004 = vmatprep.subr.mxu0 0.0
        %5005 = vmatpush1.msra.mxu0 %v4981
        %5006 = vmatprep.subr.mxu0 0.0
        %5007 = vmatpush1.msra.mxu0 %v4982
        %5008 = vmatprep.subr.mxu0 0.0
        %5009 = vmatpush1.msra.mxu0 %v4983
        %5010 = vmatprep.subr.mxu0 0.0
        %5011 = vmatpush1.msra.mxu0 %v4984
        %5012 = vmatprep.subr.mxu0 0.0
        %5013 = vmatpush1.msra.mxu0 %v4985
        %5014 = vmatprep.subr.mxu0 0.0
        %5015 = vmatpush1.msra.mxu0 %v4986
        %5016 = vmatprep.subr.mxu0 0.0
        %5017 = vmatpush1.msra.mxu0 %v4987
        %5018 = vmatprep.subr.mxu0 0.0
        %5019 = vmatpush1.msra.mxu0 %v4988
        %5020 = vmatprep.subr.mxu0 0.0
        %5021 = vmatpush1.msra.mxu0 %v4989
        %5022 = vmatprep.subr.mxu0 0.0
        %5023 = vmatpush1.msra.mxu0 %v4990
        %5024 = vmatprep.subr.mxu0 0.0
        %5025 = vmatpush1.msra.mxu0 0.0
        %5026 = vmatprep.subr.mxu0 0.0
        %5027 = vmatpush1.msra.mxu0 0.0
        %5028 = vmatprep.subr.mxu0 0.0
        %5029 = vmatpush1.msra.mxu0 0.0
        %5030 = vmatprep.subr.mxu0 0.0
        %5031 = vmatpush1.msra.mxu0 0.0
        %5032 = vmatprep.subr.mxu0 0.0
        %5033 = vmatpush1.msra.mxu0 0.0
        %5034 = vmatprep.subr.mxu0 0.0
        %5035 = vmatpush1.msra.mxu0 0.0
        %5036 = vmatprep.subr.mxu0 0.0
        %5037 = vmatpush1.msra.mxu0 0.0
        %5038 = vmatprep.subr.mxu0 0.0
        %5039 = vmatpush1.msra.mxu0 0.0
        %5040 = vmatprep.subr.mxu0 0.0
        %5041 = vmatpush1.msra.mxu0 0.0
        %5042 = vmatprep.subr.mxu0 0.0
        %5043 = vmatpush1.msra.mxu0 0.0
        %5044 = vmatprep.subr.mxu0 0.0
        %5045 = vmatpush1.msra.mxu0 0.0
        %5046 = vmatprep.subr.mxu0 0.0
        %5047 = vmatpush1.msra.mxu0 0.0
        %5048 = vmatprep.subr.mxu0 0.0
        %5049 = vmatpush1.msra.mxu0 0.0
        %5050 = vmatprep.subr.mxu0 0.0
        %5051 = vmatpush1.msra.mxu0 0.0
        %5052 = vmatprep.subr.mxu0 0.0
        %5053 = vmatpush1.msra.mxu0 0.0
        %5054 = vmatprep.subr.mxu0 0.0
        %5055 = vmatpush1.msra.mxu0 0.0
        %5056 = vmatprep.mubr.f32.mxu0 0.0
        %5057 = vmatmul.mubr.f32.gmra.mrb[0].mxu0 %v4974
        %v5058 = vpop.f32.mrb[0].mxu0
        %v5059 = vadd.f32 %v4991, %v5058
        %v5060 = vpop.f32.mrb[0].mxu0
        %5061 = vdwg.mxu0
        %v5062 = vtanh.pop %v5059
        %5063 = vst [vmem:[%s476] sm:$0x1] %v5062
        %s5064 = sand.u32 %s315, 1
        %s5065 = scalar_lea.sflag [#allocation4], %s5064
        %s5066 = sand.u32 %s315, 1
        %s5067 = scalar_lea.vmem [#allocation8], %s5066
        // Predicated region
        $region85: #{tpu_custom_call.1} parent=71 // pred_check
          %p5068 = pneg %p325
        $region86: #{tpu_custom_call.1} parent=71 // pred_check_branch
          %5070 = sbr.rel (%p5068) target = $region88
        $region87: #{tpu_custom_call.1} parent=71 // pred_region
          %s5072 = ssub.s32 16, 16
          %5073 = vsyncadd %s5065, %s5072
          %s5074 = smul.addr %s29, 16
          %s5075 = scalar_lea.hbm %s13, %s5074
          %s5077 = sshll.u32 %s5067, 4
          %s5078 = int_to_ptr.vmem [resolvable:$true] %s5077
          %5080 = dma.vmem_to_hbm [thread:$0]  %s5078, 16, %s5075, %s5065
        $region88: #{tpu_custom_call.1} parent=71 // pred_fallthru
          _
      $region72: #{tpu_custom_call.1} parent=5 // pred_fallthru
        _
      %p5081 = scmp.le.s32.totalorder 2, %s24
      // Predicated region
      $region89: #{tpu_custom_call.1} parent=5 // pred_check
        %p5082 = pneg %p5081
      $region90: #{tpu_custom_call.1} parent=5 // pred_check_branch
        %5084 = sbr.rel (%p5082) target = $region92
      $region91: #{tpu_custom_call.1} parent=5 // pred_region
        %s5085 = ssub.s32 %s24, 2
        // Predicated region
        $region93: #{tpu_custom_call.1} parent=91 // pred_check
          %p5086 = pneg %p331
        $region94: #{tpu_custom_call.1} parent=91 // pred_check_branch
          %5088 = sbr.rel (%p5086) target = $region96
        $region95: #{tpu_custom_call.1} parent=91 // pred_region
          %s5089 = sand.u32 %s316, 1
          %s5090 = scalar_lea.sflag [#allocation4], %s5089
          %s5091 = sand.u32 %s316, 1
          %s5092 = scalar_lea.vmem [#allocation8], %s5091
          %5093 = dma.done %s5090, 16
        $region96: #{tpu_custom_call.1} parent=91 // pred_fallthru
          _
      $region92: #{tpu_custom_call.1} parent=5 // pred_fallthru
        _
    $region6: #{tpu_custom_call.1} parent=1 // loop_footer
      %s28 = sadd.s32 1, %s24
    $region7: #{tpu_custom_call.1} parent=1 // loop_footer_branch
      %23 = sbr.rel target = $region3
    $region8: #{tpu_custom_call.1} parent=1 // loop_exit
      _
    %5094 = vsyncpa [#allocation3], 1
    %s5095 = scalar_lea.sflag [#allocation3], 1
    %5096 = vsyncpa %s5095, 1
    %5097 = vsyncpa [#allocation6], 1
    %5098 = vsyncpa [#allocation4], 1
    %s5099 = scalar_lea.sflag [#allocation4], 1
    %5100 = vsyncpa %s5099, 1

</llo_original>
